<compile_context>
chip_gen: v5e
topology: v5e:2x2
jax: 0.10.0
libtpu: 0.0.40
codegen_flags: <defaults>
</compile_context>

<pallas_src>
import functools

import jax
import jax.numpy as jnp
from jax.experimental import pallas as pl
from jax.experimental.pallas import tpu as pltpu


# -----------------------------------------------------------------------------
# Model dimensions (small shapes consistent with the module)
# -----------------------------------------------------------------------------
INPUT_DIM = 16
D_MODEL = 32          # the module's `dim_feedforward` arg == encoder d_model
NHEAD = 4
HEAD_DIM = D_MODEL // NHEAD
NUM_LAYERS = 2
FF_HIDDEN = 2048      # nn.TransformerEncoderLayer's internal dim_feedforward default
SEQ = 8
BATCH = 2
LN_EPS = 1e-5


def _layernorm(y, g, b):
    """LayerNorm over the last dim (biased variance, eps matches torch)."""
    mu = jnp.mean(y, axis=-1, keepdims=True)
    var = jnp.mean((y - mu) * (y - mu), axis=-1, keepdims=True)
    return (y - mu) * jax.lax.rsqrt(var + LN_EPS) * g + b


# -----------------------------------------------------------------------------
# Fused forward kernel (grid = (NUM_LAYERS,), one encoder layer per step)
# -----------------------------------------------------------------------------
def _fused_forward_kernel(src_ref, emb_w_ref, emb_b_ref,
                          inw_ref, inb_ref, outw_ref, outb_ref,
                          ln1g_ref, ln1b_ref, ln2g_ref, ln2b_ref,
                          w1_ref, b1_ref, w2_ref, b2_ref,
                          fcw_ref, fcb_ref,
                          o_ref, x_ref,
                          *, num_heads, batch, seq):
    """One grid step == one encoder layer.  x_ref (VMEM scratch) carries the
    (B*S, D) activation (b-major rows: row = b*seq + s) across layers."""
    D = emb_w_ref.shape[1]
    dh = D // num_heads
    scale = 1.0 / float(dh) ** 0.5
    layer = pl.program_id(0)

    # ---- step 0: build b-major rows from (S, B*I) input and embed ----------
    @pl.when(layer == 0)
    def _():
        s_all = src_ref[...]                      # (S, B*I), lane block b = batch b
        input_dim = s_all.shape[1] // batch
        x_in = jnp.concatenate(
            [s_all[:, b * input_dim:(b + 1) * input_dim] for b in range(batch)],
            axis=0)                               # (B*S, I), row = b*seq + s
        x_ref[...] = (jnp.dot(x_in, emb_w_ref[...],
                              preferred_element_type=jnp.float32)
                      + emb_b_ref[...])

    x = x_ref[...]                                # (B*S, D) float32

    # ---------------- self-attention (per-head weights, no lane slicing) ----
    attn = None
    for h in range(num_heads):                    # static unroll, H = 4
        qh = (jnp.dot(x, inw_ref[0, h], preferred_element_type=jnp.float32)
              + inb_ref[0, h])                                    # (B*S, dh)
        kh = (jnp.dot(x, inw_ref[0, num_heads + h],
                      preferred_element_type=jnp.float32)
              + inb_ref[0, num_heads + h])
        vh = (jnp.dot(x, inw_ref[0, 2 * num_heads + h],
                      preferred_element_type=jnp.float32)
              + inb_ref[0, 2 * num_heads + h])
        qh = qh.reshape(batch, seq, dh)           # 8-sublane aligned -> free
        kh = kh.reshape(batch, seq, dh)
        vh = vh.reshape(batch, seq, dh)
        s = jnp.einsum('bqd,bkd->bqk', qh, kh,
                       preferred_element_type=jnp.float32) * scale
        s = s - jnp.max(s, axis=-1, keepdims=True)
        p = jnp.exp(s)
        p = p * pl.reciprocal(jnp.sum(p, axis=-1, keepdims=True), approx=True)
        oh = jnp.einsum('bqk,bkd->bqd', p, vh,
                        preferred_element_type=jnp.float32)
        contrib = jnp.dot(oh.reshape(batch * seq, dh), outw_ref[0, h],
                          preferred_element_type=jnp.float32)     # (B*S, D)
        attn = contrib if attn is None else attn + contrib
    attn = attn + outb_ref[0]
    x = _layernorm(x + attn, ln1g_ref[0], ln1b_ref[0])            # norm1(x + sa(x))

    # ---------------- feed-forward (bf16 weights, f32 accumulate) -----------
    ff = (jnp.dot(x.astype(jnp.bfloat16), w1_ref[0],
                  preferred_element_type=jnp.float32) + b1_ref[0])  # (B*S, FF)
    ff = jnp.maximum(ff, 0.0)
    ff = (jnp.dot(ff.astype(jnp.bfloat16), w2_ref[0],
                  preferred_element_type=jnp.float32) + b2_ref[0])  # (B*S, D)
    x = _layernorm(x + ff, ln2g_ref[0], ln2b_ref[0])              # norm2(x + ff(x))

    x_ref[...] = x

    # ---- last step: value head on the last-timestep rows only -> (B, 1) ----
    @pl.when(layer == pl.num_programs(0) - 1)
    def _():
        last = jnp.concatenate(
            [x[b * seq + seq - 1: b * seq + seq, :] for b in range(batch)],
            axis=0)                                               # (B, D)
        o_ref[...] = (jnp.dot(last, fcw_ref[...],
                              preferred_element_type=jnp.float32)
                      + fcb_ref[...]).astype(o_ref.dtype)


# -----------------------------------------------------------------------------
# Parameters
# -----------------------------------------------------------------------------
def _init_linear(key, fan_in, fan_out):
    k1, k2 = jax.random.split(key)
    bound = 1.0 / float(fan_in) ** 0.5
    w = jax.random.uniform(k1, (fan_in, fan_out), jnp.float32, -bound, bound)
    b = jax.random.uniform(k2, (fan_out,), jnp.float32, -bound, bound)
    return w, b


def init_params(key):
    keys = jax.random.split(key, 2 + NUM_LAYERS)
    emb_w, emb_b = _init_linear(keys[0], INPUT_DIM, D_MODEL)
    fc_w, fc_b = _init_linear(keys[1], D_MODEL, 1)

    inw, inb, outw, outb = [], [], [], []
    w1, b1, w2, b2 = [], [], [], []
    ln1g, ln1b, ln2g, ln2b = [], [], [], []
    for li in range(NUM_LAYERS):
        lk = jax.random.split(keys[2 + li], 4)

        # packed in_proj (D, 3D) -> per-head layout (3*H, D, dh), order [q|k|v]
        w, b = _init_linear(lk[0], D_MODEL, 3 * D_MODEL)
        w = (w.reshape(D_MODEL, 3, NHEAD, HEAD_DIM)
              .transpose(1, 2, 0, 3)
              .reshape(3 * NHEAD, D_MODEL, HEAD_DIM))
        inw.append(w)
        inb.append(b.reshape(3 * NHEAD, 1, HEAD_DIM))

        # out_proj (D, D) -> per-head (H, dh, D)
        w, b = _init_linear(lk[1], D_MODEL, D_MODEL)
        outw.append(w.reshape(NHEAD, HEAD_DIM, D_MODEL))
        outb.append(b.reshape(1, D_MODEL))

        w, b = _init_linear(lk[2], D_MODEL, FF_HIDDEN)
        w1.append(w.astype(jnp.bfloat16)); b1.append(b.reshape(1, FF_HIDDEN))
        w, b = _init_linear(lk[3], FF_HIDDEN, D_MODEL)
        w2.append(w.astype(jnp.bfloat16)); b2.append(b.reshape(1, D_MODEL))

        ln1g.append(jnp.ones((1, D_MODEL), jnp.float32))
        ln1b.append(jnp.zeros((1, D_MODEL), jnp.float32))
        ln2g.append(jnp.ones((1, D_MODEL), jnp.float32))
        ln2b.append(jnp.zeros((1, D_MODEL), jnp.float32))

    return {
        "emb_w": emb_w, "emb_b": emb_b.reshape(1, D_MODEL),
        "fc_w": fc_w, "fc_b": fc_b.reshape(1, 1),
        "in_proj_w": jnp.stack(inw),   "in_proj_b": jnp.stack(inb),
        "out_proj_w": jnp.stack(outw), "out_proj_b": jnp.stack(outb),
        "ln1_g": jnp.stack(ln1g), "ln1_b": jnp.stack(ln1b),
        "ln2_g": jnp.stack(ln2g), "ln2_b": jnp.stack(ln2b),
        "w1": jnp.stack(w1), "b1": jnp.stack(b1),
        "w2": jnp.stack(w2), "b2": jnp.stack(b2),
    }


# -----------------------------------------------------------------------------
# Forward (single pallas_call; grid over layers pipelines the weight DMA)
# -----------------------------------------------------------------------------
def forward(params, src):
    """src: (S, B, INPUT_DIM) -> state value (B, 1)."""
    S, B, I = src.shape
    src2d = src.reshape(S, B * I)   # contiguous merge -> free (no transpose HLO)

    args = (src2d,
            params["emb_w"], params["emb_b"],
            params["in_proj_w"], params["in_proj_b"],
            params["out_proj_w"], params["out_proj_b"],
            params["ln1_g"], params["ln1_b"], params["ln2_g"], params["ln2_b"],
            params["w1"], params["b1"], params["w2"], params["b2"],
            params["fc_w"], params["fc_b"])
    # True -> array has a leading NUM_LAYERS axis and is blocked per grid step.
    per_layer = (False, False, False,
                 True, True, True, True,
                 True, True, True, True,
                 True, True, True, True,
                 False, False)

    def make_spec(a, is_layer):
        nd = a.ndim
        if is_layer:
            return pl.BlockSpec((1,) + a.shape[1:],
                                lambda l, _nd=nd: (l,) + (0,) * (_nd - 1))
        return pl.BlockSpec(a.shape, lambda l, _nd=nd: (0,) * _nd)

    kernel = functools.partial(_fused_forward_kernel,
                               num_heads=NHEAD, batch=B, seq=S)

    return pl.pallas_call(
        kernel,
        out_shape=jax.ShapeDtypeStruct((B, 1), jnp.float32),
        grid=(NUM_LAYERS,),
        in_specs=[make_spec(a, f) for a, f in zip(args, per_layer)],
        out_specs=pl.BlockSpec((B, 1), lambda l: (0, 0)),
        scratch_shapes=[pltpu.VMEM((B * S, D_MODEL), jnp.float32)],
        compiler_params=pltpu.CompilerParams(
            dimension_semantics=("arbitrary",)),
    )(*args)


if __name__ == "__main__":
    key = jax.random.PRNGKey(0)
    kp, kx = jax.random.split(key)
    params = init_params(kp)
    src = jax.random.normal(kx, (SEQ, BATCH, INPUT_DIM), jnp.float32)

    value = jax.jit(forward)(params, src)
    jax.block_until_ready(value)
    assert value.shape == (BATCH, 1), value.shape
    print("KERNEL_OK")
</pallas_src>

<mosaic_0001>
module attributes {stable_mosaic.version = 11 : i64} {
  func.func @_fused_forward_kernel(%arg0: i32, %arg1: memref<8x32xf32, #tpu.memory_space<vmem>>, %arg2: memref<16x32xf32, #tpu.memory_space<vmem>>, %arg3: memref<1x32xf32, #tpu.memory_space<vmem>>, %arg4: memref<1x12x32x8xf32, #tpu.memory_space<vmem>>, %arg5: memref<1x12x1x8xf32, #tpu.memory_space<vmem>>, %arg6: memref<1x4x8x32xf32, #tpu.memory_space<vmem>>, %arg7: memref<1x1x32xf32, #tpu.memory_space<vmem>>, %arg8: memref<1x1x32xf32, #tpu.memory_space<vmem>>, %arg9: memref<1x1x32xf32, #tpu.memory_space<vmem>>, %arg10: memref<1x1x32xf32, #tpu.memory_space<vmem>>, %arg11: memref<1x1x32xf32, #tpu.memory_space<vmem>>, %arg12: memref<1x32x2048xbf16, #tpu.memory_space<vmem>>, %arg13: memref<1x1x2048xf32, #tpu.memory_space<vmem>>, %arg14: memref<1x2048x32xbf16, #tpu.memory_space<vmem>>, %arg15: memref<1x1x32xf32, #tpu.memory_space<vmem>>, %arg16: memref<32x1xf32, #tpu.memory_space<vmem>>, %arg17: memref<1x1xf32, #tpu.memory_space<vmem>>, %arg18: memref<2x1xf32, #tpu.memory_space<vmem>>, %arg19: memref<16x32xf32, #tpu.memory_space<vmem>>) attributes {dimension_semantics = [#tpu.dimension_semantics<arbitrary>], iteration_bounds = array<i64: 2>, scalar_prefetch = 0 : i64, scratch_operands = 1 : i64, tpu.core_type = #tpu.core_type<tc>, window_params = [{pipeline_mode = #tpu.pipeline_mode<synchronous>, transform_indices = @transform_0, window_bounds = array<i64: 8, 32>}, {pipeline_mode = #tpu.pipeline_mode<synchronous>, transform_indices = @transform_1, window_bounds = array<i64: 16, 32>}, {pipeline_mode = #tpu.pipeline_mode<synchronous>, transform_indices = @transform_2, window_bounds = array<i64: 1, 32>}, {transform_indices = @transform_3, window_bounds = array<i64: 1, 12, 32, 8>}, {transform_indices = @transform_4, window_bounds = array<i64: 1, 12, 1, 8>}, {transform_indices = @transform_5, window_bounds = array<i64: 1, 4, 8, 32>}, {transform_indices = @transform_6, window_bounds = array<i64: 1, 1, 32>}, {transform_indices = @transform_7, window_bounds = array<i64: 1, 1, 32>}, {transform_indices = @transform_8, window_bounds = array<i64: 1, 1, 32>}, {transform_indices = @transform_9, window_bounds = array<i64: 1, 1, 32>}, {transform_indices = @transform_10, window_bounds = array<i64: 1, 1, 32>}, {transform_indices = @transform_11, window_bounds = array<i64: 1, 32, 2048>}, {transform_indices = @transform_12, window_bounds = array<i64: 1, 1, 2048>}, {transform_indices = @transform_13, window_bounds = array<i64: 1, 2048, 32>}, {transform_indices = @transform_14, window_bounds = array<i64: 1, 1, 32>}, {pipeline_mode = #tpu.pipeline_mode<synchronous>, transform_indices = @transform_15, window_bounds = array<i64: 32, 1>}, {pipeline_mode = #tpu.pipeline_mode<synchronous>, transform_indices = @transform_16, window_bounds = array<i64: 1, 1>}, {pipeline_mode = #tpu.pipeline_mode<synchronous>, transform_indices = @transform_17, window_bounds = array<i64: 2, 1>}]} {
    %c0_i32 = arith.constant 0 : i32
    %0 = arith.cmpi eq, %arg0, %c0_i32 : i32
    %1 = arith.extui %0 : i1 to i32
    %c0_i32_0 = arith.constant 0 : i32
    %2 = arith.cmpi ne, %1, %c0_i32_0 : i32
    scf.if %2 {
      %c0_181 = arith.constant 0 : index
      %c0_182 = arith.constant 0 : index
      %259 = vector.load %arg1[%c0_181, %c0_182] : memref<8x32xf32, #tpu.memory_space<vmem>>, vector<8x32xf32>
      %260 = vector.extract_strided_slice %259 {offsets = [0, 0], sizes = [8, 16], strides = [1, 1]} : vector<8x32xf32> to vector<8x16xf32>
      %261 = vector.extract_strided_slice %259 {offsets = [0, 16], sizes = [8, 16], strides = [1, 1]} : vector<8x32xf32> to vector<8x16xf32>
      %262 = tpu.concatenate %260, %261 in 0 : vector<8x16xf32>, vector<8x16xf32> -> vector<16x16xf32>
      %c0_183 = arith.constant 0 : index
      %c0_184 = arith.constant 0 : index
      %263 = vector.load %arg2[%c0_183, %c0_184] : memref<16x32xf32, #tpu.memory_space<vmem>>, vector<16x32xf32>
      %cst_185 = arith.constant dense<0.000000e+00> : vector<16x32xf32>
      %264 = tpu.matmul %262, %263, %cst_185 {dimension_numbers = #tpu.dot_dimension_numbers<[1], [0], [0], [1], [0, 0, 1, 1], [], []>} : vector<16x16xf32>, vector<16x32xf32>, vector<16x32xf32> -> vector<16x32xf32>
      %c0_186 = arith.constant 0 : index
      %c0_187 = arith.constant 0 : index
      %265 = vector.load %arg3[%c0_186, %c0_187] : memref<1x32xf32, #tpu.memory_space<vmem>>, vector<1x32xf32>
      %266 = vector.broadcast %265 : vector<1x32xf32> to vector<16x32xf32>
      %267 = arith.addf %264, %266 : vector<16x32xf32>
      %c0_188 = arith.constant 0 : index
      %c0_189 = arith.constant 0 : index
      %268 = vector.load %arg19[%c0_188, %c0_189] : memref<16x32xf32, #tpu.memory_space<vmem>>, vector<16x32xf32>
      tpu.vector_store %arg19[%c0_188, %c0_189], %267 {strides = array<i32>} : memref<16x32xf32, #tpu.memory_space<vmem>>, vector<16x32xf32>,
    } else {
    }
    %c0 = arith.constant 0 : index
    %c0_1 = arith.constant 0 : index
    %3 = vector.load %arg19[%c0, %c0_1] : memref<16x32xf32, #tpu.memory_space<vmem>>, vector<16x32xf32>
    %c0_2 = arith.constant 0 : index
    %c0_3 = arith.constant 0 : index
    %c0_4 = arith.constant 0 : index
    %c0_5 = arith.constant 0 : index
    %4 = vector.load %arg4[%c0_2, %c0_3, %c0_4, %c0_5] : memref<1x12x32x8xf32, #tpu.memory_space<vmem>>, vector<1x1x32x8xf32>
    %5 = vector.shape_cast %4 : vector<1x1x32x8xf32> to vector<32x8xf32>
    %cst = arith.constant dense<0.000000e+00> : vector<16x8xf32>
    %6 = tpu.matmul %3, %5, %cst {dimension_numbers = #tpu.dot_dimension_numbers<[1], [0], [0], [1], [0, 0, 1, 1], [], []>} : vector<16x32xf32>, vector<32x8xf32>, vector<16x8xf32> -> vector<16x8xf32>
    %c0_6 = arith.constant 0 : index
    %c0_7 = arith.constant 0 : index
    %c0_8 = arith.constant 0 : index
    %c0_9 = arith.constant 0 : index
    %7 = vector.load %arg5[%c0_6, %c0_7, %c0_8, %c0_9] : memref<1x12x1x8xf32, #tpu.memory_space<vmem>>, vector<1x1x1x8xf32>
    %8 = vector.shape_cast %7 : vector<1x1x1x8xf32> to vector<1x8xf32>
    %9 = vector.broadcast %8 : vector<1x8xf32> to vector<16x8xf32>
    %10 = arith.addf %6, %9 : vector<16x8xf32>
    %c0_10 = arith.constant 0 : index
    %c4 = arith.constant 4 : index
    %c0_11 = arith.constant 0 : index
    %c0_12 = arith.constant 0 : index
    %11 = vector.load %arg4[%c0_10, %c4, %c0_11, %c0_12] : memref<1x12x32x8xf32, #tpu.memory_space<vmem>>, vector<1x1x32x8xf32>
    %12 = vector.shape_cast %11 : vector<1x1x32x8xf32> to vector<32x8xf32>
    %cst_13 = arith.constant dense<0.000000e+00> : vector<16x8xf32>
    %13 = tpu.matmul %3, %12, %cst_13 {dimension_numbers = #tpu.dot_dimension_numbers<[1], [0], [0], [1], [0, 0, 1, 1], [], []>} : vector<16x32xf32>, vector<32x8xf32>, vector<16x8xf32> -> vector<16x8xf32>
    %c0_14 = arith.constant 0 : index
    %c4_15 = arith.constant 4 : index
    %c0_16 = arith.constant 0 : index
    %c0_17 = arith.constant 0 : index
    %14 = vector.load %arg5[%c0_14, %c4_15, %c0_16, %c0_17] : memref<1x12x1x8xf32, #tpu.memory_space<vmem>>, vector<1x1x1x8xf32>
    %15 = vector.shape_cast %14 : vector<1x1x1x8xf32> to vector<1x8xf32>
    %16 = vector.broadcast %15 : vector<1x8xf32> to vector<16x8xf32>
    %17 = arith.addf %13, %16 : vector<16x8xf32>
    %c0_18 = arith.constant 0 : index
    %c8 = arith.constant 8 : index
    %c0_19 = arith.constant 0 : index
    %c0_20 = arith.constant 0 : index
    %18 = vector.load %arg4[%c0_18, %c8, %c0_19, %c0_20] : memref<1x12x32x8xf32, #tpu.memory_space<vmem>>, vector<1x1x32x8xf32>
    %19 = vector.shape_cast %18 : vector<1x1x32x8xf32> to vector<32x8xf32>
    %cst_21 = arith.constant dense<0.000000e+00> : vector<16x8xf32>
    %20 = tpu.matmul %3, %19, %cst_21 {dimension_numbers = #tpu.dot_dimension_numbers<[1], [0], [0], [1], [0, 0, 1, 1], [], []>} : vector<16x32xf32>, vector<32x8xf32>, vector<16x8xf32> -> vector<16x8xf32>
    %c0_22 = arith.constant 0 : index
    %c8_23 = arith.constant 8 : index
    %c0_24 = arith.constant 0 : index
    %c0_25 = arith.constant 0 : index
    %21 = vector.load %arg5[%c0_22, %c8_23, %c0_24, %c0_25] : memref<1x12x1x8xf32, #tpu.memory_space<vmem>>, vector<1x1x1x8xf32>
    %22 = vector.shape_cast %21 : vector<1x1x1x8xf32> to vector<1x8xf32>
    %23 = vector.broadcast %22 : vector<1x8xf32> to vector<16x8xf32>
    %24 = arith.addf %20, %23 : vector<16x8xf32>
    %25 = vector.shape_cast %10 : vector<16x8xf32> to vector<2x8x8xf32>
    %26 = vector.shape_cast %17 : vector<16x8xf32> to vector<2x8x8xf32>
    %27 = vector.shape_cast %24 : vector<16x8xf32> to vector<2x8x8xf32>
    "tpu.trace_start"() <{level = 10 : i32, message = "bqd,bkd->bqk"}> : () -> ()
    %cst_26 = arith.constant dense<0.000000e+00> : vector<2x8x8xf32>
    %28 = tpu.matmul %25, %26, %cst_26 {dimension_numbers = #tpu.dot_dimension_numbers<[2], [2], [1], [1], [0, 0, 0, 1, 1, 1], [0], [0]>} : vector<2x8x8xf32>, vector<2x8x8xf32>, vector<2x8x8xf32> -> vector<2x8x8xf32>
    "tpu.trace_stop"() : () -> ()
    %cst_27 = arith.constant 0.353553385 : f32
    %29 = vector.broadcast %cst_27 : f32 to vector<2x8x8xf32>
    %30 = arith.mulf %28, %29 : vector<2x8x8xf32>
    %cst_28 = arith.constant dense<0xFF800000> : vector<2x8xf32>
    %31 = vector.multi_reduction <maximumf>, %30, %cst_28 [2] : vector<2x8x8xf32> to vector<2x8xf32>
    %32 = vector.shape_cast %31 : vector<2x8xf32> to vector<2x8x1xf32>
    %33 = vector.broadcast %32 : vector<2x8x1xf32> to vector<2x8x8xf32>
    %34 = arith.subf %30, %33 : vector<2x8x8xf32>
    %35 = math.exp %34 : vector<2x8x8xf32>
    %cst_29 = arith.constant dense<0.000000e+00> : vector<2x8xf32>
    %36 = vector.multi_reduction <add>, %35, %cst_29 [2] : vector<2x8x8xf32> to vector<2x8xf32>
    %37 = vector.shape_cast %36 : vector<2x8xf32> to vector<2x8x1xf32>
    %38 = tpu.reciprocal %37 {approx = true} : vector<2x8x1xf32> -> vector<2x8x1xf32>
    %39 = vector.broadcast %38 : vector<2x8x1xf32> to vector<2x8x8xf32>
    %40 = arith.mulf %35, %39 : vector<2x8x8xf32>
    "tpu.trace_start"() <{level = 10 : i32, message = "bqk,bkd->bqd"}> : () -> ()
    %cst_30 = arith.constant dense<0.000000e+00> : vector<2x8x8xf32>
    %41 = tpu.matmul %40, %27, %cst_30 {dimension_numbers = #tpu.dot_dimension_numbers<[2], [1], [1], [2], [0, 0, 0, 1, 1, 2], [0], [0]>} : vector<2x8x8xf32>, vector<2x8x8xf32>, vector<2x8x8xf32> -> vector<2x8x8xf32>
    "tpu.trace_stop"() : () -> ()
    %42 = vector.shape_cast %41 : vector<2x8x8xf32> to vector<16x8xf32>
    %c0_31 = arith.constant 0 : index
    %c0_32 = arith.constant 0 : index
    %c0_33 = arith.constant 0 : index
    %c0_34 = arith.constant 0 : index
    %43 = vector.load %arg6[%c0_31, %c0_32, %c0_33, %c0_34] : memref<1x4x8x32xf32, #tpu.memory_space<vmem>>, vector<1x1x8x32xf32>
    %44 = vector.shape_cast %43 : vector<1x1x8x32xf32> to vector<8x32xf32>
    %cst_35 = arith.constant dense<0.000000e+00> : vector<16x32xf32>
    %45 = tpu.matmul %42, %44, %cst_35 {dimension_numbers = #tpu.dot_dimension_numbers<[1], [0], [0], [1], [0, 0, 1, 1], [], []>} : vector<16x8xf32>, vector<8x32xf32>, vector<16x32xf32> -> vector<16x32xf32>
    %c0_36 = arith.constant 0 : index
    %c1 = arith.constant 1 : index
    %c0_37 = arith.constant 0 : index
    %c0_38 = arith.constant 0 : index
    %46 = vector.load %arg4[%c0_36, %c1, %c0_37, %c0_38] : memref<1x12x32x8xf32, #tpu.memory_space<vmem>>, vector<1x1x32x8xf32>
    %47 = vector.shape_cast %46 : vector<1x1x32x8xf32> to vector<32x8xf32>
    %cst_39 = arith.constant dense<0.000000e+00> : vector<16x8xf32>
    %48 = tpu.matmul %3, %47, %cst_39 {dimension_numbers = #tpu.dot_dimension_numbers<[1], [0], [0], [1], [0, 0, 1, 1], [], []>} : vector<16x32xf32>, vector<32x8xf32>, vector<16x8xf32> -> vector<16x8xf32>
    %c0_40 = arith.constant 0 : index
    %c1_41 = arith.constant 1 : index
    %c0_42 = arith.constant 0 : index
    %c0_43 = arith.constant 0 : index
    %49 = vector.load %arg5[%c0_40, %c1_41, %c0_42, %c0_43] : memref<1x12x1x8xf32, #tpu.memory_space<vmem>>, vector<1x1x1x8xf32>
    %50 = vector.shape_cast %49 : vector<1x1x1x8xf32> to vector<1x8xf32>
    %51 = vector.broadcast %50 : vector<1x8xf32> to vector<16x8xf32>
    %52 = arith.addf %48, %51 : vector<16x8xf32>
    %c0_44 = arith.constant 0 : index
    %c5 = arith.constant 5 : index
    %c0_45 = arith.constant 0 : index
    %c0_46 = arith.constant 0 : index
    %53 = vector.load %arg4[%c0_44, %c5, %c0_45, %c0_46] : memref<1x12x32x8xf32, #tpu.memory_space<vmem>>, vector<1x1x32x8xf32>
    %54 = vector.shape_cast %53 : vector<1x1x32x8xf32> to vector<32x8xf32>
    %cst_47 = arith.constant dense<0.000000e+00> : vector<16x8xf32>
    %55 = tpu.matmul %3, %54, %cst_47 {dimension_numbers = #tpu.dot_dimension_numbers<[1], [0], [0], [1], [0, 0, 1, 1], [], []>} : vector<16x32xf32>, vector<32x8xf32>, vector<16x8xf32> -> vector<16x8xf32>
    %c0_48 = arith.constant 0 : index
    %c5_49 = arith.constant 5 : index
    %c0_50 = arith.constant 0 : index
    %c0_51 = arith.constant 0 : index
    %56 = vector.load %arg5[%c0_48, %c5_49, %c0_50, %c0_51] : memref<1x12x1x8xf32, #tpu.memory_space<vmem>>, vector<1x1x1x8xf32>
    %57 = vector.shape_cast %56 : vector<1x1x1x8xf32> to vector<1x8xf32>
    %58 = vector.broadcast %57 : vector<1x8xf32> to vector<16x8xf32>
    %59 = arith.addf %55, %58 : vector<16x8xf32>
    %c0_52 = arith.constant 0 : index
    %c9 = arith.constant 9 : index
    %c0_53 = arith.constant 0 : index
    %c0_54 = arith.constant 0 : index
    %60 = vector.load %arg4[%c0_52, %c9, %c0_53, %c0_54] : memref<1x12x32x8xf32, #tpu.memory_space<vmem>>, vector<1x1x32x8xf32>
    %61 = vector.shape_cast %60 : vector<1x1x32x8xf32> to vector<32x8xf32>
    %cst_55 = arith.constant dense<0.000000e+00> : vector<16x8xf32>
    %62 = tpu.matmul %3, %61, %cst_55 {dimension_numbers = #tpu.dot_dimension_numbers<[1], [0], [0], [1], [0, 0, 1, 1], [], []>} : vector<16x32xf32>, vector<32x8xf32>, vector<16x8xf32> -> vector<16x8xf32>
    %c0_56 = arith.constant 0 : index
    %c9_57 = arith.constant 9 : index
    %c0_58 = arith.constant 0 : index
    %c0_59 = arith.constant 0 : index
    %63 = vector.load %arg5[%c0_56, %c9_57, %c0_58, %c0_59] : memref<1x12x1x8xf32, #tpu.memory_space<vmem>>, vector<1x1x1x8xf32>
    %64 = vector.shape_cast %63 : vector<1x1x1x8xf32> to vector<1x8xf32>
    %65 = vector.broadcast %64 : vector<1x8xf32> to vector<16x8xf32>
    %66 = arith.addf %62, %65 : vector<16x8xf32>
    %67 = vector.shape_cast %52 : vector<16x8xf32> to vector<2x8x8xf32>
    %68 = vector.shape_cast %59 : vector<16x8xf32> to vector<2x8x8xf32>
    %69 = vector.shape_cast %66 : vector<16x8xf32> to vector<2x8x8xf32>
    "tpu.trace_start"() <{level = 10 : i32, message = "bqd,bkd->bqk"}> : () -> ()
    %cst_60 = arith.constant dense<0.000000e+00> : vector<2x8x8xf32>
    %70 = tpu.matmul %67, %68, %cst_60 {dimension_numbers = #tpu.dot_dimension_numbers<[2], [2], [1], [1], [0, 0, 0, 1, 1, 1], [0], [0]>} : vector<2x8x8xf32>, vector<2x8x8xf32>, vector<2x8x8xf32> -> vector<2x8x8xf32>
    "tpu.trace_stop"() : () -> ()
    %cst_61 = arith.constant 0.353553385 : f32
    %71 = vector.broadcast %cst_61 : f32 to vector<2x8x8xf32>
    %72 = arith.mulf %70, %71 : vector<2x8x8xf32>
    %cst_62 = arith.constant dense<0xFF800000> : vector<2x8xf32>
    %73 = vector.multi_reduction <maximumf>, %72, %cst_62 [2] : vector<2x8x8xf32> to vector<2x8xf32>
    %74 = vector.shape_cast %73 : vector<2x8xf32> to vector<2x8x1xf32>
    %75 = vector.broadcast %74 : vector<2x8x1xf32> to vector<2x8x8xf32>
    %76 = arith.subf %72, %75 : vector<2x8x8xf32>
    %77 = math.exp %76 : vector<2x8x8xf32>
    %cst_63 = arith.constant dense<0.000000e+00> : vector<2x8xf32>
    %78 = vector.multi_reduction <add>, %77, %cst_63 [2] : vector<2x8x8xf32> to vector<2x8xf32>
    %79 = vector.shape_cast %78 : vector<2x8xf32> to vector<2x8x1xf32>
    %80 = tpu.reciprocal %79 {approx = true} : vector<2x8x1xf32> -> vector<2x8x1xf32>
    %81 = vector.broadcast %80 : vector<2x8x1xf32> to vector<2x8x8xf32>
    %82 = arith.mulf %77, %81 : vector<2x8x8xf32>
    "tpu.trace_start"() <{level = 10 : i32, message = "bqk,bkd->bqd"}> : () -> ()
    %cst_64 = arith.constant dense<0.000000e+00> : vector<2x8x8xf32>
    %83 = tpu.matmul %82, %69, %cst_64 {dimension_numbers = #tpu.dot_dimension_numbers<[2], [1], [1], [2], [0, 0, 0, 1, 1, 2], [0], [0]>} : vector<2x8x8xf32>, vector<2x8x8xf32>, vector<2x8x8xf32> -> vector<2x8x8xf32>
    "tpu.trace_stop"() : () -> ()
    %84 = vector.shape_cast %83 : vector<2x8x8xf32> to vector<16x8xf32>
    %c0_65 = arith.constant 0 : index
    %c1_66 = arith.constant 1 : index
    %c0_67 = arith.constant 0 : index
    %c0_68 = arith.constant 0 : index
    %85 = vector.load %arg6[%c0_65, %c1_66, %c0_67, %c0_68] : memref<1x4x8x32xf32, #tpu.memory_space<vmem>>, vector<1x1x8x32xf32>
    %86 = vector.shape_cast %85 : vector<1x1x8x32xf32> to vector<8x32xf32>
    %cst_69 = arith.constant dense<0.000000e+00> : vector<16x32xf32>
    %87 = tpu.matmul %84, %86, %cst_69 {dimension_numbers = #tpu.dot_dimension_numbers<[1], [0], [0], [1], [0, 0, 1, 1], [], []>} : vector<16x8xf32>, vector<8x32xf32>, vector<16x32xf32> -> vector<16x32xf32>
    %88 = arith.addf %45, %87 : vector<16x32xf32>
    %c0_70 = arith.constant 0 : index
    %c2 = arith.constant 2 : index
    %c0_71 = arith.constant 0 : index
    %c0_72 = arith.constant 0 : index
    %89 = vector.load %arg4[%c0_70, %c2, %c0_71, %c0_72] : memref<1x12x32x8xf32, #tpu.memory_space<vmem>>, vector<1x1x32x8xf32>
    %90 = vector.shape_cast %89 : vector<1x1x32x8xf32> to vector<32x8xf32>
    %cst_73 = arith.constant dense<0.000000e+00> : vector<16x8xf32>
    %91 = tpu.matmul %3, %90, %cst_73 {dimension_numbers = #tpu.dot_dimension_numbers<[1], [0], [0], [1], [0, 0, 1, 1], [], []>} : vector<16x32xf32>, vector<32x8xf32>, vector<16x8xf32> -> vector<16x8xf32>
    %c0_74 = arith.constant 0 : index
    %c2_75 = arith.constant 2 : index
    %c0_76 = arith.constant 0 : index
    %c0_77 = arith.constant 0 : index
    %92 = vector.load %arg5[%c0_74, %c2_75, %c0_76, %c0_77] : memref<1x12x1x8xf32, #tpu.memory_space<vmem>>, vector<1x1x1x8xf32>
    %93 = vector.shape_cast %92 : vector<1x1x1x8xf32> to vector<1x8xf32>
    %94 = vector.broadcast %93 : vector<1x8xf32> to vector<16x8xf32>
    %95 = arith.addf %91, %94 : vector<16x8xf32>
    %c0_78 = arith.constant 0 : index
    %c6 = arith.constant 6 : index
    %c0_79 = arith.constant 0 : index
    %c0_80 = arith.constant 0 : index
    %96 = vector.load %arg4[%c0_78, %c6, %c0_79, %c0_80] : memref<1x12x32x8xf32, #tpu.memory_space<vmem>>, vector<1x1x32x8xf32>
    %97 = vector.shape_cast %96 : vector<1x1x32x8xf32> to vector<32x8xf32>
    %cst_81 = arith.constant dense<0.000000e+00> : vector<16x8xf32>
    %98 = tpu.matmul %3, %97, %cst_81 {dimension_numbers = #tpu.dot_dimension_numbers<[1], [0], [0], [1], [0, 0, 1, 1], [], []>} : vector<16x32xf32>, vector<32x8xf32>, vector<16x8xf32> -> vector<16x8xf32>
    %c0_82 = arith.constant 0 : index
    %c6_83 = arith.constant 6 : index
    %c0_84 = arith.constant 0 : index
    %c0_85 = arith.constant 0 : index
    %99 = vector.load %arg5[%c0_82, %c6_83, %c0_84, %c0_85] : memref<1x12x1x8xf32, #tpu.memory_space<vmem>>, vector<1x1x1x8xf32>
    %100 = vector.shape_cast %99 : vector<1x1x1x8xf32> to vector<1x8xf32>
    %101 = vector.broadcast %100 : vector<1x8xf32> to vector<16x8xf32>
    %102 = arith.addf %98, %101 : vector<16x8xf32>
    %c0_86 = arith.constant 0 : index
    %c10 = arith.constant 10 : index
    %c0_87 = arith.constant 0 : index
    %c0_88 = arith.constant 0 : index
    %103 = vector.load %arg4[%c0_86, %c10, %c0_87, %c0_88] : memref<1x12x32x8xf32, #tpu.memory_space<vmem>>, vector<1x1x32x8xf32>
    %104 = vector.shape_cast %103 : vector<1x1x32x8xf32> to vector<32x8xf32>
    %cst_89 = arith.constant dense<0.000000e+00> : vector<16x8xf32>
    %105 = tpu.matmul %3, %104, %cst_89 {dimension_numbers = #tpu.dot_dimension_numbers<[1], [0], [0], [1], [0, 0, 1, 1], [], []>} : vector<16x32xf32>, vector<32x8xf32>, vector<16x8xf32> -> vector<16x8xf32>
    %c0_90 = arith.constant 0 : index
    %c10_91 = arith.constant 10 : index
    %c0_92 = arith.constant 0 : index
    %c0_93 = arith.constant 0 : index
    %106 = vector.load %arg5[%c0_90, %c10_91, %c0_92, %c0_93] : memref<1x12x1x8xf32, #tpu.memory_space<vmem>>, vector<1x1x1x8xf32>
    %107 = vector.shape_cast %106 : vector<1x1x1x8xf32> to vector<1x8xf32>
    %108 = vector.broadcast %107 : vector<1x8xf32> to vector<16x8xf32>
    %109 = arith.addf %105, %108 : vector<16x8xf32>
    %110 = vector.shape_cast %95 : vector<16x8xf32> to vector<2x8x8xf32>
    %111 = vector.shape_cast %102 : vector<16x8xf32> to vector<2x8x8xf32>
    %112 = vector.shape_cast %109 : vector<16x8xf32> to vector<2x8x8xf32>
    "tpu.trace_start"() <{level = 10 : i32, message = "bqd,bkd->bqk"}> : () -> ()
    %cst_94 = arith.constant dense<0.000000e+00> : vector<2x8x8xf32>
    %113 = tpu.matmul %110, %111, %cst_94 {dimension_numbers = #tpu.dot_dimension_numbers<[2], [2], [1], [1], [0, 0, 0, 1, 1, 1], [0], [0]>} : vector<2x8x8xf32>, vector<2x8x8xf32>, vector<2x8x8xf32> -> vector<2x8x8xf32>
    "tpu.trace_stop"() : () -> ()
    %cst_95 = arith.constant 0.353553385 : f32
    %114 = vector.broadcast %cst_95 : f32 to vector<2x8x8xf32>
    %115 = arith.mulf %113, %114 : vector<2x8x8xf32>
    %cst_96 = arith.constant dense<0xFF800000> : vector<2x8xf32>
    %116 = vector.multi_reduction <maximumf>, %115, %cst_96 [2] : vector<2x8x8xf32> to vector<2x8xf32>
    %117 = vector.shape_cast %116 : vector<2x8xf32> to vector<2x8x1xf32>
    %118 = vector.broadcast %117 : vector<2x8x1xf32> to vector<2x8x8xf32>
    %119 = arith.subf %115, %118 : vector<2x8x8xf32>
    %120 = math.exp %119 : vector<2x8x8xf32>
    %cst_97 = arith.constant dense<0.000000e+00> : vector<2x8xf32>
    %121 = vector.multi_reduction <add>, %120, %cst_97 [2] : vector<2x8x8xf32> to vector<2x8xf32>
    %122 = vector.shape_cast %121 : vector<2x8xf32> to vector<2x8x1xf32>
    %123 = tpu.reciprocal %122 {approx = true} : vector<2x8x1xf32> -> vector<2x8x1xf32>
    %124 = vector.broadcast %123 : vector<2x8x1xf32> to vector<2x8x8xf32>
    %125 = arith.mulf %120, %124 : vector<2x8x8xf32>
    "tpu.trace_start"() <{level = 10 : i32, message = "bqk,bkd->bqd"}> : () -> ()
    %cst_98 = arith.constant dense<0.000000e+00> : vector<2x8x8xf32>
    %126 = tpu.matmul %125, %112, %cst_98 {dimension_numbers = #tpu.dot_dimension_numbers<[2], [1], [1], [2], [0, 0, 0, 1, 1, 2], [0], [0]>} : vector<2x8x8xf32>, vector<2x8x8xf32>, vector<2x8x8xf32> -> vector<2x8x8xf32>
    "tpu.trace_stop"() : () -> ()
    %127 = vector.shape_cast %126 : vector<2x8x8xf32> to vector<16x8xf32>
    %c0_99 = arith.constant 0 : index
    %c2_100 = arith.constant 2 : index
    %c0_101 = arith.constant 0 : index
    %c0_102 = arith.constant 0 : index
    %128 = vector.load %arg6[%c0_99, %c2_100, %c0_101, %c0_102] : memref<1x4x8x32xf32, #tpu.memory_space<vmem>>, vector<1x1x8x32xf32>
    %129 = vector.shape_cast %128 : vector<1x1x8x32xf32> to vector<8x32xf32>
    %cst_103 = arith.constant dense<0.000000e+00> : vector<16x32xf32>
    %130 = tpu.matmul %127, %129, %cst_103 {dimension_numbers = #tpu.dot_dimension_numbers<[1], [0], [0], [1], [0, 0, 1, 1], [], []>} : vector<16x8xf32>, vector<8x32xf32>, vector<16x32xf32> -> vector<16x32xf32>
    %131 = arith.addf %88, %130 : vector<16x32xf32>
    %c0_104 = arith.constant 0 : index
    %c3 = arith.constant 3 : index
    %c0_105 = arith.constant 0 : index
    %c0_106 = arith.constant 0 : index
    %132 = vector.load %arg4[%c0_104, %c3, %c0_105, %c0_106] : memref<1x12x32x8xf32, #tpu.memory_space<vmem>>, vector<1x1x32x8xf32>
    %133 = vector.shape_cast %132 : vector<1x1x32x8xf32> to vector<32x8xf32>
    %cst_107 = arith.constant dense<0.000000e+00> : vector<16x8xf32>
    %134 = tpu.matmul %3, %133, %cst_107 {dimension_numbers = #tpu.dot_dimension_numbers<[1], [0], [0], [1], [0, 0, 1, 1], [], []>} : vector<16x32xf32>, vector<32x8xf32>, vector<16x8xf32> -> vector<16x8xf32>
    %c0_108 = arith.constant 0 : index
    %c3_109 = arith.constant 3 : index
    %c0_110 = arith.constant 0 : index
    %c0_111 = arith.constant 0 : index
    %135 = vector.load %arg5[%c0_108, %c3_109, %c0_110, %c0_111] : memref<1x12x1x8xf32, #tpu.memory_space<vmem>>, vector<1x1x1x8xf32>
    %136 = vector.shape_cast %135 : vector<1x1x1x8xf32> to vector<1x8xf32>
    %137 = vector.broadcast %136 : vector<1x8xf32> to vector<16x8xf32>
    %138 = arith.addf %134, %137 : vector<16x8xf32>
    %c0_112 = arith.constant 0 : index
    %c7 = arith.constant 7 : index
    %c0_113 = arith.constant 0 : index
    %c0_114 = arith.constant 0 : index
    %139 = vector.load %arg4[%c0_112, %c7, %c0_113, %c0_114] : memref<1x12x32x8xf32, #tpu.memory_space<vmem>>, vector<1x1x32x8xf32>
    %140 = vector.shape_cast %139 : vector<1x1x32x8xf32> to vector<32x8xf32>
    %cst_115 = arith.constant dense<0.000000e+00> : vector<16x8xf32>
    %141 = tpu.matmul %3, %140, %cst_115 {dimension_numbers = #tpu.dot_dimension_numbers<[1], [0], [0], [1], [0, 0, 1, 1], [], []>} : vector<16x32xf32>, vector<32x8xf32>, vector<16x8xf32> -> vector<16x8xf32>
    %c0_116 = arith.constant 0 : index
    %c7_117 = arith.constant 7 : index
    %c0_118 = arith.constant 0 : index
    %c0_119 = arith.constant 0 : index
    %142 = vector.load %arg5[%c0_116, %c7_117, %c0_118, %c0_119] : memref<1x12x1x8xf32, #tpu.memory_space<vmem>>, vector<1x1x1x8xf32>
    %143 = vector.shape_cast %142 : vector<1x1x1x8xf32> to vector<1x8xf32>
    %144 = vector.broadcast %143 : vector<1x8xf32> to vector<16x8xf32>
    %145 = arith.addf %141, %144 : vector<16x8xf32>
    %c0_120 = arith.constant 0 : index
    %c11 = arith.constant 11 : index
    %c0_121 = arith.constant 0 : index
    %c0_122 = arith.constant 0 : index
    %146 = vector.load %arg4[%c0_120, %c11, %c0_121, %c0_122] : memref<1x12x32x8xf32, #tpu.memory_space<vmem>>, vector<1x1x32x8xf32>
    %147 = vector.shape_cast %146 : vector<1x1x32x8xf32> to vector<32x8xf32>
    %cst_123 = arith.constant dense<0.000000e+00> : vector<16x8xf32>
    %148 = tpu.matmul %3, %147, %cst_123 {dimension_numbers = #tpu.dot_dimension_numbers<[1], [0], [0], [1], [0, 0, 1, 1], [], []>} : vector<16x32xf32>, vector<32x8xf32>, vector<16x8xf32> -> vector<16x8xf32>
    %c0_124 = arith.constant 0 : index
    %c11_125 = arith.constant 11 : index
    %c0_126 = arith.constant 0 : index
    %c0_127 = arith.constant 0 : index
    %149 = vector.load %arg5[%c0_124, %c11_125, %c0_126, %c0_127] : memref<1x12x1x8xf32, #tpu.memory_space<vmem>>, vector<1x1x1x8xf32>
    %150 = vector.shape_cast %149 : vector<1x1x1x8xf32> to vector<1x8xf32>
    %151 = vector.broadcast %150 : vector<1x8xf32> to vector<16x8xf32>
    %152 = arith.addf %148, %151 : vector<16x8xf32>
    %153 = vector.shape_cast %138 : vector<16x8xf32> to vector<2x8x8xf32>
    %154 = vector.shape_cast %145 : vector<16x8xf32> to vector<2x8x8xf32>
    %155 = vector.shape_cast %152 : vector<16x8xf32> to vector<2x8x8xf32>
    "tpu.trace_start"() <{level = 10 : i32, message = "bqd,bkd->bqk"}> : () -> ()
    %cst_128 = arith.constant dense<0.000000e+00> : vector<2x8x8xf32>
    %156 = tpu.matmul %153, %154, %cst_128 {dimension_numbers = #tpu.dot_dimension_numbers<[2], [2], [1], [1], [0, 0, 0, 1, 1, 1], [0], [0]>} : vector<2x8x8xf32>, vector<2x8x8xf32>, vector<2x8x8xf32> -> vector<2x8x8xf32>
    "tpu.trace_stop"() : () -> ()
    %cst_129 = arith.constant 0.353553385 : f32
    %157 = vector.broadcast %cst_129 : f32 to vector<2x8x8xf32>
    %158 = arith.mulf %156, %157 : vector<2x8x8xf32>
    %cst_130 = arith.constant dense<0xFF800000> : vector<2x8xf32>
    %159 = vector.multi_reduction <maximumf>, %158, %cst_130 [2] : vector<2x8x8xf32> to vector<2x8xf32>
    %160 = vector.shape_cast %159 : vector<2x8xf32> to vector<2x8x1xf32>
    %161 = vector.broadcast %160 : vector<2x8x1xf32> to vector<2x8x8xf32>
    %162 = arith.subf %158, %161 : vector<2x8x8xf32>
    %163 = math.exp %162 : vector<2x8x8xf32>
    %cst_131 = arith.constant dense<0.000000e+00> : vector<2x8xf32>
    %164 = vector.multi_reduction <add>, %163, %cst_131 [2] : vector<2x8x8xf32> to vector<2x8xf32>
    %165 = vector.shape_cast %164 : vector<2x8xf32> to vector<2x8x1xf32>
    %166 = tpu.reciprocal %165 {approx = true} : vector<2x8x1xf32> -> vector<2x8x1xf32>
    %167 = vector.broadcast %166 : vector<2x8x1xf32> to vector<2x8x8xf32>
    %168 = arith.mulf %163, %167 : vector<2x8x8xf32>
    "tpu.trace_start"() <{level = 10 : i32, message = "bqk,bkd->bqd"}> : () -> ()
    %cst_132 = arith.constant dense<0.000000e+00> : vector<2x8x8xf32>
    %169 = tpu.matmul %168, %155, %cst_132 {dimension_numbers = #tpu.dot_dimension_numbers<[2], [1], [1], [2], [0, 0, 0, 1, 1, 2], [0], [0]>} : vector<2x8x8xf32>, vector<2x8x8xf32>, vector<2x8x8xf32> -> vector<2x8x8xf32>
    "tpu.trace_stop"() : () -> ()
    %170 = vector.shape_cast %169 : vector<2x8x8xf32> to vector<16x8xf32>
    %c0_133 = arith.constant 0 : index
    %c3_134 = arith.constant 3 : index
    %c0_135 = arith.constant 0 : index
    %c0_136 = arith.constant 0 : index
    %171 = vector.load %arg6[%c0_133, %c3_134, %c0_135, %c0_136] : memref<1x4x8x32xf32, #tpu.memory_space<vmem>>, vector<1x1x8x32xf32>
    %172 = vector.shape_cast %171 : vector<1x1x8x32xf32> to vector<8x32xf32>
    %cst_137 = arith.constant dense<0.000000e+00> : vector<16x32xf32>
    %173 = tpu.matmul %170, %172, %cst_137 {dimension_numbers = #tpu.dot_dimension_numbers<[1], [0], [0], [1], [0, 0, 1, 1], [], []>} : vector<16x8xf32>, vector<8x32xf32>, vector<16x32xf32> -> vector<16x32xf32>
    %174 = arith.addf %131, %173 : vector<16x32xf32>
    %c0_138 = arith.constant 0 : index
    %c0_139 = arith.constant 0 : index
    %c0_140 = arith.constant 0 : index
    %175 = vector.load %arg7[%c0_138, %c0_139, %c0_140] : memref<1x1x32xf32, #tpu.memory_space<vmem>>, vector<1x1x32xf32>
    %176 = vector.shape_cast %175 : vector<1x1x32xf32> to vector<1x32xf32>
    %177 = vector.broadcast %176 : vector<1x32xf32> to vector<16x32xf32>
    %178 = arith.addf %174, %177 : vector<16x32xf32>
    %179 = arith.addf %3, %178 : vector<16x32xf32>
    %c0_141 = arith.constant 0 : index
    %c0_142 = arith.constant 0 : index
    %c0_143 = arith.constant 0 : index
    %180 = vector.load %arg8[%c0_141, %c0_142, %c0_143] : memref<1x1x32xf32, #tpu.memory_space<vmem>>, vector<1x1x32xf32>
    %181 = vector.shape_cast %180 : vector<1x1x32xf32> to vector<1x32xf32>
    %c0_144 = arith.constant 0 : index
    %c0_145 = arith.constant 0 : index
    %c0_146 = arith.constant 0 : index
    %182 = vector.load %arg9[%c0_144, %c0_145, %c0_146] : memref<1x1x32xf32, #tpu.memory_space<vmem>>, vector<1x1x32xf32>
    %183 = vector.shape_cast %182 : vector<1x1x32xf32> to vector<1x32xf32>
    %cst_147 = arith.constant dense<0.000000e+00> : vector<16xf32>
    %184 = vector.multi_reduction <add>, %179, %cst_147 [1] : vector<16x32xf32> to vector<16xf32>
    %185 = vector.shape_cast %184 : vector<16xf32> to vector<16x1xf32>
    %cst_148 = arith.constant 3.200000e+01 : f32
    %186 = vector.broadcast %cst_148 : f32 to vector<16x1xf32>
    %187 = arith.divf %185, %186 : vector<16x1xf32>
    %188 = vector.broadcast %187 : vector<16x1xf32> to vector<16x32xf32>
    %189 = arith.subf %179, %188 : vector<16x32xf32>
    %190 = vector.broadcast %187 : vector<16x1xf32> to vector<16x32xf32>
    %191 = arith.subf %179, %190 : vector<16x32xf32>
    %192 = arith.mulf %189, %191 : vector<16x32xf32>
    %cst_149 = arith.constant dense<0.000000e+00> : vector<16xf32>
    %193 = vector.multi_reduction <add>, %192, %cst_149 [1] : vector<16x32xf32> to vector<16xf32>
    %194 = vector.shape_cast %193 : vector<16xf32> to vector<16x1xf32>
    %cst_150 = arith.constant 3.200000e+01 : f32
    %195 = vector.broadcast %cst_150 : f32 to vector<16x1xf32>
    %196 = arith.divf %194, %195 : vector<16x1xf32>
    %197 = vector.broadcast %187 : vector<16x1xf32> to vector<16x32xf32>
    %198 = arith.subf %179, %197 : vector<16x32xf32>
    %cst_151 = arith.constant 9.99999974E-6 : f32
    %199 = vector.broadcast %cst_151 : f32 to vector<16x1xf32>
    %200 = arith.addf %196, %199 : vector<16x1xf32>
    %201 = math.rsqrt %200 : vector<16x1xf32>
    %202 = vector.broadcast %201 : vector<16x1xf32> to vector<16x32xf32>
    %203 = arith.mulf %198, %202 : vector<16x32xf32>
    %204 = vector.broadcast %181 : vector<1x32xf32> to vector<16x32xf32>
    %205 = arith.mulf %203, %204 : vector<16x32xf32>
    %206 = vector.broadcast %183 : vector<1x32xf32> to vector<16x32xf32>
    %207 = arith.addf %205, %206 : vector<16x32xf32>
    %208 = arith.truncf %207 : vector<16x32xf32> to vector<16x32xbf16>
    %c0_152 = arith.constant 0 : index
    %c0_153 = arith.constant 0 : index
    %c0_154 = arith.constant 0 : index
    %209 = vector.load %arg12[%c0_152, %c0_153, %c0_154] : memref<1x32x2048xbf16, #tpu.memory_space<vmem>>, vector<1x32x2048xbf16>
    %210 = vector.shape_cast %209 : vector<1x32x2048xbf16> to vector<32x2048xbf16>
    %cst_155 = arith.constant dense<0.000000e+00> : vector<16x2048xf32>
    %211 = tpu.matmul %208, %210, %cst_155 {dimension_numbers = #tpu.dot_dimension_numbers<[1], [0], [0], [1], [0, 0, 1, 1], [], []>} : vector<16x32xbf16>, vector<32x2048xbf16>, vector<16x2048xf32> -> vector<16x2048xf32>
    %c0_156 = arith.constant 0 : index
    %c0_157 = arith.constant 0 : index
    %c0_158 = arith.constant 0 : index
    %212 = vector.load %arg13[%c0_156, %c0_157, %c0_158] : memref<1x1x2048xf32, #tpu.memory_space<vmem>>, vector<1x1x2048xf32>
    %213 = vector.shape_cast %212 : vector<1x1x2048xf32> to vector<1x2048xf32>
    %214 = vector.broadcast %213 : vector<1x2048xf32> to vector<16x2048xf32>
    %215 = arith.addf %211, %214 : vector<16x2048xf32>
    %cst_159 = arith.constant 0.000000e+00 : f32
    %216 = vector.broadcast %cst_159 : f32 to vector<16x2048xf32>
    %217 = arith.maximumf %215, %216 : vector<16x2048xf32>
    %218 = arith.truncf %217 : vector<16x2048xf32> to vector<16x2048xbf16>
    %c0_160 = arith.constant 0 : index
    %c0_161 = arith.constant 0 : index
    %c0_162 = arith.constant 0 : index
    %219 = vector.load %arg14[%c0_160, %c0_161, %c0_162] : memref<1x2048x32xbf16, #tpu.memory_space<vmem>>, vector<1x2048x32xbf16>
    %220 = vector.shape_cast %219 : vector<1x2048x32xbf16> to vector<2048x32xbf16>
    %cst_163 = arith.constant dense<0.000000e+00> : vector<16x32xf32>
    %221 = tpu.matmul %218, %220, %cst_163 {dimension_numbers = #tpu.dot_dimension_numbers<[1], [0], [0], [1], [0, 0, 1, 1], [], []>} : vector<16x2048xbf16>, vector<2048x32xbf16>, vector<16x32xf32> -> vector<16x32xf32>
    %c0_164 = arith.constant 0 : index
    %c0_165 = arith.constant 0 : index
    %c0_166 = arith.constant 0 : index
    %222 = vector.load %arg15[%c0_164, %c0_165, %c0_166] : memref<1x1x32xf32, #tpu.memory_space<vmem>>, vector<1x1x32xf32>
    %223 = vector.shape_cast %222 : vector<1x1x32xf32> to vector<1x32xf32>
    %224 = vector.broadcast %223 : vector<1x32xf32> to vector<16x32xf32>
    %225 = arith.addf %221, %224 : vector<16x32xf32>
    %226 = arith.addf %207, %225 : vector<16x32xf32>
    %c0_167 = arith.constant 0 : index
    %c0_168 = arith.constant 0 : index
    %c0_169 = arith.constant 0 : index
    %227 = vector.load %arg10[%c0_167, %c0_168, %c0_169] : memref<1x1x32xf32, #tpu.memory_space<vmem>>, vector<1x1x32xf32>
    %228 = vector.shape_cast %227 : vector<1x1x32xf32> to vector<1x32xf32>
    %c0_170 = arith.constant 0 : index
    %c0_171 = arith.constant 0 : index
    %c0_172 = arith.constant 0 : index
    %229 = vector.load %arg11[%c0_170, %c0_171, %c0_172] : memref<1x1x32xf32, #tpu.memory_space<vmem>>, vector<1x1x32xf32>
    %230 = vector.shape_cast %229 : vector<1x1x32xf32> to vector<1x32xf32>
    %cst_173 = arith.constant dense<0.000000e+00> : vector<16xf32>
    %231 = vector.multi_reduction <add>, %226, %cst_173 [1] : vector<16x32xf32> to vector<16xf32>
    %232 = vector.shape_cast %231 : vector<16xf32> to vector<16x1xf32>
    %cst_174 = arith.constant 3.200000e+01 : f32
    %233 = vector.broadcast %cst_174 : f32 to vector<16x1xf32>
    %234 = arith.divf %232, %233 : vector<16x1xf32>
    %235 = vector.broadcast %234 : vector<16x1xf32> to vector<16x32xf32>
    %236 = arith.subf %226, %235 : vector<16x32xf32>
    %237 = vector.broadcast %234 : vector<16x1xf32> to vector<16x32xf32>
    %238 = arith.subf %226, %237 : vector<16x32xf32>
    %239 = arith.mulf %236, %238 : vector<16x32xf32>
    %cst_175 = arith.constant dense<0.000000e+00> : vector<16xf32>
    %240 = vector.multi_reduction <add>, %239, %cst_175 [1] : vector<16x32xf32> to vector<16xf32>
    %241 = vector.shape_cast %240 : vector<16xf32> to vector<16x1xf32>
    %cst_176 = arith.constant 3.200000e+01 : f32
    %242 = vector.broadcast %cst_176 : f32 to vector<16x1xf32>
    %243 = arith.divf %241, %242 : vector<16x1xf32>
    %244 = vector.broadcast %234 : vector<16x1xf32> to vector<16x32xf32>
    %245 = arith.subf %226, %244 : vector<16x32xf32>
    %cst_177 = arith.constant 9.99999974E-6 : f32
    %246 = vector.broadcast %cst_177 : f32 to vector<16x1xf32>
    %247 = arith.addf %243, %246 : vector<16x1xf32>
    %248 = math.rsqrt %247 : vector<16x1xf32>
    %249 = vector.broadcast %248 : vector<16x1xf32> to vector<16x32xf32>
    %250 = arith.mulf %245, %249 : vector<16x32xf32>
    %251 = vector.broadcast %228 : vector<1x32xf32> to vector<16x32xf32>
    %252 = arith.mulf %250, %251 : vector<16x32xf32>
    %253 = vector.broadcast %230 : vector<1x32xf32> to vector<16x32xf32>
    %254 = arith.addf %252, %253 : vector<16x32xf32>
    %c0_178 = arith.constant 0 : index
    %c0_179 = arith.constant 0 : index
    %255 = vector.load %arg19[%c0_178, %c0_179] : memref<16x32xf32, #tpu.memory_space<vmem>>, vector<16x32xf32>
    tpu.vector_store %arg19[%c0_178, %c0_179], %254 {strides = array<i32>} : memref<16x32xf32, #tpu.memory_space<vmem>>, vector<16x32xf32>,
    %c1_i32 = arith.constant 1 : i32
    %256 = arith.cmpi eq, %arg0, %c1_i32 : i32
    %257 = arith.extui %256 : i1 to i32
    %c0_i32_180 = arith.constant 0 : i32
    %258 = arith.cmpi ne, %257, %c0_i32_180 : i32
    scf.if %258 {
      %259 = vector.extract_strided_slice %254 {offsets = [7, 0], sizes = [1, 32], strides = [1, 1]} : vector<16x32xf32> to vector<1x32xf32>
      %260 = vector.extract_strided_slice %254 {offsets = [15, 0], sizes = [1, 32], strides = [1, 1]} : vector<16x32xf32> to vector<1x32xf32>
      %261 = tpu.concatenate %259, %260 in 0 : vector<1x32xf32>, vector<1x32xf32> -> vector<2x32xf32>
      %c0_181 = arith.constant 0 : index
      %c0_182 = arith.constant 0 : index
      %262 = vector.load %arg16[%c0_181, %c0_182] : memref<32x1xf32, #tpu.memory_space<vmem>>, vector<32x1xf32>
      %cst_183 = arith.constant dense<0.000000e+00> : vector<2x1xf32>
      %263 = tpu.matmul %261, %262, %cst_183 {dimension_numbers = #tpu.dot_dimension_numbers<[1], [0], [0], [1], [0, 0, 1, 1], [], []>} : vector<2x32xf32>, vector<32x1xf32>, vector<2x1xf32> -> vector<2x1xf32>
      %c0_184 = arith.constant 0 : index
      %c0_185 = arith.constant 0 : index
      %264 = vector.load %arg17[%c0_184, %c0_185] : memref<1x1xf32, #tpu.memory_space<vmem>>, vector<1x1xf32>
      %265 = vector.broadcast %264 : vector<1x1xf32> to vector<2x1xf32>
      %266 = arith.addf %263, %265 : vector<2x1xf32>
      %c0_186 = arith.constant 0 : index
      %c0_187 = arith.constant 0 : index
      %267 = vector.load %arg18[%c0_186, %c0_187] : memref<2x1xf32, #tpu.memory_space<vmem>>, vector<2x1xf32>
      tpu.vector_store %arg18[%c0_186, %c0_187], %266 {strides = array<i32>} : memref<2x1xf32, #tpu.memory_space<vmem>>, vector<2x1xf32>,
    } else {
    }
    return
  }
  func.func @transform_0(%arg0: i32) -> (i32, i32) {
    %c0_i32 = arith.constant 0 : i32
    %c0_i32_0 = arith.constant 0 : i32
    %c0_i32_1 = arith.constant 0 : i32
    return %c0_i32, %c0_i32_0 : i32, i32
  }
  func.func @transform_1(%arg0: i32) -> (i32, i32) {
    %c0_i32 = arith.constant 0 : i32
    %c0_i32_0 = arith.constant 0 : i32
    %c0_i32_1 = arith.constant 0 : i32
    return %c0_i32, %c0_i32_0 : i32, i32
  }
  func.func @transform_2(%arg0: i32) -> (i32, i32) {
    %c0_i32 = arith.constant 0 : i32
    %c0_i32_0 = arith.constant 0 : i32
    %c0_i32_1 = arith.constant 0 : i32
    return %c0_i32, %c0_i32_0 : i32, i32
  }
  func.func @transform_3(%arg0: i32) -> (i32, i32, i32, i32) {
    %c0_i32 = arith.constant 0 : i32
    %c0_i32_0 = arith.constant 0 : i32
    %c0_i32_1 = arith.constant 0 : i32
    %c0_i32_2 = arith.constant 0 : i32
    return %arg0, %c0_i32, %c0_i32_0, %c0_i32_1 : i32, i32, i32, i32
  }
  func.func @transform_4(%arg0: i32) -> (i32, i32, i32, i32) {
    %c0_i32 = arith.constant 0 : i32
    %c0_i32_0 = arith.constant 0 : i32
    %c0_i32_1 = arith.constant 0 : i32
    %c0_i32_2 = arith.constant 0 : i32
    return %arg0, %c0_i32, %c0_i32_0, %c0_i32_1 : i32, i32, i32, i32
  }
  func.func @transform_5(%arg0: i32) -> (i32, i32, i32, i32) {
    %c0_i32 = arith.constant 0 : i32
    %c0_i32_0 = arith.constant 0 : i32
    %c0_i32_1 = arith.constant 0 : i32
    %c0_i32_2 = arith.constant 0 : i32
    return %arg0, %c0_i32, %c0_i32_0, %c0_i32_1 : i32, i32, i32, i32
  }
  func.func @transform_6(%arg0: i32) -> (i32, i32, i32) {
    %c0_i32 = arith.constant 0 : i32
    %c0_i32_0 = arith.constant 0 : i32
    %c0_i32_1 = arith.constant 0 : i32
    return %arg0, %c0_i32, %c0_i32_0 : i32, i32, i32
  }
  func.func @transform_7(%arg0: i32) -> (i32, i32, i32) {
    %c0_i32 = arith.constant 0 : i32
    %c0_i32_0 = arith.constant 0 : i32
    %c0_i32_1 = arith.constant 0 : i32
    return %arg0, %c0_i32, %c0_i32_0 : i32, i32, i32
  }
  func.func @transform_8(%arg0: i32) -> (i32, i32, i32) {
    %c0_i32 = arith.constant 0 : i32
    %c0_i32_0 = arith.constant 0 : i32
    %c0_i32_1 = arith.constant 0 : i32
    return %arg0, %c0_i32, %c0_i32_0 : i32, i32, i32
  }
  func.func @transform_9(%arg0: i32) -> (i32, i32, i32) {
    %c0_i32 = arith.constant 0 : i32
    %c0_i32_0 = arith.constant 0 : i32
    %c0_i32_1 = arith.constant 0 : i32
    return %arg0, %c0_i32, %c0_i32_0 : i32, i32, i32
  }
  func.func @transform_10(%arg0: i32) -> (i32, i32, i32) {
    %c0_i32 = arith.constant 0 : i32
    %c0_i32_0 = arith.constant 0 : i32
    %c0_i32_1 = arith.constant 0 : i32
    return %arg0, %c0_i32, %c0_i32_0 : i32, i32, i32
  }
  func.func @transform_11(%arg0: i32) -> (i32, i32, i32) {
    %c0_i32 = arith.constant 0 : i32
    %c0_i32_0 = arith.constant 0 : i32
    %c0_i32_1 = arith.constant 0 : i32
    return %arg0, %c0_i32, %c0_i32_0 : i32, i32, i32
  }
  func.func @transform_12(%arg0: i32) -> (i32, i32, i32) {
    %c0_i32 = arith.constant 0 : i32
    %c0_i32_0 = arith.constant 0 : i32
    %c0_i32_1 = arith.constant 0 : i32
    return %arg0, %c0_i32, %c0_i32_0 : i32, i32, i32
  }
  func.func @transform_13(%arg0: i32) -> (i32, i32, i32) {
    %c0_i32 = arith.constant 0 : i32
    %c0_i32_0 = arith.constant 0 : i32
    %c0_i32_1 = arith.constant 0 : i32
    return %arg0, %c0_i32, %c0_i32_0 : i32, i32, i32
  }
  func.func @transform_14(%arg0: i32) -> (i32, i32, i32) {
    %c0_i32 = arith.constant 0 : i32
    %c0_i32_0 = arith.constant 0 : i32
    %c0_i32_1 = arith.constant 0 : i32
    return %arg0, %c0_i32, %c0_i32_0 : i32, i32, i32
  }
  func.func @transform_15(%arg0: i32) -> (i32, i32) {
    %c0_i32 = arith.constant 0 : i32
    %c0_i32_0 = arith.constant 0 : i32
    %c0_i32_1 = arith.constant 0 : i32
    return %c0_i32, %c0_i32_0 : i32, i32
  }
  func.func @transform_16(%arg0: i32) -> (i32, i32) {
    %c0_i32 = arith.constant 0 : i32
    %c0_i32_0 = arith.constant 0 : i32
    %c0_i32_1 = arith.constant 0 : i32
    return %c0_i32, %c0_i32_0 : i32, i32
  }
  func.func @transform_17(%arg0: i32) -> (i32, i32) {
    %c0_i32 = arith.constant 0 : i32
    %c0_i32_0 = arith.constant 0 : i32
    %c0_i32_1 = arith.constant 0 : i32
    return %c0_i32, %c0_i32_0 : i32, i32
  }
}

</mosaic_0001>

<llo_original>
// kernel: forward.1
$region0: #{forward.1}
  #allocation0 [shape = 'u32[]', space=smem, size = 0x4, offset = 0x4, fixed_abs, tag = 'smem constant byte address 0x4 - core index']
  #allocation1 [shape = 'u32[72,128]{1,0:T(1,128)}', space=vmem, size = 0x9000, scoped, tag = 'internal scratch']
  #allocation2 [shape = 'f32[16,32]{1,0:T(8,128)}', space=vmem, size = 0x2000, scoped, tag = 'scratch operand']
  #allocation3 [shape = 'f32[1,1]{1,0:T(1,128)S(1)}', space=vmem, size = 0x200, scoped, tag = 'scoped memory for forward.1']
  %s0 = inlined_call_operand.vmem [shape: f32[8,32], index: 0, kind: input, shape index: {}]
  %s1 = inlined_call_operand.vmem [shape: f32[16,32], index: 1, kind: input, shape index: {}]
  %s2 = inlined_call_operand.vmem [shape: f32[1,32], index: 2, kind: input, shape index: {}]
  %s3 = inlined_call_operand.vmem [shape: f32[2,12,32,8], index: 3, kind: input, shape index: {}]
  %s4 = inlined_call_operand.vmem [shape: f32[2,12,1,8], index: 4, kind: input, shape index: {}]
  %s5 = inlined_call_operand.vmem [shape: f32[2,4,8,32], index: 5, kind: input, shape index: {}]
  %s6 = inlined_call_operand.vmem [shape: f32[2,1,32], index: 6, kind: input, shape index: {}]
  %s7 = inlined_call_operand.vmem [shape: f32[2,1,32], index: 7, kind: input, shape index: {}]
  %s8 = inlined_call_operand.vmem [shape: f32[2,1,32], index: 8, kind: input, shape index: {}]
  %s9 = inlined_call_operand.vmem [shape: f32[2,1,32], index: 9, kind: input, shape index: {}]
  %s10 = inlined_call_operand.vmem [shape: f32[2,1,32], index: 10, kind: input, shape index: {}]
  %s11 = inlined_call_operand.vmem [shape: bf16[2,32,2048], index: 11, kind: input, shape index: {}]
  %s12 = inlined_call_operand.vmem [shape: f32[2,1,2048], index: 12, kind: input, shape index: {}]
  %s13 = inlined_call_operand.vmem [shape: bf16[2,2048,32], index: 13, kind: input, shape index: {}]
  %s14 = inlined_call_operand.vmem [shape: f32[2,1,32], index: 14, kind: input, shape index: {}]
  %s15 = inlined_call_operand.vmem [shape: f32[32,1], index: 15, kind: input, shape index: {}]
  %s16 = inlined_call_operand.<no memory space> [shape: f32[1,1], index: 16, kind: input, shape index: {}]
  %s17 = inlined_call_operand.vmem [shape: f32[2,1], index: 17, kind: output, shape index: {}]
  %s18 = sld [smem:[#allocation0]]
  $region109: #{forward.1} parent=0
    _
  %s20 = ssub.s32 1, %s18
  %s21 = scalar_select 0, %s20, %s18
  %v22 = vstv %s16
  %23 = vst [vmem:[#allocation3] sm:$0x1] %v22
  loop: start=0, step=1, limit=4
  $region2: #{forward.1} parent=0 // loop_pre_header
    _
  $region3: #{forward.1} parent=0 // loop_header
    %s25 = sphi 0, %s29
    %p26 = scmp.ge.s32.totalorder %s25, 4
    %s33 = sphi 0, %s33
    %s35 = sphi 0, %s33
    %s36 = sphi 0, %s35
    %s50 = sphi 0, %s36
    %s54 = sphi 0, %s54
    %s56 = sphi 0, %s54
    %s57 = sphi 0, %s56
    %s71 = sphi 0, %s57
    %s75 = sphi 0, %s75
    %s77 = sphi 0, %s75
    %s78 = sphi 0, %s77
    %s92 = sphi 0, %s78
    %s98 = sphi 0, %s100
    %s101 = sphi 0, %s98
    %s102 = sphi 0, %s101
    %s118 = sphi 0, %s102
    %s124 = sphi 0, %s126
    %s127 = sphi 0, %s124
    %s128 = sphi 0, %s127
    %s144 = sphi 0, %s128
    %s150 = sphi 0, %s152
    %s153 = sphi 0, %s150
    %s154 = sphi 0, %s153
    %s170 = sphi 0, %s154
    %s176 = sphi 0, %s178
    %s179 = sphi 0, %s176
    %s180 = sphi 0, %s179
    %s196 = sphi 0, %s180
    %s202 = sphi 0, %s204
    %s205 = sphi 0, %s202
    %s206 = sphi 0, %s205
    %s222 = sphi 0, %s206
    %s228 = sphi 0, %s230
    %s231 = sphi 0, %s228
    %s232 = sphi 0, %s231
    %s248 = sphi 0, %s232
    %s254 = sphi 0, %s256
    %s257 = sphi 0, %s254
    %s258 = sphi 0, %s257
    %s274 = sphi 0, %s258
    %s280 = sphi 0, %s282
    %s283 = sphi 0, %s280
    %s284 = sphi 0, %s283
    %s300 = sphi 0, %s284
    %s306 = sphi 0, %s308
    %s309 = sphi 0, %s306
    %s310 = sphi 0, %s309
    %s326 = sphi 0, %s310
    %s332 = sphi 0, %s334
    %s335 = sphi 0, %s332
    %s336 = sphi 0, %s335
    %s352 = sphi 0, %s336
    %s358 = sphi 0, %s360
    %s361 = sphi 0, %s358
    %s362 = sphi 0, %s361
    %s378 = sphi 0, %s362
    %s384 = sphi 0, %s386
    %s387 = sphi 0, %s384
    %s388 = sphi 0, %s387
    %s404 = sphi 0, %s388
    %s408 = sphi 0, %s408
    %s410 = sphi 0, %s408
    %s411 = sphi 0, %s410
    %s425 = sphi 0, %s411
    %s429 = sphi 0, %s429
    %s431 = sphi 0, %s429
    %s432 = sphi 0, %s431
    %s446 = sphi 0, %s432
    %s450 = sphi 0, %s450
    %s452 = sphi 0, %s450
    %s453 = sphi 0, %s452
    %s467 = sphi 0, %s453
  $region4: #{forward.1} parent=0 // loop_header_branch
    %28 = sbr.rel (%p26) target = $region8
  $region5: #{forward.1} parent=0 // loop_body
    %s30 = ssub.s32 %s25, 1
    %s31 = ssub.s32 %s25, 2
    %s32 = sadd.s32 %s25, 1
    %s34 = sadd.s32 %s33, 1
    %p37 = scmp.eq.s32.totalorder %s25, 1
    %p38 = scmp.ne.s32.totalorder %s33, %s35
    %p39 = scmp.eq.s32.totalorder %s25, 0
    %p40 = por %p38, %p39
    %p41 = scmp.ne.s32.totalorder %s33, %s35
    %p42 = scmp.eq.s32.totalorder %s30, 1
    %p43 = por %p41, %p42
    %p44 = scmp.ne.s32.totalorder %s35, %s36
    %p45 = scmp.eq.s32.totalorder %s30, 0
    %p46 = por %p44, %p45
    %p47 = scmp.ne.s32.totalorder %s35, %s36
    %p48 = scmp.eq.s32.totalorder %s31, 1
    %p49 = por %p47, %p48
    %p51 = scmp.ne.s32.totalorder %s36, %s50
    %p52 = scmp.eq.s32.totalorder %s31, 0
    %p53 = por %p51, %p52
    %s55 = sadd.s32 %s54, 1
    %p58 = scmp.eq.s32.totalorder %s25, 1
    %p59 = scmp.ne.s32.totalorder %s54, %s56
    %p60 = scmp.eq.s32.totalorder %s25, 0
    %p61 = por %p59, %p60
    %p62 = scmp.ne.s32.totalorder %s54, %s56
    %p63 = scmp.eq.s32.totalorder %s30, 1
    %p64 = por %p62, %p63
    %p65 = scmp.ne.s32.totalorder %s56, %s57
    %p66 = scmp.eq.s32.totalorder %s30, 0
    %p67 = por %p65, %p66
    %p68 = scmp.ne.s32.totalorder %s56, %s57
    %p69 = scmp.eq.s32.totalorder %s31, 1
    %p70 = por %p68, %p69
    %p72 = scmp.ne.s32.totalorder %s57, %s71
    %p73 = scmp.eq.s32.totalorder %s31, 0
    %p74 = por %p72, %p73
    %s76 = sadd.s32 %s75, 1
    %p79 = scmp.eq.s32.totalorder %s25, 1
    %p80 = scmp.ne.s32.totalorder %s75, %s77
    %p81 = scmp.eq.s32.totalorder %s25, 0
    %p82 = por %p80, %p81
    %p83 = scmp.ne.s32.totalorder %s75, %s77
    %p84 = scmp.eq.s32.totalorder %s30, 1
    %p85 = por %p83, %p84
    %p86 = scmp.ne.s32.totalorder %s77, %s78
    %p87 = scmp.eq.s32.totalorder %s30, 0
    %p88 = por %p86, %p87
    %p89 = scmp.ne.s32.totalorder %s77, %s78
    %p90 = scmp.eq.s32.totalorder %s31, 1
    %p91 = por %p89, %p90
    %p93 = scmp.ne.s32.totalorder %s78, %s92
    %p94 = scmp.eq.s32.totalorder %s31, 0
    %p95 = por %p93, %p94
    %s96 = ssub.s32 %s25, %s32
    %p97 = scmp.eq.s32.totalorder %s96, 0
    %s99 = sadd.s32 %s98, 1
    %s100 = scalar_select %p97, %s98, %s99
    %p103 = pneg %p97
    %p104 = scmp.eq.s32.totalorder %s25, 1
    %p105 = por %p103, %p104
    %p106 = scmp.ne.s32.totalorder %s98, %s101
    %p107 = scmp.eq.s32.totalorder %s25, 0
    %p108 = por %p106, %p107
    %p109 = scmp.ne.s32.totalorder %s98, %s101
    %p110 = scmp.eq.s32.totalorder %s30, 1
    %p111 = por %p109, %p110
    %p112 = scmp.ne.s32.totalorder %s101, %s102
    %p113 = scmp.eq.s32.totalorder %s30, 0
    %p114 = por %p112, %p113
    %p115 = scmp.ne.s32.totalorder %s101, %s102
    %p116 = scmp.eq.s32.totalorder %s31, 1
    %p117 = por %p115, %p116
    %p119 = scmp.ne.s32.totalorder %s102, %s118
    %p120 = scmp.eq.s32.totalorder %s31, 0
    %p121 = por %p119, %p120
    %s122 = ssub.s32 %s25, %s32
    %p123 = scmp.eq.s32.totalorder %s122, 0
    %s125 = sadd.s32 %s124, 1
    %s126 = scalar_select %p123, %s124, %s125
    %p129 = pneg %p123
    %p130 = scmp.eq.s32.totalorder %s25, 1
    %p131 = por %p129, %p130
    %p132 = scmp.ne.s32.totalorder %s124, %s127
    %p133 = scmp.eq.s32.totalorder %s25, 0
    %p134 = por %p132, %p133
    %p135 = scmp.ne.s32.totalorder %s124, %s127
    %p136 = scmp.eq.s32.totalorder %s30, 1
    %p137 = por %p135, %p136
    %p138 = scmp.ne.s32.totalorder %s127, %s128
    %p139 = scmp.eq.s32.totalorder %s30, 0
    %p140 = por %p138, %p139
    %p141 = scmp.ne.s32.totalorder %s127, %s128
    %p142 = scmp.eq.s32.totalorder %s31, 1
    %p143 = por %p141, %p142
    %p145 = scmp.ne.s32.totalorder %s128, %s144
    %p146 = scmp.eq.s32.totalorder %s31, 0
    %p147 = por %p145, %p146
    %s148 = ssub.s32 %s25, %s32
    %p149 = scmp.eq.s32.totalorder %s148, 0
    %s151 = sadd.s32 %s150, 1
    %s152 = scalar_select %p149, %s150, %s151
    %p155 = pneg %p149
    %p156 = scmp.eq.s32.totalorder %s25, 1
    %p157 = por %p155, %p156
    %p158 = scmp.ne.s32.totalorder %s150, %s153
    %p159 = scmp.eq.s32.totalorder %s25, 0
    %p160 = por %p158, %p159
    %p161 = scmp.ne.s32.totalorder %s150, %s153
    %p162 = scmp.eq.s32.totalorder %s30, 1
    %p163 = por %p161, %p162
    %p164 = scmp.ne.s32.totalorder %s153, %s154
    %p165 = scmp.eq.s32.totalorder %s30, 0
    %p166 = por %p164, %p165
    %p167 = scmp.ne.s32.totalorder %s153, %s154
    %p168 = scmp.eq.s32.totalorder %s31, 1
    %p169 = por %p167, %p168
    %p171 = scmp.ne.s32.totalorder %s154, %s170
    %p172 = scmp.eq.s32.totalorder %s31, 0
    %p173 = por %p171, %p172
    %s174 = ssub.s32 %s25, %s32
    %p175 = scmp.eq.s32.totalorder %s174, 0
    %s177 = sadd.s32 %s176, 1
    %s178 = scalar_select %p175, %s176, %s177
    %p181 = pneg %p175
    %p182 = scmp.eq.s32.totalorder %s25, 1
    %p183 = por %p181, %p182
    %p184 = scmp.ne.s32.totalorder %s176, %s179
    %p185 = scmp.eq.s32.totalorder %s25, 0
    %p186 = por %p184, %p185
    %p187 = scmp.ne.s32.totalorder %s176, %s179
    %p188 = scmp.eq.s32.totalorder %s30, 1
    %p189 = por %p187, %p188
    %p190 = scmp.ne.s32.totalorder %s179, %s180
    %p191 = scmp.eq.s32.totalorder %s30, 0
    %p192 = por %p190, %p191
    %p193 = scmp.ne.s32.totalorder %s179, %s180
    %p194 = scmp.eq.s32.totalorder %s31, 1
    %p195 = por %p193, %p194
    %p197 = scmp.ne.s32.totalorder %s180, %s196
    %p198 = scmp.eq.s32.totalorder %s31, 0
    %p199 = por %p197, %p198
    %s200 = ssub.s32 %s25, %s32
    %p201 = scmp.eq.s32.totalorder %s200, 0
    %s203 = sadd.s32 %s202, 1
    %s204 = scalar_select %p201, %s202, %s203
    %p207 = pneg %p201
    %p208 = scmp.eq.s32.totalorder %s25, 1
    %p209 = por %p207, %p208
    %p210 = scmp.ne.s32.totalorder %s202, %s205
    %p211 = scmp.eq.s32.totalorder %s25, 0
    %p212 = por %p210, %p211
    %p213 = scmp.ne.s32.totalorder %s202, %s205
    %p214 = scmp.eq.s32.totalorder %s30, 1
    %p215 = por %p213, %p214
    %p216 = scmp.ne.s32.totalorder %s205, %s206
    %p217 = scmp.eq.s32.totalorder %s30, 0
    %p218 = por %p216, %p217
    %p219 = scmp.ne.s32.totalorder %s205, %s206
    %p220 = scmp.eq.s32.totalorder %s31, 1
    %p221 = por %p219, %p220
    %p223 = scmp.ne.s32.totalorder %s206, %s222
    %p224 = scmp.eq.s32.totalorder %s31, 0
    %p225 = por %p223, %p224
    %s226 = ssub.s32 %s25, %s32
    %p227 = scmp.eq.s32.totalorder %s226, 0
    %s229 = sadd.s32 %s228, 1
    %s230 = scalar_select %p227, %s228, %s229
    %p233 = pneg %p227
    %p234 = scmp.eq.s32.totalorder %s25, 1
    %p235 = por %p233, %p234
    %p236 = scmp.ne.s32.totalorder %s228, %s231
    %p237 = scmp.eq.s32.totalorder %s25, 0
    %p238 = por %p236, %p237
    %p239 = scmp.ne.s32.totalorder %s228, %s231
    %p240 = scmp.eq.s32.totalorder %s30, 1
    %p241 = por %p239, %p240
    %p242 = scmp.ne.s32.totalorder %s231, %s232
    %p243 = scmp.eq.s32.totalorder %s30, 0
    %p244 = por %p242, %p243
    %p245 = scmp.ne.s32.totalorder %s231, %s232
    %p246 = scmp.eq.s32.totalorder %s31, 1
    %p247 = por %p245, %p246
    %p249 = scmp.ne.s32.totalorder %s232, %s248
    %p250 = scmp.eq.s32.totalorder %s31, 0
    %p251 = por %p249, %p250
    %s252 = ssub.s32 %s25, %s32
    %p253 = scmp.eq.s32.totalorder %s252, 0
    %s255 = sadd.s32 %s254, 1
    %s256 = scalar_select %p253, %s254, %s255
    %p259 = pneg %p253
    %p260 = scmp.eq.s32.totalorder %s25, 1
    %p261 = por %p259, %p260
    %p262 = scmp.ne.s32.totalorder %s254, %s257
    %p263 = scmp.eq.s32.totalorder %s25, 0
    %p264 = por %p262, %p263
    %p265 = scmp.ne.s32.totalorder %s254, %s257
    %p266 = scmp.eq.s32.totalorder %s30, 1
    %p267 = por %p265, %p266
    %p268 = scmp.ne.s32.totalorder %s257, %s258
    %p269 = scmp.eq.s32.totalorder %s30, 0
    %p270 = por %p268, %p269
    %p271 = scmp.ne.s32.totalorder %s257, %s258
    %p272 = scmp.eq.s32.totalorder %s31, 1
    %p273 = por %p271, %p272
    %p275 = scmp.ne.s32.totalorder %s258, %s274
    %p276 = scmp.eq.s32.totalorder %s31, 0
    %p277 = por %p275, %p276
    %s278 = ssub.s32 %s25, %s32
    %p279 = scmp.eq.s32.totalorder %s278, 0
    %s281 = sadd.s32 %s280, 1
    %s282 = scalar_select %p279, %s280, %s281
    %p285 = pneg %p279
    %p286 = scmp.eq.s32.totalorder %s25, 1
    %p287 = por %p285, %p286
    %p288 = scmp.ne.s32.totalorder %s280, %s283
    %p289 = scmp.eq.s32.totalorder %s25, 0
    %p290 = por %p288, %p289
    %p291 = scmp.ne.s32.totalorder %s280, %s283
    %p292 = scmp.eq.s32.totalorder %s30, 1
    %p293 = por %p291, %p292
    %p294 = scmp.ne.s32.totalorder %s283, %s284
    %p295 = scmp.eq.s32.totalorder %s30, 0
    %p296 = por %p294, %p295
    %p297 = scmp.ne.s32.totalorder %s283, %s284
    %p298 = scmp.eq.s32.totalorder %s31, 1
    %p299 = por %p297, %p298
    %p301 = scmp.ne.s32.totalorder %s284, %s300
    %p302 = scmp.eq.s32.totalorder %s31, 0
    %p303 = por %p301, %p302
    %s304 = ssub.s32 %s25, %s32
    %p305 = scmp.eq.s32.totalorder %s304, 0
    %s307 = sadd.s32 %s306, 1
    %s308 = scalar_select %p305, %s306, %s307
    %p311 = pneg %p305
    %p312 = scmp.eq.s32.totalorder %s25, 1
    %p313 = por %p311, %p312
    %p314 = scmp.ne.s32.totalorder %s306, %s309
    %p315 = scmp.eq.s32.totalorder %s25, 0
    %p316 = por %p314, %p315
    %p317 = scmp.ne.s32.totalorder %s306, %s309
    %p318 = scmp.eq.s32.totalorder %s30, 1
    %p319 = por %p317, %p318
    %p320 = scmp.ne.s32.totalorder %s309, %s310
    %p321 = scmp.eq.s32.totalorder %s30, 0
    %p322 = por %p320, %p321
    %p323 = scmp.ne.s32.totalorder %s309, %s310
    %p324 = scmp.eq.s32.totalorder %s31, 1
    %p325 = por %p323, %p324
    %p327 = scmp.ne.s32.totalorder %s310, %s326
    %p328 = scmp.eq.s32.totalorder %s31, 0
    %p329 = por %p327, %p328
    %s330 = ssub.s32 %s25, %s32
    %p331 = scmp.eq.s32.totalorder %s330, 0
    %s333 = sadd.s32 %s332, 1
    %s334 = scalar_select %p331, %s332, %s333
    %p337 = pneg %p331
    %p338 = scmp.eq.s32.totalorder %s25, 1
    %p339 = por %p337, %p338
    %p340 = scmp.ne.s32.totalorder %s332, %s335
    %p341 = scmp.eq.s32.totalorder %s25, 0
    %p342 = por %p340, %p341
    %p343 = scmp.ne.s32.totalorder %s332, %s335
    %p344 = scmp.eq.s32.totalorder %s30, 1
    %p345 = por %p343, %p344
    %p346 = scmp.ne.s32.totalorder %s335, %s336
    %p347 = scmp.eq.s32.totalorder %s30, 0
    %p348 = por %p346, %p347
    %p349 = scmp.ne.s32.totalorder %s335, %s336
    %p350 = scmp.eq.s32.totalorder %s31, 1
    %p351 = por %p349, %p350
    %p353 = scmp.ne.s32.totalorder %s336, %s352
    %p354 = scmp.eq.s32.totalorder %s31, 0
    %p355 = por %p353, %p354
    %s356 = ssub.s32 %s25, %s32
    %p357 = scmp.eq.s32.totalorder %s356, 0
    %s359 = sadd.s32 %s358, 1
    %s360 = scalar_select %p357, %s358, %s359
    %p363 = pneg %p357
    %p364 = scmp.eq.s32.totalorder %s25, 1
    %p365 = por %p363, %p364
    %p366 = scmp.ne.s32.totalorder %s358, %s361
    %p367 = scmp.eq.s32.totalorder %s25, 0
    %p368 = por %p366, %p367
    %p369 = scmp.ne.s32.totalorder %s358, %s361
    %p370 = scmp.eq.s32.totalorder %s30, 1
    %p371 = por %p369, %p370
    %p372 = scmp.ne.s32.totalorder %s361, %s362
    %p373 = scmp.eq.s32.totalorder %s30, 0
    %p374 = por %p372, %p373
    %p375 = scmp.ne.s32.totalorder %s361, %s362
    %p376 = scmp.eq.s32.totalorder %s31, 1
    %p377 = por %p375, %p376
    %p379 = scmp.ne.s32.totalorder %s362, %s378
    %p380 = scmp.eq.s32.totalorder %s31, 0
    %p381 = por %p379, %p380
    %s382 = ssub.s32 %s25, %s32
    %p383 = scmp.eq.s32.totalorder %s382, 0
    %s385 = sadd.s32 %s384, 1
    %s386 = scalar_select %p383, %s384, %s385
    %p389 = pneg %p383
    %p390 = scmp.eq.s32.totalorder %s25, 1
    %p391 = por %p389, %p390
    %p392 = scmp.ne.s32.totalorder %s384, %s387
    %p393 = scmp.eq.s32.totalorder %s25, 0
    %p394 = por %p392, %p393
    %p395 = scmp.ne.s32.totalorder %s384, %s387
    %p396 = scmp.eq.s32.totalorder %s30, 1
    %p397 = por %p395, %p396
    %p398 = scmp.ne.s32.totalorder %s387, %s388
    %p399 = scmp.eq.s32.totalorder %s30, 0
    %p400 = por %p398, %p399
    %p401 = scmp.ne.s32.totalorder %s387, %s388
    %p402 = scmp.eq.s32.totalorder %s31, 1
    %p403 = por %p401, %p402
    %p405 = scmp.ne.s32.totalorder %s388, %s404
    %p406 = scmp.eq.s32.totalorder %s31, 0
    %p407 = por %p405, %p406
    %s409 = sadd.s32 %s408, 1
    %p412 = scmp.eq.s32.totalorder %s25, 1
    %p413 = scmp.ne.s32.totalorder %s408, %s410
    %p414 = scmp.eq.s32.totalorder %s25, 0
    %p415 = por %p413, %p414
    %p416 = scmp.ne.s32.totalorder %s408, %s410
    %p417 = scmp.eq.s32.totalorder %s30, 1
    %p418 = por %p416, %p417
    %p419 = scmp.ne.s32.totalorder %s410, %s411
    %p420 = scmp.eq.s32.totalorder %s30, 0
    %p421 = por %p419, %p420
    %p422 = scmp.ne.s32.totalorder %s410, %s411
    %p423 = scmp.eq.s32.totalorder %s31, 1
    %p424 = por %p422, %p423
    %p426 = scmp.ne.s32.totalorder %s411, %s425
    %p427 = scmp.eq.s32.totalorder %s31, 0
    %p428 = por %p426, %p427
    %s430 = sadd.s32 %s429, 1
    %p433 = scmp.eq.s32.totalorder %s25, 1
    %p434 = scmp.ne.s32.totalorder %s429, %s431
    %p435 = scmp.eq.s32.totalorder %s25, 0
    %p436 = por %p434, %p435
    %p437 = scmp.ne.s32.totalorder %s429, %s431
    %p438 = scmp.eq.s32.totalorder %s30, 1
    %p439 = por %p437, %p438
    %p440 = scmp.ne.s32.totalorder %s431, %s432
    %p441 = scmp.eq.s32.totalorder %s30, 0
    %p442 = por %p440, %p441
    %p443 = scmp.ne.s32.totalorder %s431, %s432
    %p444 = scmp.eq.s32.totalorder %s31, 1
    %p445 = por %p443, %p444
    %p447 = scmp.ne.s32.totalorder %s432, %s446
    %p448 = scmp.eq.s32.totalorder %s31, 0
    %p449 = por %p447, %p448
    %s451 = sadd.s32 %s450, 1
    %p454 = scmp.eq.s32.totalorder %s25, 1
    %p455 = scmp.ne.s32.totalorder %s450, %s452
    %p456 = scmp.eq.s32.totalorder %s25, 0
    %p457 = por %p455, %p456
    %p458 = scmp.ne.s32.totalorder %s450, %s452
    %p459 = scmp.eq.s32.totalorder %s30, 1
    %p460 = por %p458, %p459
    %p461 = scmp.ne.s32.totalorder %s452, %s453
    %p462 = scmp.eq.s32.totalorder %s30, 0
    %p463 = por %p461, %p462
    %p464 = scmp.ne.s32.totalorder %s452, %s453
    %p465 = scmp.eq.s32.totalorder %s31, 1
    %p466 = por %p464, %p465
    %p468 = scmp.ne.s32.totalorder %s453, %s467
    %p469 = scmp.eq.s32.totalorder %s31, 0
    %p470 = por %p468, %p469
    %p471 = scmp.le.s32.totalorder 1, %s25
    %p472 = scmp.lt.s32.totalorder %s25, 3
    %p473 = pnand %p471, %p472
    %p474 = pneg %p473
    // Predicated region
    $region9: #{forward.1} parent=5 // pred_check
      _
    $region10: #{forward.1} parent=5 // pred_check_branch
      %476 = sbr.rel (%p473) target = $region12
    $region11: #{forward.1} parent=5 // pred_region
      %s477 = ssub.s32 %s25, 1
      // Predicated region
      $region13: #{forward.1} parent=11 // pred_check
        %p478 = pneg %p46
      $region14: #{forward.1} parent=11 // pred_check_branch
        %480 = sbr.rel (%p478) target = $region16
      $region15: #{forward.1} parent=11 // pred_region
        _
      $region16: #{forward.1} parent=11 // pred_fallthru
        _
      // Predicated region
      $region17: #{forward.1} parent=11 // pred_check
        %p481 = pneg %p67
      $region18: #{forward.1} parent=11 // pred_check_branch
        %483 = sbr.rel (%p481) target = $region20
      $region19: #{forward.1} parent=11 // pred_region
        _
      $region20: #{forward.1} parent=11 // pred_fallthru
        _
      // Predicated region
      $region21: #{forward.1} parent=11 // pred_check
        %p484 = pneg %p88
      $region22: #{forward.1} parent=11 // pred_check_branch
        %486 = sbr.rel (%p484) target = $region24
      $region23: #{forward.1} parent=11 // pred_region
        _
      $region24: #{forward.1} parent=11 // pred_fallthru
        _
      // Predicated region
      $region25: #{forward.1} parent=11 // pred_check
        %p487 = pneg %p421
      $region26: #{forward.1} parent=11 // pred_check_branch
        %489 = sbr.rel (%p487) target = $region28
      $region27: #{forward.1} parent=11 // pred_region
        _
      $region28: #{forward.1} parent=11 // pred_fallthru
        _
      // Predicated region
      $region29: #{forward.1} parent=11 // pred_check
        %p490 = pneg %p442
      $region30: #{forward.1} parent=11 // pred_check_branch
        %492 = sbr.rel (%p490) target = $region32
      $region31: #{forward.1} parent=11 // pred_region
        _
      $region32: #{forward.1} parent=11 // pred_fallthru
        _
    $region12: #{forward.1} parent=5 // pred_fallthru
      _
    %p493 = scmp.lt.s32.totalorder %s25, 2
    // Predicated region
    $region33: #{forward.1} parent=5 // pred_check
      %p494 = pneg %p493
    $region34: #{forward.1} parent=5 // pred_check_branch
      %496 = sbr.rel (%p494) target = $region36
    $region35: #{forward.1} parent=5 // pred_region
      // Predicated region
      $region37: #{forward.1} parent=35 // pred_check
        %p497 = pneg %p108
      $region38: #{forward.1} parent=35 // pred_check_branch
        %499 = sbr.rel (%p497) target = $region40
      $region39: #{forward.1} parent=35 // pred_region
        %p500 = scmp.lt.s32.totalorder %s25, 1
        %s501 = scalar_select %p500, %s25, 1
        %s502 = smul.addr %s501, 48
        %s503 = smul.addr %s502, 8
        %s504 = scalar_lea.vmem %s3, %s503
      $region40: #{forward.1} parent=35 // pred_fallthru
        _
      // Predicated region
      $region41: #{forward.1} parent=35 // pred_check
        %p505 = pneg %p134
      $region42: #{forward.1} parent=35 // pred_check_branch
        %507 = sbr.rel (%p505) target = $region44
      $region43: #{forward.1} parent=35 // pred_region
        %p508 = scmp.lt.s32.totalorder %s25, 1
        %s509 = scalar_select %p508, %s25, 1
        %s510 = smul.addr %s509, 12
        %s511 = scalar_lea.vmem %s4, %s510
      $region44: #{forward.1} parent=35 // pred_fallthru
        _
      // Predicated region
      $region45: #{forward.1} parent=35 // pred_check
        %p512 = pneg %p160
      $region46: #{forward.1} parent=35 // pred_check_branch
        %514 = sbr.rel (%p512) target = $region48
      $region47: #{forward.1} parent=35 // pred_region
        %p515 = scmp.lt.s32.totalorder %s25, 1
        %s516 = scalar_select %p515, %s25, 1
        %s517 = smul.addr %s516, 4
        %s518 = smul.addr %s517, 8
        %s519 = scalar_lea.vmem %s5, %s518
      $region48: #{forward.1} parent=35 // pred_fallthru
        _
      // Predicated region
      $region49: #{forward.1} parent=35 // pred_check
        %p520 = pneg %p186
      $region50: #{forward.1} parent=35 // pred_check_branch
        %522 = sbr.rel (%p520) target = $region52
      $region51: #{forward.1} parent=35 // pred_region
        %p523 = scmp.lt.s32.totalorder %s25, 1
        %s524 = scalar_select %p523, %s25, 1
        %s525 = scalar_lea.vmem %s6, %s524
      $region52: #{forward.1} parent=35 // pred_fallthru
        _
      // Predicated region
      $region53: #{forward.1} parent=35 // pred_check
        %p526 = pneg %p212
      $region54: #{forward.1} parent=35 // pred_check_branch
        %528 = sbr.rel (%p526) target = $region56
      $region55: #{forward.1} parent=35 // pred_region
        %p529 = scmp.lt.s32.totalorder %s25, 1
        %s530 = scalar_select %p529, %s25, 1
        %s531 = scalar_lea.vmem %s7, %s530
      $region56: #{forward.1} parent=35 // pred_fallthru
        _
      // Predicated region
      $region57: #{forward.1} parent=35 // pred_check
        %p532 = pneg %p238
      $region58: #{forward.1} parent=35 // pred_check_branch
        %534 = sbr.rel (%p532) target = $region60
      $region59: #{forward.1} parent=35 // pred_region
        %p535 = scmp.lt.s32.totalorder %s25, 1
        %s536 = scalar_select %p535, %s25, 1
        %s537 = scalar_lea.vmem %s8, %s536
      $region60: #{forward.1} parent=35 // pred_fallthru
        _
      // Predicated region
      $region61: #{forward.1} parent=35 // pred_check
        %p538 = pneg %p264
      $region62: #{forward.1} parent=35 // pred_check_branch
        %540 = sbr.rel (%p538) target = $region64
      $region63: #{forward.1} parent=35 // pred_region
        %p541 = scmp.lt.s32.totalorder %s25, 1
        %s542 = scalar_select %p541, %s25, 1
        %s543 = scalar_lea.vmem %s9, %s542
      $region64: #{forward.1} parent=35 // pred_fallthru
        _
      // Predicated region
      $region65: #{forward.1} parent=35 // pred_check
        %p544 = pneg %p290
      $region66: #{forward.1} parent=35 // pred_check_branch
        %546 = sbr.rel (%p544) target = $region68
      $region67: #{forward.1} parent=35 // pred_region
        %p547 = scmp.lt.s32.totalorder %s25, 1
        %s548 = scalar_select %p547, %s25, 1
        %s549 = scalar_lea.vmem %s10, %s548
      $region68: #{forward.1} parent=35 // pred_fallthru
        _
      // Predicated region
      $region69: #{forward.1} parent=35 // pred_check
        %p550 = pneg %p316
      $region70: #{forward.1} parent=35 // pred_check_branch
        %552 = sbr.rel (%p550) target = $region72
      $region71: #{forward.1} parent=35 // pred_region
        %p553 = scmp.lt.s32.totalorder %s25, 1
        %s554 = scalar_select %p553, %s25, 1
        %s555 = smul.addr %s554, 64
        %s556 = smul.addr %s555, 4
        %s557 = scalar_lea.vmem %s11, %s556
      $region72: #{forward.1} parent=35 // pred_fallthru
        _
      // Predicated region
      $region73: #{forward.1} parent=35 // pred_check
        %p558 = pneg %p342
      $region74: #{forward.1} parent=35 // pred_check_branch
        %560 = sbr.rel (%p558) target = $region76
      $region75: #{forward.1} parent=35 // pred_region
        %p561 = scmp.lt.s32.totalorder %s25, 1
        %s562 = scalar_select %p561, %s25, 1
        %s563 = smul.addr %s562, 16
        %s564 = scalar_lea.vmem %s12, %s563
      $region76: #{forward.1} parent=35 // pred_fallthru
        _
      // Predicated region
      $region77: #{forward.1} parent=35 // pred_check
        %p565 = pneg %p368
      $region78: #{forward.1} parent=35 // pred_check_branch
        %567 = sbr.rel (%p565) target = $region80
      $region79: #{forward.1} parent=35 // pred_region
        %p568 = scmp.lt.s32.totalorder %s25, 1
        %s569 = scalar_select %p568, %s25, 1
        %s570 = smul.addr %s569, 256
        %s571 = smul.addr %s570, 4
        %s572 = scalar_lea.vmem %s13, %s571
      $region80: #{forward.1} parent=35 // pred_fallthru
        _
      // Predicated region
      $region81: #{forward.1} parent=35 // pred_check
        %p573 = pneg %p394
      $region82: #{forward.1} parent=35 // pred_check_branch
        %575 = sbr.rel (%p573) target = $region84
      $region83: #{forward.1} parent=35 // pred_region
        %p576 = scmp.lt.s32.totalorder %s25, 1
        %s577 = scalar_select %p576, %s25, 1
        %s578 = scalar_lea.vmem %s14, %s577
      $region84: #{forward.1} parent=35 // pred_fallthru
        _
    $region36: #{forward.1} parent=5 // pred_fallthru
      _
    %p579 = scmp.le.s32.totalorder 1, %s25
    %p580 = scmp.lt.s32.totalorder %s25, 3
    %p581 = pnand %p579, %p580
    %p582 = pneg %p581
    // Predicated region
    $region85: #{forward.1} parent=5 // pred_check
      _
    $region86: #{forward.1} parent=5 // pred_check_branch
      %584 = sbr.rel (%p581) target = $region88
    $region87: #{forward.1} parent=5 // pred_region
      %s585 = ssub.s32 %s25, 1
      %p586 = pneg %p46
      %p587 = pneg %p43
      %p588 = pneg %p67
      %p589 = pneg %p64
      %p590 = pneg %p88
      %p591 = pneg %p85
      %p592 = scmp.lt.s32.totalorder %s30, 1
      %s593 = scalar_select %p592, %s30, 1
      %s594 = smul.addr %s593, 48
      %s595 = smul.addr %s594, 8
      %s596 = scalar_lea.vmem %s3, %s595
      %p597 = pneg %p114
      %p598 = pneg %p111
      %p599 = scmp.lt.s32.totalorder %s30, 1
      %s600 = scalar_select %p599, %s30, 1
      %s601 = smul.addr %s600, 12
      %s602 = scalar_lea.vmem %s4, %s601
      %p603 = pneg %p140
      %p604 = pneg %p137
      %p605 = scmp.lt.s32.totalorder %s30, 1
      %s606 = scalar_select %p605, %s30, 1
      %s607 = smul.addr %s606, 4
      %s608 = smul.addr %s607, 8
      %s609 = scalar_lea.vmem %s5, %s608
      %p610 = pneg %p166
      %p611 = pneg %p163
      %p612 = scmp.lt.s32.totalorder %s30, 1
      %s613 = scalar_select %p612, %s30, 1
      %s614 = scalar_lea.vmem %s6, %s613
      %p615 = pneg %p192
      %p616 = pneg %p189
      %p617 = scmp.lt.s32.totalorder %s30, 1
      %s618 = scalar_select %p617, %s30, 1
      %s619 = scalar_lea.vmem %s7, %s618
      %p620 = pneg %p218
      %p621 = pneg %p215
      %p622 = scmp.lt.s32.totalorder %s30, 1
      %s623 = scalar_select %p622, %s30, 1
      %s624 = scalar_lea.vmem %s8, %s623
      %p625 = pneg %p244
      %p626 = pneg %p241
      %p627 = scmp.lt.s32.totalorder %s30, 1
      %s628 = scalar_select %p627, %s30, 1
      %s629 = scalar_lea.vmem %s9, %s628
      %p630 = pneg %p270
      %p631 = pneg %p267
      %p632 = scmp.lt.s32.totalorder %s30, 1
      %s633 = scalar_select %p632, %s30, 1
      %s634 = scalar_lea.vmem %s10, %s633
      %p635 = pneg %p296
      %p636 = pneg %p293
      %p637 = scmp.lt.s32.totalorder %s30, 1
      %s638 = scalar_select %p637, %s30, 1
      %s639 = smul.addr %s638, 64
      %s640 = smul.addr %s639, 4
      %s641 = scalar_lea.vmem %s11, %s640
      %p642 = pneg %p322
      %p643 = pneg %p319
      %p644 = scmp.lt.s32.totalorder %s30, 1
      %s645 = scalar_select %p644, %s30, 1
      %s646 = smul.addr %s645, 16
      %s647 = scalar_lea.vmem %s12, %s646
      %p648 = pneg %p348
      %p649 = pneg %p345
      %p650 = scmp.lt.s32.totalorder %s30, 1
      %s651 = scalar_select %p650, %s30, 1
      %s652 = smul.addr %s651, 256
      %s653 = smul.addr %s652, 4
      %s654 = scalar_lea.vmem %s13, %s653
      %p655 = pneg %p374
      %p656 = pneg %p371
      %p657 = scmp.lt.s32.totalorder %s30, 1
      %s658 = scalar_select %p657, %s30, 1
      %s659 = scalar_lea.vmem %s14, %s658
      %p660 = pneg %p400
      %p661 = pneg %p397
      %p662 = pneg %p421
      %p663 = pneg %p418
      %p664 = pneg %p442
      %p665 = pneg %p439
      %p666 = pneg %p463
      %p667 = pneg %p460
      %p668 = scmp.lt.s32.totalorder %s30, 1
      %s669 = scalar_select %p668, %s30, 1
      %s670 = smul.addr %s669, 48
      %s671 = smul.addr %s670, 8
      %s672 = scalar_lea.vmem %s3, %s671
      %p673 = scmp.lt.s32.totalorder %s30, 1
      %s674 = scalar_select %p673, %s30, 1
      %s675 = smul.addr %s674, 12
      %s676 = scalar_lea.vmem %s4, %s675
      %p677 = scmp.lt.s32.totalorder %s30, 1
      %s678 = scalar_select %p677, %s30, 1
      %s679 = smul.addr %s678, 4
      %s680 = smul.addr %s679, 8
      %s681 = scalar_lea.vmem %s5, %s680
      %p682 = scmp.lt.s32.totalorder %s30, 1
      %s683 = scalar_select %p682, %s30, 1
      %s684 = scalar_lea.vmem %s6, %s683
      %p685 = scmp.lt.s32.totalorder %s30, 1
      %s686 = scalar_select %p685, %s30, 1
      %s687 = scalar_lea.vmem %s7, %s686
      %p688 = scmp.lt.s32.totalorder %s30, 1
      %s689 = scalar_select %p688, %s30, 1
      %s690 = scalar_lea.vmem %s8, %s689
      %p691 = scmp.lt.s32.totalorder %s30, 1
      %s692 = scalar_select %p691, %s30, 1
      %s693 = scalar_lea.vmem %s9, %s692
      %p694 = scmp.lt.s32.totalorder %s30, 1
      %s695 = scalar_select %p694, %s30, 1
      %s696 = scalar_lea.vmem %s10, %s695
      %p697 = scmp.lt.s32.totalorder %s30, 1
      %s698 = scalar_select %p697, %s30, 1
      %s699 = smul.addr %s698, 64
      %s700 = smul.addr %s699, 4
      %s701 = scalar_lea.vmem %s11, %s700
      %p702 = scmp.lt.s32.totalorder %s30, 1
      %s703 = scalar_select %p702, %s30, 1
      %s704 = smul.addr %s703, 16
      %s705 = scalar_lea.vmem %s12, %s704
      %p706 = scmp.lt.s32.totalorder %s30, 1
      %s707 = scalar_select %p706, %s30, 1
      %s708 = smul.addr %s707, 256
      %s709 = smul.addr %s708, 4
      %s710 = scalar_lea.vmem %s13, %s709
      %p711 = scmp.lt.s32.totalorder %s30, 1
      %s712 = scalar_select %p711, %s30, 1
      %s713 = scalar_lea.vmem %s14, %s712
      %p715 = scmp.eq.s32.totalorder %s30, 0
      // Predicated region
      $region89: #{forward.1} parent=87 // pred_check
        %p716 = pneg %p715
      $region90: #{forward.1} parent=87 // pred_check_branch
        %718 = sbr.rel (%p716) target = $region92
      $region91: #{forward.1} parent=87 // pred_region
        %v719 = vld [vmem:[%s0] sm:$0xff]
        %721 = vrot.lane.b32.xlu0 %v719, 112
        %v722 = vpop.permute.xlu0 %721
        %v723 = vld [vmem:[%s1] sm:$0xff]
        %v724 = vld [vmem:[%s1 + $0x8] sm:$0xff]
        %v725 = vld [vmem:[%s2] sm:$0x1]
        %v727 = vperm.slane %v725, 0
        %vm729 = vcmask 130048
        %v730 = vsel %vm729, %v719, 0
        %v732 = vsel %vm729, %v722, 0
        %734 = vmatpush.msra.mxu0 0.0
        %735 = vmatpush.msra.mxu0 0.0
        %736 = vmatpush.msra.mxu0 0.0
        %737 = vmatpush.msra.mxu0 0.0
        %738 = vmatpush.msra.mxu0 0.0
        %739 = vmatpush.msra.mxu0 0.0
        %740 = vmatpush.msra.mxu0 0.0
        %741 = vmatpush.msra.mxu0 0.0
        %742 = vmatpush.msra.mxu0 0.0
        %743 = vmatpush.msra.mxu0 0.0
        %744 = vmatpush.msra.mxu0 0.0
        %745 = vmatpush.msra.mxu0 0.0
        %746 = vmatpush.msra.mxu0 0.0
        %747 = vmatpush.msra.mxu0 0.0
        %748 = vmatpush.msra.mxu0 %v724
        %749 = vmatpush.msra.mxu0 %v723
        %750 = vmatmul.f32.gmra.mxu0 %v730
        %v751 = vpop.f32.mrf.mxu0
        %v752 = vadd.f32 %v727, %v751
        %753 = vmatmul.f32.gmra.mxu0 %v732
        %v754 = vpop.f32.mrf.mxu0
        %v755 = vadd.f32 %v727, %v754
        %756 = vdwg.mxu0
        %vm757 = vcmask 261120
        %758 = vst.msk [vmem:[#allocation2] sm:$0xff] %vm757, %v752
        %759 = vst.msk [vmem:[#allocation2 + $0x8] sm:$0xff] %vm757, %v755
      $region92: #{forward.1} parent=87 // pred_fallthru
        _
      %v760 = vld [vmem:[#allocation2] sm:$0xff]
      %v761 = vld [vmem:[#allocation2 + $0x8] sm:$0xff]
      %v762 = vld [vmem:[%s672] sm:$0xff]
      %v763 = vld [vmem:[%s672 + $0x8] sm:$0xff]
      %v764 = vld [vmem:[%s672 + $0x10] sm:$0xff]
      %v765 = vld [vmem:[%s672 + $0x18] sm:$0xff]
      %v766 = vld [vmem:[%s676] sm:$0x1]
      %v768 = vperm.slane %v766, 0
      %vm770 = vcmask 261120
      %v772 = vsel %vm770, %v760, 0
      %v775 = vsel %vm770, %v761, 0
      %777 = vmatpush.msra.mxu0 0.0
      %778 = vmatpush.msra.mxu0 0.0
      %779 = vmatpush.msra.mxu0 0.0
      %780 = vmatpush.msra.mxu0 0.0
      %781 = vmatpush.msra.mxu0 0.0
      %782 = vmatpush.msra.mxu0 0.0
      %783 = vmatpush.msra.mxu0 0.0
      %784 = vmatpush.msra.mxu0 0.0
      %785 = vmatpush.msra.mxu0 0.0
      %786 = vmatpush.msra.mxu0 0.0
      %787 = vmatpush.msra.mxu0 0.0
      %788 = vmatpush.msra.mxu0 0.0
      %789 = vmatpush.msra.mxu0 %v765
      %790 = vmatpush.msra.mxu0 %v764
      %791 = vmatpush.msra.mxu0 %v763
      %792 = vmatpush.msra.mxu0 %v762
      %793 = vmatmul.f32.gmra.mxu0 %v772
      %v794 = vpop.f32.mrf.mxu0
      %v795 = vadd.f32 %v768, %v794
      %796 = vmatmul.f32.gmra.mxu0 %v775
      %v797 = vpop.f32.mrf.mxu0
      %v798 = vadd.f32 %v768, %v797
      %799 = vdwg.mxu0
      %s800 = scalar_lea.vmem %s672, 128
      %v801 = vld [vmem:[%s800] sm:$0xff]
      %v802 = vld [vmem:[%s800 + $0x8] sm:$0xff]
      %v803 = vld [vmem:[%s800 + $0x10] sm:$0xff]
      %v804 = vld [vmem:[%s800 + $0x18] sm:$0xff]
      %s805 = scalar_lea.vmem %s676, 4
      %v806 = vld [vmem:[%s805] sm:$0x1]
      %v808 = vperm.slane %v806, 0
      %810 = vmatpush.msra.mxu0 0.0
      %811 = vmatpush.msra.mxu0 0.0
      %812 = vmatpush.msra.mxu0 0.0
      %813 = vmatpush.msra.mxu0 0.0
      %814 = vmatpush.msra.mxu0 0.0
      %815 = vmatpush.msra.mxu0 0.0
      %816 = vmatpush.msra.mxu0 0.0
      %817 = vmatpush.msra.mxu0 0.0
      %818 = vmatpush.msra.mxu0 0.0
      %819 = vmatpush.msra.mxu0 0.0
      %820 = vmatpush.msra.mxu0 0.0
      %821 = vmatpush.msra.mxu0 0.0
      %822 = vmatpush.msra.mxu0 %v804
      %823 = vmatpush.msra.mxu0 %v803
      %824 = vmatpush.msra.mxu0 %v802
      %825 = vmatpush.msra.mxu0 %v801
      %826 = vmatmul.f32.gmra.mxu0 %v772
      %v827 = vpop.f32.mrf.mxu0
      %v828 = vadd.f32 %v808, %v827
      %829 = vmatmul.f32.gmra.mxu0 %v775
      %v830 = vpop.f32.mrf.mxu0
      %v831 = vadd.f32 %v808, %v830
      %832 = vdwg.mxu0
      %s833 = scalar_lea.vmem %s672, 256
      %v834 = vld [vmem:[%s833] sm:$0xff]
      %v835 = vld [vmem:[%s833 + $0x8] sm:$0xff]
      %v836 = vld [vmem:[%s833 + $0x10] sm:$0xff]
      %v837 = vld [vmem:[%s833 + $0x18] sm:$0xff]
      %s838 = scalar_lea.vmem %s676, 8
      %v839 = vld [vmem:[%s838] sm:$0x1]
      %v841 = vperm.slane %v839, 0
      %843 = vmatpush.msra.mxu0 0.0
      %844 = vmatpush.msra.mxu0 0.0
      %845 = vmatpush.msra.mxu0 0.0
      %846 = vmatpush.msra.mxu0 0.0
      %847 = vmatpush.msra.mxu0 0.0
      %848 = vmatpush.msra.mxu0 0.0
      %849 = vmatpush.msra.mxu0 0.0
      %850 = vmatpush.msra.mxu0 0.0
      %851 = vmatpush.msra.mxu0 0.0
      %852 = vmatpush.msra.mxu0 0.0
      %853 = vmatpush.msra.mxu0 0.0
      %854 = vmatpush.msra.mxu0 0.0
      %855 = vmatpush.msra.mxu0 %v837
      %856 = vmatpush.msra.mxu0 %v836
      %857 = vmatpush.msra.mxu0 %v835
      %858 = vmatpush.msra.mxu0 %v834
      %859 = vmatmul.f32.gmra.mxu0 %v772
      %v860 = vpop.f32.mrf.mxu0
      %v861 = vadd.f32 %v841, %v860
      %862 = vmatmul.f32.gmra.mxu0 %v775
      %v863 = vpop.f32.mrf.mxu0
      %v864 = vadd.f32 %v841, %v863
      %865 = vdwg.mxu0
      %vm866 = vcmask 64512
      %v868 = vsel %vm866, %v795, 0
      %v871 = vsel %vm866, %v828, 0
      %873 = vmatpush.xpose.msra.mxu0 0.0
      %874 = vmatpush.xpose.msra.mxu0 0.0
      %875 = vmatpush.xpose.msra.mxu0 0.0
      %876 = vmatpush.xpose.msra.mxu0 0.0
      %877 = vmatpush.xpose.msra.mxu0 0.0
      %878 = vmatpush.xpose.msra.mxu0 0.0
      %879 = vmatpush.xpose.msra.mxu0 0.0
      %880 = vmatpush.xpose.msra.mxu0 0.0
      %881 = vmatpush.xpose.msra.mxu0 0.0
      %882 = vmatpush.xpose.msra.mxu0 0.0
      %883 = vmatpush.xpose.msra.mxu0 0.0
      %884 = vmatpush.xpose.msra.mxu0 0.0
      %885 = vmatpush.xpose.msra.mxu0 0.0
      %886 = vmatpush.xpose.msra.mxu0 0.0
      %887 = vmatpush.xpose.msra.mxu0 0.0
      %888 = vmatpush.xpose.msra.mxu0 %v871
      %889 = vmatmul.f32.gmra.mxu0 %v868
      %v890 = vpop.f32.mrf.mxu0
      %v891 = vadd.f32 0.0, %v890
      %892 = vdwg.mxu0
      %v894 = vsel %vm866, %v798, 0
      %v897 = vsel %vm866, %v831, 0
      %899 = vmatpush.xpose.msra.mxu0 0.0
      %900 = vmatpush.xpose.msra.mxu0 0.0
      %901 = vmatpush.xpose.msra.mxu0 0.0
      %902 = vmatpush.xpose.msra.mxu0 0.0
      %903 = vmatpush.xpose.msra.mxu0 0.0
      %904 = vmatpush.xpose.msra.mxu0 0.0
      %905 = vmatpush.xpose.msra.mxu0 0.0
      %906 = vmatpush.xpose.msra.mxu0 0.0
      %907 = vmatpush.xpose.msra.mxu0 0.0
      %908 = vmatpush.xpose.msra.mxu0 0.0
      %909 = vmatpush.xpose.msra.mxu0 0.0
      %910 = vmatpush.xpose.msra.mxu0 0.0
      %911 = vmatpush.xpose.msra.mxu0 0.0
      %912 = vmatpush.xpose.msra.mxu0 0.0
      %913 = vmatpush.xpose.msra.mxu0 0.0
      %914 = vmatpush.xpose.msra.mxu0 %v897
      %915 = vmatmul.f32.gmra.mxu0 %v894
      %v916 = vpop.f32.mrf.mxu0
      %v917 = vadd.f32 0.0, %v916
      %918 = vdwg.mxu0
      %v919 = vmul.f32 %v891, 0.35355338
      %v920 = vmul.f32 %v917, 0.35355338
      %v921 = vsel %vm866, %v919, -inf
      %922 = vmax.xlane.f32.xlu0 %v921
      %v923 = vpop.xlane.xlu0 %922
      %v924 = vsel %vm866, %v920, -inf
      %925 = vmax.xlane.f32.xlu0 %v924
      %v926 = vpop.xlane.xlu0 %925
      %v927 = vsub.f32 %v919, %v923
      %v928 = vsub.f32 %v920, %v926
      %v929 = vmul.f32 %v927, 1.442695
      %v930 = vpow.pop %v929
      %v931 = vmul.f32 %v928, 1.442695
      %v932 = vpow.pop %v931
      %v933 = vsel %vm866, %v930, 0.0
      %934 = vadd.xlane.f32.xlu0 %v933
      %v935 = vpop.xlane.xlu0 %934
      %v936 = vsel %vm866, %v932, 0.0
      %937 = vadd.xlane.f32.xlu0 %v936
      %v938 = vpop.xlane.xlu0 %937
      %v939 = vrcp.pop %v935
      %v940 = vrcp.pop %v938
      %v941 = vmul.f32 %v930, %v939
      %v942 = vmul.f32 %v932, %v940
      %v944 = vsel %vm866, %v941, 0
      %946 = vmatpush.msra.mxu0 0.0
      %947 = vmatpush.msra.mxu0 0.0
      %948 = vmatpush.msra.mxu0 0.0
      %949 = vmatpush.msra.mxu0 0.0
      %950 = vmatpush.msra.mxu0 0.0
      %951 = vmatpush.msra.mxu0 0.0
      %952 = vmatpush.msra.mxu0 0.0
      %953 = vmatpush.msra.mxu0 0.0
      %954 = vmatpush.msra.mxu0 0.0
      %955 = vmatpush.msra.mxu0 0.0
      %956 = vmatpush.msra.mxu0 0.0
      %957 = vmatpush.msra.mxu0 0.0
      %958 = vmatpush.msra.mxu0 0.0
      %959 = vmatpush.msra.mxu0 0.0
      %960 = vmatpush.msra.mxu0 0.0
      %961 = vmatpush.msra.mxu0 %v861
      %962 = vmatmul.f32.gmra.mxu0 %v944
      %v963 = vpop.f32.mrf.mxu0
      %v964 = vadd.f32 0.0, %v963
      %965 = vdwg.mxu0
      %v967 = vsel %vm866, %v942, 0
      %969 = vmatpush.msra.mxu0 0.0
      %970 = vmatpush.msra.mxu0 0.0
      %971 = vmatpush.msra.mxu0 0.0
      %972 = vmatpush.msra.mxu0 0.0
      %973 = vmatpush.msra.mxu0 0.0
      %974 = vmatpush.msra.mxu0 0.0
      %975 = vmatpush.msra.mxu0 0.0
      %976 = vmatpush.msra.mxu0 0.0
      %977 = vmatpush.msra.mxu0 0.0
      %978 = vmatpush.msra.mxu0 0.0
      %979 = vmatpush.msra.mxu0 0.0
      %980 = vmatpush.msra.mxu0 0.0
      %981 = vmatpush.msra.mxu0 0.0
      %982 = vmatpush.msra.mxu0 0.0
      %983 = vmatpush.msra.mxu0 0.0
      %984 = vmatpush.msra.mxu0 %v864
      %985 = vmatmul.f32.gmra.mxu0 %v967
      %v986 = vpop.f32.mrf.mxu0
      %v987 = vadd.f32 0.0, %v986
      %988 = vdwg.mxu0
      %v989 = vld [vmem:[%s681] sm:$0xff]
      %s990 = scalar_lea.vmem %s672, 32
      %v991 = vld [vmem:[%s990] sm:$0xff]
      %v992 = vld [vmem:[%s990 + $0x8] sm:$0xff]
      %v993 = vld [vmem:[%s990 + $0x10] sm:$0xff]
      %v994 = vld [vmem:[%s990 + $0x18] sm:$0xff]
      %s995 = scalar_lea.vmem %s676, 1
      %v996 = vld [vmem:[%s995] sm:$0x1]
      %v998 = vperm.slane %v996, 0
      %1000 = vmatpush.msra.mxu0 0.0
      %1001 = vmatpush.msra.mxu0 0.0
      %1002 = vmatpush.msra.mxu0 0.0
      %1003 = vmatpush.msra.mxu0 0.0
      %1004 = vmatpush.msra.mxu0 0.0
      %1005 = vmatpush.msra.mxu0 0.0
      %1006 = vmatpush.msra.mxu0 0.0
      %1007 = vmatpush.msra.mxu0 0.0
      %1008 = vmatpush.msra.mxu0 0.0
      %1009 = vmatpush.msra.mxu0 0.0
      %1010 = vmatpush.msra.mxu0 0.0
      %1011 = vmatpush.msra.mxu0 0.0
      %1012 = vmatpush.msra.mxu0 %v994
      %1013 = vmatpush.msra.mxu0 %v993
      %1014 = vmatpush.msra.mxu0 %v992
      %1015 = vmatpush.msra.mxu0 %v991
      %1016 = vmatmul.f32.gmra.mxu0 %v772
      %v1017 = vpop.f32.mrf.mxu0
      %v1018 = vadd.f32 %v998, %v1017
      %1019 = vmatmul.f32.gmra.mxu0 %v775
      %v1020 = vpop.f32.mrf.mxu0
      %v1021 = vadd.f32 %v998, %v1020
      %1022 = vdwg.mxu0
      %s1023 = scalar_lea.vmem %s672, 160
      %v1024 = vld [vmem:[%s1023] sm:$0xff]
      %v1025 = vld [vmem:[%s1023 + $0x8] sm:$0xff]
      %v1026 = vld [vmem:[%s1023 + $0x10] sm:$0xff]
      %v1027 = vld [vmem:[%s1023 + $0x18] sm:$0xff]
      %s1028 = scalar_lea.vmem %s676, 5
      %v1029 = vld [vmem:[%s1028] sm:$0x1]
      %v1031 = vperm.slane %v1029, 0
      %1033 = vmatpush.msra.mxu0 0.0
      %1034 = vmatpush.msra.mxu0 0.0
      %1035 = vmatpush.msra.mxu0 0.0
      %1036 = vmatpush.msra.mxu0 0.0
      %1037 = vmatpush.msra.mxu0 0.0
      %1038 = vmatpush.msra.mxu0 0.0
      %1039 = vmatpush.msra.mxu0 0.0
      %1040 = vmatpush.msra.mxu0 0.0
      %1041 = vmatpush.msra.mxu0 0.0
      %1042 = vmatpush.msra.mxu0 0.0
      %1043 = vmatpush.msra.mxu0 0.0
      %1044 = vmatpush.msra.mxu0 0.0
      %1045 = vmatpush.msra.mxu0 %v1027
      %1046 = vmatpush.msra.mxu0 %v1026
      %1047 = vmatpush.msra.mxu0 %v1025
      %1048 = vmatpush.msra.mxu0 %v1024
      %1049 = vmatmul.f32.gmra.mxu0 %v772
      %v1050 = vpop.f32.mrf.mxu0
      %v1051 = vadd.f32 %v1031, %v1050
      %1052 = vmatmul.f32.gmra.mxu0 %v775
      %v1053 = vpop.f32.mrf.mxu0
      %v1054 = vadd.f32 %v1031, %v1053
      %1055 = vdwg.mxu0
      %s1056 = scalar_lea.vmem %s672, 288
      %v1057 = vld [vmem:[%s1056] sm:$0xff]
      %v1058 = vld [vmem:[%s1056 + $0x8] sm:$0xff]
      %v1059 = vld [vmem:[%s1056 + $0x10] sm:$0xff]
      %v1060 = vld [vmem:[%s1056 + $0x18] sm:$0xff]
      %s1061 = scalar_lea.vmem %s676, 9
      %v1062 = vld [vmem:[%s1061] sm:$0x1]
      %v1064 = vperm.slane %v1062, 0
      %1066 = vmatpush.msra.mxu0 0.0
      %1067 = vmatpush.msra.mxu0 0.0
      %1068 = vmatpush.msra.mxu0 0.0
      %1069 = vmatpush.msra.mxu0 0.0
      %1070 = vmatpush.msra.mxu0 0.0
      %1071 = vmatpush.msra.mxu0 0.0
      %1072 = vmatpush.msra.mxu0 0.0
      %1073 = vmatpush.msra.mxu0 0.0
      %1074 = vmatpush.msra.mxu0 0.0
      %1075 = vmatpush.msra.mxu0 0.0
      %1076 = vmatpush.msra.mxu0 0.0
      %1077 = vmatpush.msra.mxu0 0.0
      %1078 = vmatpush.msra.mxu0 %v1060
      %1079 = vmatpush.msra.mxu0 %v1059
      %1080 = vmatpush.msra.mxu0 %v1058
      %1081 = vmatpush.msra.mxu0 %v1057
      %1082 = vmatmul.f32.gmra.mxu0 %v772
      %v1083 = vpop.f32.mrf.mxu0
      %v1084 = vadd.f32 %v1064, %v1083
      %1085 = vmatmul.f32.gmra.mxu0 %v775
      %v1086 = vpop.f32.mrf.mxu0
      %v1087 = vadd.f32 %v1064, %v1086
      %1088 = vdwg.mxu0
      %v1090 = vsel %vm866, %v1018, 0
      %v1093 = vsel %vm866, %v1051, 0
      %1095 = vmatpush.xpose.msra.mxu0 0.0
      %1096 = vmatpush.xpose.msra.mxu0 0.0
      %1097 = vmatpush.xpose.msra.mxu0 0.0
      %1098 = vmatpush.xpose.msra.mxu0 0.0
      %1099 = vmatpush.xpose.msra.mxu0 0.0
      %1100 = vmatpush.xpose.msra.mxu0 0.0
      %1101 = vmatpush.xpose.msra.mxu0 0.0
      %1102 = vmatpush.xpose.msra.mxu0 0.0
      %1103 = vmatpush.xpose.msra.mxu0 0.0
      %1104 = vmatpush.xpose.msra.mxu0 0.0
      %1105 = vmatpush.xpose.msra.mxu0 0.0
      %1106 = vmatpush.xpose.msra.mxu0 0.0
      %1107 = vmatpush.xpose.msra.mxu0 0.0
      %1108 = vmatpush.xpose.msra.mxu0 0.0
      %1109 = vmatpush.xpose.msra.mxu0 0.0
      %1110 = vmatpush.xpose.msra.mxu0 %v1093
      %1111 = vmatmul.f32.gmra.mxu0 %v1090
      %v1112 = vpop.f32.mrf.mxu0
      %v1113 = vadd.f32 0.0, %v1112
      %1114 = vdwg.mxu0
      %v1116 = vsel %vm866, %v1021, 0
      %v1119 = vsel %vm866, %v1054, 0
      %1121 = vmatpush.xpose.msra.mxu0 0.0
      %1122 = vmatpush.xpose.msra.mxu0 0.0
      %1123 = vmatpush.xpose.msra.mxu0 0.0
      %1124 = vmatpush.xpose.msra.mxu0 0.0
      %1125 = vmatpush.xpose.msra.mxu0 0.0
      %1126 = vmatpush.xpose.msra.mxu0 0.0
      %1127 = vmatpush.xpose.msra.mxu0 0.0
      %1128 = vmatpush.xpose.msra.mxu0 0.0
      %1129 = vmatpush.xpose.msra.mxu0 0.0
      %1130 = vmatpush.xpose.msra.mxu0 0.0
      %1131 = vmatpush.xpose.msra.mxu0 0.0
      %1132 = vmatpush.xpose.msra.mxu0 0.0
      %1133 = vmatpush.xpose.msra.mxu0 0.0
      %1134 = vmatpush.xpose.msra.mxu0 0.0
      %1135 = vmatpush.xpose.msra.mxu0 0.0
      %1136 = vmatpush.xpose.msra.mxu0 %v1119
      %1137 = vmatmul.f32.gmra.mxu0 %v1116
      %v1138 = vpop.f32.mrf.mxu0
      %v1139 = vadd.f32 0.0, %v1138
      %1140 = vdwg.mxu0
      %v1141 = vmul.f32 %v1113, 0.35355338
      %v1142 = vmul.f32 %v1139, 0.35355338
      %v1143 = vsel %vm866, %v1141, -inf
      %1144 = vmax.xlane.f32.xlu0 %v1143
      %v1145 = vpop.xlane.xlu0 %1144
      %v1146 = vsel %vm866, %v1142, -inf
      %1147 = vmax.xlane.f32.xlu0 %v1146
      %v1148 = vpop.xlane.xlu0 %1147
      %v1149 = vsub.f32 %v1141, %v1145
      %v1150 = vsub.f32 %v1142, %v1148
      %v1151 = vmul.f32 %v1149, 1.442695
      %v1152 = vpow.pop %v1151
      %v1153 = vmul.f32 %v1150, 1.442695
      %v1154 = vpow.pop %v1153
      %v1155 = vsel %vm866, %v1152, 0.0
      %1156 = vadd.xlane.f32.xlu0 %v1155
      %v1157 = vpop.xlane.xlu0 %1156
      %v1158 = vsel %vm866, %v1154, 0.0
      %1159 = vadd.xlane.f32.xlu0 %v1158
      %v1160 = vpop.xlane.xlu0 %1159
      %v1161 = vrcp.pop %v1157
      %v1162 = vrcp.pop %v1160
      %v1163 = vmul.f32 %v1152, %v1161
      %v1164 = vmul.f32 %v1154, %v1162
      %v1166 = vsel %vm866, %v1163, 0
      %1168 = vmatpush.msra.mxu0 0.0
      %1169 = vmatpush.msra.mxu0 0.0
      %1170 = vmatpush.msra.mxu0 0.0
      %1171 = vmatpush.msra.mxu0 0.0
      %1172 = vmatpush.msra.mxu0 0.0
      %1173 = vmatpush.msra.mxu0 0.0
      %1174 = vmatpush.msra.mxu0 0.0
      %1175 = vmatpush.msra.mxu0 0.0
      %1176 = vmatpush.msra.mxu0 0.0
      %1177 = vmatpush.msra.mxu0 0.0
      %1178 = vmatpush.msra.mxu0 0.0
      %1179 = vmatpush.msra.mxu0 0.0
      %1180 = vmatpush.msra.mxu0 0.0
      %1181 = vmatpush.msra.mxu0 0.0
      %1182 = vmatpush.msra.mxu0 0.0
      %1183 = vmatpush.msra.mxu0 %v1084
      %1184 = vmatmul.f32.gmra.mxu0 %v1166
      %v1185 = vpop.f32.mrf.mxu0
      %v1186 = vadd.f32 0.0, %v1185
      %1187 = vdwg.mxu0
      %v1189 = vsel %vm866, %v1164, 0
      %1191 = vmatpush.msra.mxu0 0.0
      %1192 = vmatpush.msra.mxu0 0.0
      %1193 = vmatpush.msra.mxu0 0.0
      %1194 = vmatpush.msra.mxu0 0.0
      %1195 = vmatpush.msra.mxu0 0.0
      %1196 = vmatpush.msra.mxu0 0.0
      %1197 = vmatpush.msra.mxu0 0.0
      %1198 = vmatpush.msra.mxu0 0.0
      %1199 = vmatpush.msra.mxu0 0.0
      %1200 = vmatpush.msra.mxu0 0.0
      %1201 = vmatpush.msra.mxu0 0.0
      %1202 = vmatpush.msra.mxu0 0.0
      %1203 = vmatpush.msra.mxu0 0.0
      %1204 = vmatpush.msra.mxu0 0.0
      %1205 = vmatpush.msra.mxu0 0.0
      %1206 = vmatpush.msra.mxu0 %v1087
      %1207 = vmatmul.f32.gmra.mxu0 %v1189
      %v1208 = vpop.f32.mrf.mxu0
      %v1209 = vadd.f32 0.0, %v1208
      %1210 = vdwg.mxu0
      %s1211 = scalar_lea.vmem %s681, 8
      %v1212 = vld [vmem:[%s1211] sm:$0xff]
      %v1214 = vsel %vm866, %v1186, 0
      %v1217 = vsel %vm866, %v1209, 0
      %1219 = vmatpush.msra.mxu0 0.0
      %1220 = vmatpush.msra.mxu0 0.0
      %1221 = vmatpush.msra.mxu0 0.0
      %1222 = vmatpush.msra.mxu0 0.0
      %1223 = vmatpush.msra.mxu0 0.0
      %1224 = vmatpush.msra.mxu0 0.0
      %1225 = vmatpush.msra.mxu0 0.0
      %1226 = vmatpush.msra.mxu0 0.0
      %1227 = vmatpush.msra.mxu0 0.0
      %1228 = vmatpush.msra.mxu0 0.0
      %1229 = vmatpush.msra.mxu0 0.0
      %1230 = vmatpush.msra.mxu0 0.0
      %1231 = vmatpush.msra.mxu0 0.0
      %1232 = vmatpush.msra.mxu0 0.0
      %1233 = vmatpush.msra.mxu0 0.0
      %1234 = vmatpush.msra.mxu0 %v1212
      %1235 = vmatmul.f32.gmra.mxu0 %v1214
      %v1236 = vpop.f32.mrf.mxu0
      %v1237 = vadd.f32 0.0, %v1236
      %1238 = vmatmul.f32.gmra.mxu0 %v1217
      %v1239 = vpop.f32.mrf.mxu0
      %v1240 = vadd.f32 0.0, %v1239
      %1241 = vdwg.mxu0
      %v1243 = vsel %vm866, %v964, 0
      %v1246 = vsel %vm866, %v987, 0
      %1248 = vmatpush.msra.mxu0 0.0
      %1249 = vmatpush.msra.mxu0 0.0
      %1250 = vmatpush.msra.mxu0 0.0
      %1251 = vmatpush.msra.mxu0 0.0
      %1252 = vmatpush.msra.mxu0 0.0
      %1253 = vmatpush.msra.mxu0 0.0
      %1254 = vmatpush.msra.mxu0 0.0
      %1255 = vmatpush.msra.mxu0 0.0
      %1256 = vmatpush.msra.mxu0 0.0
      %1257 = vmatpush.msra.mxu0 0.0
      %1258 = vmatpush.msra.mxu0 0.0
      %1259 = vmatpush.msra.mxu0 0.0
      %1260 = vmatpush.msra.mxu0 0.0
      %1261 = vmatpush.msra.mxu0 0.0
      %1262 = vmatpush.msra.mxu0 0.0
      %1263 = vmatpush.msra.mxu0 %v989
      %1264 = vmatmul.f32.gmra.mxu0 %v1243
      %v1265 = vpop.f32.mrf.mxu0
      %v1266 = vadd.f32 %v1237, %v1265
      %1267 = vmatmul.f32.gmra.mxu0 %v1246
      %v1268 = vpop.f32.mrf.mxu0
      %v1269 = vadd.f32 %v1240, %v1268
      %1270 = vdwg.mxu0
      %s1271 = scalar_lea.vmem %s672, 64
      %v1272 = vld [vmem:[%s1271] sm:$0xff]
      %v1273 = vld [vmem:[%s1271 + $0x8] sm:$0xff]
      %v1274 = vld [vmem:[%s1271 + $0x10] sm:$0xff]
      %v1275 = vld [vmem:[%s1271 + $0x18] sm:$0xff]
      %s1276 = scalar_lea.vmem %s676, 2
      %v1277 = vld [vmem:[%s1276] sm:$0x1]
      %v1279 = vperm.slane %v1277, 0
      %1281 = vmatpush.msra.mxu0 0.0
      %1282 = vmatpush.msra.mxu0 0.0
      %1283 = vmatpush.msra.mxu0 0.0
      %1284 = vmatpush.msra.mxu0 0.0
      %1285 = vmatpush.msra.mxu0 0.0
      %1286 = vmatpush.msra.mxu0 0.0
      %1287 = vmatpush.msra.mxu0 0.0
      %1288 = vmatpush.msra.mxu0 0.0
      %1289 = vmatpush.msra.mxu0 0.0
      %1290 = vmatpush.msra.mxu0 0.0
      %1291 = vmatpush.msra.mxu0 0.0
      %1292 = vmatpush.msra.mxu0 0.0
      %1293 = vmatpush.msra.mxu0 %v1275
      %1294 = vmatpush.msra.mxu0 %v1274
      %1295 = vmatpush.msra.mxu0 %v1273
      %1296 = vmatpush.msra.mxu0 %v1272
      %1297 = vmatmul.f32.gmra.mxu0 %v772
      %v1298 = vpop.f32.mrf.mxu0
      %v1299 = vadd.f32 %v1279, %v1298
      %1300 = vmatmul.f32.gmra.mxu0 %v775
      %v1301 = vpop.f32.mrf.mxu0
      %v1302 = vadd.f32 %v1279, %v1301
      %1303 = vdwg.mxu0
      %s1304 = scalar_lea.vmem %s672, 192
      %v1305 = vld [vmem:[%s1304] sm:$0xff]
      %v1306 = vld [vmem:[%s1304 + $0x8] sm:$0xff]
      %v1307 = vld [vmem:[%s1304 + $0x10] sm:$0xff]
      %v1308 = vld [vmem:[%s1304 + $0x18] sm:$0xff]
      %s1309 = scalar_lea.vmem %s676, 6
      %v1310 = vld [vmem:[%s1309] sm:$0x1]
      %v1312 = vperm.slane %v1310, 0
      %1314 = vmatpush.msra.mxu0 0.0
      %1315 = vmatpush.msra.mxu0 0.0
      %1316 = vmatpush.msra.mxu0 0.0
      %1317 = vmatpush.msra.mxu0 0.0
      %1318 = vmatpush.msra.mxu0 0.0
      %1319 = vmatpush.msra.mxu0 0.0
      %1320 = vmatpush.msra.mxu0 0.0
      %1321 = vmatpush.msra.mxu0 0.0
      %1322 = vmatpush.msra.mxu0 0.0
      %1323 = vmatpush.msra.mxu0 0.0
      %1324 = vmatpush.msra.mxu0 0.0
      %1325 = vmatpush.msra.mxu0 0.0
      %1326 = vmatpush.msra.mxu0 %v1308
      %1327 = vmatpush.msra.mxu0 %v1307
      %1328 = vmatpush.msra.mxu0 %v1306
      %1329 = vmatpush.msra.mxu0 %v1305
      %1330 = vmatmul.f32.gmra.mxu0 %v772
      %v1331 = vpop.f32.mrf.mxu0
      %v1332 = vadd.f32 %v1312, %v1331
      %1333 = vmatmul.f32.gmra.mxu0 %v775
      %v1334 = vpop.f32.mrf.mxu0
      %v1335 = vadd.f32 %v1312, %v1334
      %1336 = vdwg.mxu0
      %s1337 = scalar_lea.vmem %s672, 320
      %v1338 = vld [vmem:[%s1337] sm:$0xff]
      %v1339 = vld [vmem:[%s1337 + $0x8] sm:$0xff]
      %v1340 = vld [vmem:[%s1337 + $0x10] sm:$0xff]
      %v1341 = vld [vmem:[%s1337 + $0x18] sm:$0xff]
      %s1342 = scalar_lea.vmem %s676, 10
      %v1343 = vld [vmem:[%s1342] sm:$0x1]
      %v1345 = vperm.slane %v1343, 0
      %1347 = vmatpush.msra.mxu0 0.0
      %1348 = vmatpush.msra.mxu0 0.0
      %1349 = vmatpush.msra.mxu0 0.0
      %1350 = vmatpush.msra.mxu0 0.0
      %1351 = vmatpush.msra.mxu0 0.0
      %1352 = vmatpush.msra.mxu0 0.0
      %1353 = vmatpush.msra.mxu0 0.0
      %1354 = vmatpush.msra.mxu0 0.0
      %1355 = vmatpush.msra.mxu0 0.0
      %1356 = vmatpush.msra.mxu0 0.0
      %1357 = vmatpush.msra.mxu0 0.0
      %1358 = vmatpush.msra.mxu0 0.0
      %1359 = vmatpush.msra.mxu0 %v1341
      %1360 = vmatpush.msra.mxu0 %v1340
      %1361 = vmatpush.msra.mxu0 %v1339
      %1362 = vmatpush.msra.mxu0 %v1338
      %1363 = vmatmul.f32.gmra.mxu0 %v772
      %v1364 = vpop.f32.mrf.mxu0
      %v1365 = vadd.f32 %v1345, %v1364
      %1366 = vmatmul.f32.gmra.mxu0 %v775
      %v1367 = vpop.f32.mrf.mxu0
      %v1368 = vadd.f32 %v1345, %v1367
      %1369 = vdwg.mxu0
      %v1371 = vsel %vm866, %v1299, 0
      %v1374 = vsel %vm866, %v1332, 0
      %1376 = vmatpush.xpose.msra.mxu0 0.0
      %1377 = vmatpush.xpose.msra.mxu0 0.0
      %1378 = vmatpush.xpose.msra.mxu0 0.0
      %1379 = vmatpush.xpose.msra.mxu0 0.0
      %1380 = vmatpush.xpose.msra.mxu0 0.0
      %1381 = vmatpush.xpose.msra.mxu0 0.0
      %1382 = vmatpush.xpose.msra.mxu0 0.0
      %1383 = vmatpush.xpose.msra.mxu0 0.0
      %1384 = vmatpush.xpose.msra.mxu0 0.0
      %1385 = vmatpush.xpose.msra.mxu0 0.0
      %1386 = vmatpush.xpose.msra.mxu0 0.0
      %1387 = vmatpush.xpose.msra.mxu0 0.0
      %1388 = vmatpush.xpose.msra.mxu0 0.0
      %1389 = vmatpush.xpose.msra.mxu0 0.0
      %1390 = vmatpush.xpose.msra.mxu0 0.0
      %1391 = vmatpush.xpose.msra.mxu0 %v1374
      %1392 = vmatmul.f32.gmra.mxu0 %v1371
      %v1393 = vpop.f32.mrf.mxu0
      %v1394 = vadd.f32 0.0, %v1393
      %1395 = vdwg.mxu0
      %v1397 = vsel %vm866, %v1302, 0
      %v1400 = vsel %vm866, %v1335, 0
      %1402 = vmatpush.xpose.msra.mxu0 0.0
      %1403 = vmatpush.xpose.msra.mxu0 0.0
      %1404 = vmatpush.xpose.msra.mxu0 0.0
      %1405 = vmatpush.xpose.msra.mxu0 0.0
      %1406 = vmatpush.xpose.msra.mxu0 0.0
      %1407 = vmatpush.xpose.msra.mxu0 0.0
      %1408 = vmatpush.xpose.msra.mxu0 0.0
      %1409 = vmatpush.xpose.msra.mxu0 0.0
      %1410 = vmatpush.xpose.msra.mxu0 0.0
      %1411 = vmatpush.xpose.msra.mxu0 0.0
      %1412 = vmatpush.xpose.msra.mxu0 0.0
      %1413 = vmatpush.xpose.msra.mxu0 0.0
      %1414 = vmatpush.xpose.msra.mxu0 0.0
      %1415 = vmatpush.xpose.msra.mxu0 0.0
      %1416 = vmatpush.xpose.msra.mxu0 0.0
      %1417 = vmatpush.xpose.msra.mxu0 %v1400
      %1418 = vmatmul.f32.gmra.mxu0 %v1397
      %v1419 = vpop.f32.mrf.mxu0
      %v1420 = vadd.f32 0.0, %v1419
      %1421 = vdwg.mxu0
      %v1422 = vmul.f32 %v1394, 0.35355338
      %v1423 = vmul.f32 %v1420, 0.35355338
      %v1424 = vsel %vm866, %v1422, -inf
      %1425 = vmax.xlane.f32.xlu0 %v1424
      %v1426 = vpop.xlane.xlu0 %1425
      %v1427 = vsel %vm866, %v1423, -inf
      %1428 = vmax.xlane.f32.xlu0 %v1427
      %v1429 = vpop.xlane.xlu0 %1428
      %v1430 = vsub.f32 %v1422, %v1426
      %v1431 = vsub.f32 %v1423, %v1429
      %v1432 = vmul.f32 %v1430, 1.442695
      %v1433 = vpow.pop %v1432
      %v1434 = vmul.f32 %v1431, 1.442695
      %v1435 = vpow.pop %v1434
      %v1436 = vsel %vm866, %v1433, 0.0
      %1437 = vadd.xlane.f32.xlu0 %v1436
      %v1438 = vpop.xlane.xlu0 %1437
      %v1439 = vsel %vm866, %v1435, 0.0
      %1440 = vadd.xlane.f32.xlu0 %v1439
      %v1441 = vpop.xlane.xlu0 %1440
      %v1442 = vrcp.pop %v1438
      %v1443 = vrcp.pop %v1441
      %v1444 = vmul.f32 %v1433, %v1442
      %v1445 = vmul.f32 %v1435, %v1443
      %v1447 = vsel %vm866, %v1444, 0
      %1449 = vmatpush.msra.mxu0 0.0
      %1450 = vmatpush.msra.mxu0 0.0
      %1451 = vmatpush.msra.mxu0 0.0
      %1452 = vmatpush.msra.mxu0 0.0
      %1453 = vmatpush.msra.mxu0 0.0
      %1454 = vmatpush.msra.mxu0 0.0
      %1455 = vmatpush.msra.mxu0 0.0
      %1456 = vmatpush.msra.mxu0 0.0
      %1457 = vmatpush.msra.mxu0 0.0
      %1458 = vmatpush.msra.mxu0 0.0
      %1459 = vmatpush.msra.mxu0 0.0
      %1460 = vmatpush.msra.mxu0 0.0
      %1461 = vmatpush.msra.mxu0 0.0
      %1462 = vmatpush.msra.mxu0 0.0
      %1463 = vmatpush.msra.mxu0 0.0
      %1464 = vmatpush.msra.mxu0 %v1365
      %1465 = vmatmul.f32.gmra.mxu0 %v1447
      %v1466 = vpop.f32.mrf.mxu0
      %v1467 = vadd.f32 0.0, %v1466
      %1468 = vdwg.mxu0
      %v1470 = vsel %vm866, %v1445, 0
      %1472 = vmatpush.msra.mxu0 0.0
      %1473 = vmatpush.msra.mxu0 0.0
      %1474 = vmatpush.msra.mxu0 0.0
      %1475 = vmatpush.msra.mxu0 0.0
      %1476 = vmatpush.msra.mxu0 0.0
      %1477 = vmatpush.msra.mxu0 0.0
      %1478 = vmatpush.msra.mxu0 0.0
      %1479 = vmatpush.msra.mxu0 0.0
      %1480 = vmatpush.msra.mxu0 0.0
      %1481 = vmatpush.msra.mxu0 0.0
      %1482 = vmatpush.msra.mxu0 0.0
      %1483 = vmatpush.msra.mxu0 0.0
      %1484 = vmatpush.msra.mxu0 0.0
      %1485 = vmatpush.msra.mxu0 0.0
      %1486 = vmatpush.msra.mxu0 0.0
      %1487 = vmatpush.msra.mxu0 %v1368
      %1488 = vmatmul.f32.gmra.mxu0 %v1470
      %v1489 = vpop.f32.mrf.mxu0
      %v1490 = vadd.f32 0.0, %v1489
      %1491 = vdwg.mxu0
      %s1492 = scalar_lea.vmem %s681, 16
      %v1493 = vld [vmem:[%s1492] sm:$0xff]
      %v1495 = vsel %vm866, %v1467, 0
      %v1498 = vsel %vm866, %v1490, 0
      %1500 = vmatpush.msra.mxu0 0.0
      %1501 = vmatpush.msra.mxu0 0.0
      %1502 = vmatpush.msra.mxu0 0.0
      %1503 = vmatpush.msra.mxu0 0.0
      %1504 = vmatpush.msra.mxu0 0.0
      %1505 = vmatpush.msra.mxu0 0.0
      %1506 = vmatpush.msra.mxu0 0.0
      %1507 = vmatpush.msra.mxu0 0.0
      %1508 = vmatpush.msra.mxu0 0.0
      %1509 = vmatpush.msra.mxu0 0.0
      %1510 = vmatpush.msra.mxu0 0.0
      %1511 = vmatpush.msra.mxu0 0.0
      %1512 = vmatpush.msra.mxu0 0.0
      %1513 = vmatpush.msra.mxu0 0.0
      %1514 = vmatpush.msra.mxu0 0.0
      %1515 = vmatpush.msra.mxu0 %v1493
      %1516 = vmatmul.f32.gmra.mxu0 %v1495
      %v1517 = vpop.f32.mrf.mxu0
      %v1518 = vadd.f32 0.0, %v1517
      %1519 = vmatmul.f32.gmra.mxu0 %v1498
      %v1520 = vpop.f32.mrf.mxu0
      %v1521 = vadd.f32 0.0, %v1520
      %1522 = vdwg.mxu0
      %v1523 = vadd.f32 %v1266, %v1518
      %v1524 = vadd.f32 %v1269, %v1521
      %s1525 = scalar_lea.vmem %s672, 96
      %v1526 = vld [vmem:[%s1525] sm:$0xff]
      %v1527 = vld [vmem:[%s1525 + $0x8] sm:$0xff]
      %v1528 = vld [vmem:[%s1525 + $0x10] sm:$0xff]
      %v1529 = vld [vmem:[%s1525 + $0x18] sm:$0xff]
      %s1530 = scalar_lea.vmem %s676, 3
      %v1531 = vld [vmem:[%s1530] sm:$0x1]
      %v1533 = vperm.slane %v1531, 0
      %1535 = vmatpush.msra.mxu0 0.0
      %1536 = vmatpush.msra.mxu0 0.0
      %1537 = vmatpush.msra.mxu0 0.0
      %1538 = vmatpush.msra.mxu0 0.0
      %1539 = vmatpush.msra.mxu0 0.0
      %1540 = vmatpush.msra.mxu0 0.0
      %1541 = vmatpush.msra.mxu0 0.0
      %1542 = vmatpush.msra.mxu0 0.0
      %1543 = vmatpush.msra.mxu0 0.0
      %1544 = vmatpush.msra.mxu0 0.0
      %1545 = vmatpush.msra.mxu0 0.0
      %1546 = vmatpush.msra.mxu0 0.0
      %1547 = vmatpush.msra.mxu0 %v1529
      %1548 = vmatpush.msra.mxu0 %v1528
      %1549 = vmatpush.msra.mxu0 %v1527
      %1550 = vmatpush.msra.mxu0 %v1526
      %1551 = vmatmul.f32.gmra.mxu0 %v772
      %v1552 = vpop.f32.mrf.mxu0
      %v1553 = vadd.f32 %v1533, %v1552
      %1554 = vmatmul.f32.gmra.mxu0 %v775
      %v1555 = vpop.f32.mrf.mxu0
      %v1556 = vadd.f32 %v1533, %v1555
      %1557 = vdwg.mxu0
      %s1558 = scalar_lea.vmem %s672, 224
      %v1559 = vld [vmem:[%s1558] sm:$0xff]
      %v1560 = vld [vmem:[%s1558 + $0x8] sm:$0xff]
      %v1561 = vld [vmem:[%s1558 + $0x10] sm:$0xff]
      %v1562 = vld [vmem:[%s1558 + $0x18] sm:$0xff]
      %s1563 = scalar_lea.vmem %s676, 7
      %v1564 = vld [vmem:[%s1563] sm:$0x1]
      %v1566 = vperm.slane %v1564, 0
      %1568 = vmatpush.msra.mxu0 0.0
      %1569 = vmatpush.msra.mxu0 0.0
      %1570 = vmatpush.msra.mxu0 0.0
      %1571 = vmatpush.msra.mxu0 0.0
      %1572 = vmatpush.msra.mxu0 0.0
      %1573 = vmatpush.msra.mxu0 0.0
      %1574 = vmatpush.msra.mxu0 0.0
      %1575 = vmatpush.msra.mxu0 0.0
      %1576 = vmatpush.msra.mxu0 0.0
      %1577 = vmatpush.msra.mxu0 0.0
      %1578 = vmatpush.msra.mxu0 0.0
      %1579 = vmatpush.msra.mxu0 0.0
      %1580 = vmatpush.msra.mxu0 %v1562
      %1581 = vmatpush.msra.mxu0 %v1561
      %1582 = vmatpush.msra.mxu0 %v1560
      %1583 = vmatpush.msra.mxu0 %v1559
      %1584 = vmatmul.f32.gmra.mxu0 %v772
      %v1585 = vpop.f32.mrf.mxu0
      %v1586 = vadd.f32 %v1566, %v1585
      %1587 = vmatmul.f32.gmra.mxu0 %v775
      %v1588 = vpop.f32.mrf.mxu0
      %v1589 = vadd.f32 %v1566, %v1588
      %1590 = vdwg.mxu0
      %s1591 = scalar_lea.vmem %s672, 352
      %v1592 = vld [vmem:[%s1591] sm:$0xff]
      %v1593 = vld [vmem:[%s1591 + $0x8] sm:$0xff]
      %v1594 = vld [vmem:[%s1591 + $0x10] sm:$0xff]
      %v1595 = vld [vmem:[%s1591 + $0x18] sm:$0xff]
      %s1596 = scalar_lea.vmem %s676, 11
      %v1597 = vld [vmem:[%s1596] sm:$0x1]
      %v1599 = vperm.slane %v1597, 0
      %1601 = vmatpush.msra.mxu0 0.0
      %1602 = vmatpush.msra.mxu0 0.0
      %1603 = vmatpush.msra.mxu0 0.0
      %1604 = vmatpush.msra.mxu0 0.0
      %1605 = vmatpush.msra.mxu0 0.0
      %1606 = vmatpush.msra.mxu0 0.0
      %1607 = vmatpush.msra.mxu0 0.0
      %1608 = vmatpush.msra.mxu0 0.0
      %1609 = vmatpush.msra.mxu0 0.0
      %1610 = vmatpush.msra.mxu0 0.0
      %1611 = vmatpush.msra.mxu0 0.0
      %1612 = vmatpush.msra.mxu0 0.0
      %1613 = vmatpush.msra.mxu0 %v1595
      %1614 = vmatpush.msra.mxu0 %v1594
      %1615 = vmatpush.msra.mxu0 %v1593
      %1616 = vmatpush.msra.mxu0 %v1592
      %1617 = vmatmul.f32.gmra.mxu0 %v772
      %v1618 = vpop.f32.mrf.mxu0
      %v1619 = vadd.f32 %v1599, %v1618
      %1620 = vmatmul.f32.gmra.mxu0 %v775
      %v1621 = vpop.f32.mrf.mxu0
      %v1622 = vadd.f32 %v1599, %v1621
      %1623 = vdwg.mxu0
      %v1625 = vsel %vm866, %v1553, 0
      %v1628 = vsel %vm866, %v1586, 0
      %1630 = vmatpush.xpose.msra.mxu0 0.0
      %1631 = vmatpush.xpose.msra.mxu0 0.0
      %1632 = vmatpush.xpose.msra.mxu0 0.0
      %1633 = vmatpush.xpose.msra.mxu0 0.0
      %1634 = vmatpush.xpose.msra.mxu0 0.0
      %1635 = vmatpush.xpose.msra.mxu0 0.0
      %1636 = vmatpush.xpose.msra.mxu0 0.0
      %1637 = vmatpush.xpose.msra.mxu0 0.0
      %1638 = vmatpush.xpose.msra.mxu0 0.0
      %1639 = vmatpush.xpose.msra.mxu0 0.0
      %1640 = vmatpush.xpose.msra.mxu0 0.0
      %1641 = vmatpush.xpose.msra.mxu0 0.0
      %1642 = vmatpush.xpose.msra.mxu0 0.0
      %1643 = vmatpush.xpose.msra.mxu0 0.0
      %1644 = vmatpush.xpose.msra.mxu0 0.0
      %1645 = vmatpush.xpose.msra.mxu0 %v1628
      %1646 = vmatmul.f32.gmra.mxu0 %v1625
      %v1647 = vpop.f32.mrf.mxu0
      %v1648 = vadd.f32 0.0, %v1647
      %1649 = vdwg.mxu0
      %v1651 = vsel %vm866, %v1556, 0
      %v1654 = vsel %vm866, %v1589, 0
      %1656 = vmatpush.xpose.msra.mxu0 0.0
      %1657 = vmatpush.xpose.msra.mxu0 0.0
      %1658 = vmatpush.xpose.msra.mxu0 0.0
      %1659 = vmatpush.xpose.msra.mxu0 0.0
      %1660 = vmatpush.xpose.msra.mxu0 0.0
      %1661 = vmatpush.xpose.msra.mxu0 0.0
      %1662 = vmatpush.xpose.msra.mxu0 0.0
      %1663 = vmatpush.xpose.msra.mxu0 0.0
      %1664 = vmatpush.xpose.msra.mxu0 0.0
      %1665 = vmatpush.xpose.msra.mxu0 0.0
      %1666 = vmatpush.xpose.msra.mxu0 0.0
      %1667 = vmatpush.xpose.msra.mxu0 0.0
      %1668 = vmatpush.xpose.msra.mxu0 0.0
      %1669 = vmatpush.xpose.msra.mxu0 0.0
      %1670 = vmatpush.xpose.msra.mxu0 0.0
      %1671 = vmatpush.xpose.msra.mxu0 %v1654
      %1672 = vmatmul.f32.gmra.mxu0 %v1651
      %v1673 = vpop.f32.mrf.mxu0
      %v1674 = vadd.f32 0.0, %v1673
      %1675 = vdwg.mxu0
      %v1676 = vmul.f32 %v1648, 0.35355338
      %v1677 = vmul.f32 %v1674, 0.35355338
      %v1678 = vsel %vm866, %v1676, -inf
      %1679 = vmax.xlane.f32.xlu0 %v1678
      %v1680 = vpop.xlane.xlu0 %1679
      %v1681 = vsel %vm866, %v1677, -inf
      %1682 = vmax.xlane.f32.xlu0 %v1681
      %v1683 = vpop.xlane.xlu0 %1682
      %v1684 = vsub.f32 %v1676, %v1680
      %v1685 = vsub.f32 %v1677, %v1683
      %v1686 = vmul.f32 %v1684, 1.442695
      %v1687 = vpow.pop %v1686
      %v1688 = vmul.f32 %v1685, 1.442695
      %v1689 = vpow.pop %v1688
      %v1690 = vsel %vm866, %v1687, 0.0
      %1691 = vadd.xlane.f32.xlu0 %v1690
      %v1692 = vpop.xlane.xlu0 %1691
      %v1693 = vsel %vm866, %v1689, 0.0
      %1694 = vadd.xlane.f32.xlu0 %v1693
      %v1695 = vpop.xlane.xlu0 %1694
      %v1696 = vrcp.pop %v1692
      %v1697 = vrcp.pop %v1695
      %v1698 = vmul.f32 %v1687, %v1696
      %v1699 = vmul.f32 %v1689, %v1697
      %v1701 = vsel %vm866, %v1698, 0
      %1703 = vmatpush.msra.mxu0 0.0
      %1704 = vmatpush.msra.mxu0 0.0
      %1705 = vmatpush.msra.mxu0 0.0
      %1706 = vmatpush.msra.mxu0 0.0
      %1707 = vmatpush.msra.mxu0 0.0
      %1708 = vmatpush.msra.mxu0 0.0
      %1709 = vmatpush.msra.mxu0 0.0
      %1710 = vmatpush.msra.mxu0 0.0
      %1711 = vmatpush.msra.mxu0 0.0
      %1712 = vmatpush.msra.mxu0 0.0
      %1713 = vmatpush.msra.mxu0 0.0
      %1714 = vmatpush.msra.mxu0 0.0
      %1715 = vmatpush.msra.mxu0 0.0
      %1716 = vmatpush.msra.mxu0 0.0
      %1717 = vmatpush.msra.mxu0 0.0
      %1718 = vmatpush.msra.mxu0 %v1619
      %1719 = vmatmul.f32.gmra.mxu0 %v1701
      %v1720 = vpop.f32.mrf.mxu0
      %v1721 = vadd.f32 0.0, %v1720
      %1722 = vdwg.mxu0
      %v1724 = vsel %vm866, %v1699, 0
      %1726 = vmatpush.msra.mxu0 0.0
      %1727 = vmatpush.msra.mxu0 0.0
      %1728 = vmatpush.msra.mxu0 0.0
      %1729 = vmatpush.msra.mxu0 0.0
      %1730 = vmatpush.msra.mxu0 0.0
      %1731 = vmatpush.msra.mxu0 0.0
      %1732 = vmatpush.msra.mxu0 0.0
      %1733 = vmatpush.msra.mxu0 0.0
      %1734 = vmatpush.msra.mxu0 0.0
      %1735 = vmatpush.msra.mxu0 0.0
      %1736 = vmatpush.msra.mxu0 0.0
      %1737 = vmatpush.msra.mxu0 0.0
      %1738 = vmatpush.msra.mxu0 0.0
      %1739 = vmatpush.msra.mxu0 0.0
      %1740 = vmatpush.msra.mxu0 0.0
      %1741 = vmatpush.msra.mxu0 %v1622
      %1742 = vmatmul.f32.gmra.mxu0 %v1724
      %v1743 = vpop.f32.mrf.mxu0
      %v1744 = vadd.f32 0.0, %v1743
      %1745 = vdwg.mxu0
      %s1746 = scalar_lea.vmem %s681, 24
      %v1747 = vld [vmem:[%s1746] sm:$0xff]
      %v1749 = vsel %vm866, %v1721, 0
      %v1752 = vsel %vm866, %v1744, 0
      %1754 = vmatpush.msra.mxu0 0.0
      %1755 = vmatpush.msra.mxu0 0.0
      %1756 = vmatpush.msra.mxu0 0.0
      %1757 = vmatpush.msra.mxu0 0.0
      %1758 = vmatpush.msra.mxu0 0.0
      %1759 = vmatpush.msra.mxu0 0.0
      %1760 = vmatpush.msra.mxu0 0.0
      %1761 = vmatpush.msra.mxu0 0.0
      %1762 = vmatpush.msra.mxu0 0.0
      %1763 = vmatpush.msra.mxu0 0.0
      %1764 = vmatpush.msra.mxu0 0.0
      %1765 = vmatpush.msra.mxu0 0.0
      %1766 = vmatpush.msra.mxu0 0.0
      %1767 = vmatpush.msra.mxu0 0.0
      %1768 = vmatpush.msra.mxu0 0.0
      %1769 = vmatpush.msra.mxu0 %v1747
      %1770 = vmatmul.f32.gmra.mxu0 %v1749
      %v1771 = vpop.f32.mrf.mxu0
      %v1772 = vadd.f32 0.0, %v1771
      %1773 = vmatmul.f32.gmra.mxu0 %v1752
      %v1774 = vpop.f32.mrf.mxu0
      %v1775 = vadd.f32 0.0, %v1774
      %1776 = vdwg.mxu0
      %v1777 = vadd.f32 %v1523, %v1772
      %v1778 = vadd.f32 %v1524, %v1775
      %v1779 = vld [vmem:[%s684] sm:$0x1]
      %v1781 = vperm.slane %v1779, 0
      %v1783 = vadd.f32 %v1777, %v1781
      %v1784 = vadd.f32 %v1778, %v1781
      %v1785 = vadd.f32 %v760, %v1783
      %v1786 = vadd.f32 %v761, %v1784
      %v1787 = vld [vmem:[%s687] sm:$0x1]
      %v1788 = vld [vmem:[%s690] sm:$0x1]
      %v1789 = vsel %vm770, %v1785, 0.0
      %1790 = vadd.xlane.f32.xlu0 %v1789
      %v1791 = vpop.xlane.xlu0 %1790
      %v1792 = vsel %vm770, %v1786, 0.0
      %1793 = vadd.xlane.f32.xlu0 %v1792
      %v1794 = vpop.xlane.xlu0 %1793
      %v1795 = vrcp.pop 32.0
      %v1796 = vmul.f32 32.0, %v1795
      %v1797 = vsub.f32 1.0, %v1796
      %v1798 = vmul.f32 %v1795, %v1797
      %v1799 = vadd.f32 %v1795, %v1798
      %vm1800 = vweird.f32 %v1795
      %v1801 = vsel %vm1800, %v1795, %v1799
      %v1802 = vmul.f32 %v1791, %v1801
      %v1803 = vmul.f32 %v1794, %v1801
      %v1804 = vsub.f32 %v1785, %v1802
      %v1805 = vsub.f32 %v1786, %v1803
      %v1806 = vmul.f32 %v1804, %v1804
      %v1807 = vmul.f32 %v1805, %v1805
      %v1808 = vsel %vm770, %v1806, 0.0
      %1809 = vadd.xlane.f32.xlu0 %v1808
      %v1810 = vpop.xlane.xlu0 %1809
      %v1811 = vsel %vm770, %v1807, 0.0
      %1812 = vadd.xlane.f32.xlu0 %v1811
      %v1813 = vpop.xlane.xlu0 %1812
      %v1814 = vmul.f32 %v1810, %v1801
      %v1815 = vmul.f32 %v1813, %v1801
      %v1816 = vadd.f32 %v1814, 1e-05
      %v1817 = vadd.f32 %v1815, 1e-05
      %v1818 = vrsqrt.pop %v1816
      %v1819 = vmul.f32 %v1818, %v1816
      %v1820 = vmul.f32 %v1819, %v1818
      %v1821 = vmul.f32 0.5, %v1820
      %v1822 = vsub.f32 1.5, %v1821
      %v1823 = vmul.f32 %v1818, %v1822
      %vm1824 = vweird.f32 %v1816
      %vm1825 = vweird.f32 %v1818
      %vm1826 = vmor %vm1824, %vm1825
      %v1827 = vsel %vm1826, %v1818, %v1823
      %v1828 = vrsqrt.pop %v1817
      %v1829 = vmul.f32 %v1828, %v1817
      %v1830 = vmul.f32 %v1829, %v1828
      %v1831 = vmul.f32 0.5, %v1830
      %v1832 = vsub.f32 1.5, %v1831
      %v1833 = vmul.f32 %v1828, %v1832
      %vm1834 = vweird.f32 %v1817
      %vm1835 = vweird.f32 %v1828
      %vm1836 = vmor %vm1834, %vm1835
      %v1837 = vsel %vm1836, %v1828, %v1833
      %v1838 = vmul.f32 %v1804, %v1827
      %v1839 = vmul.f32 %v1805, %v1837
      %v1841 = vperm.slane %v1787, 0
      %v1843 = vmul.f32 %v1838, %v1841
      %v1844 = vmul.f32 %v1839, %v1841
      %v1846 = vperm.slane %v1788, 0
      %v1848 = vadd.f32 %v1843, %v1846
      %v1849 = vadd.f32 %v1844, %v1846
      %v1850 = vpack.c.bf16 %v1849, %v1848
      %v1851 = vld [vmem:[%s701] sm:$0xff]
      %v1852 = vld [vmem:[%s701 + $0x8] sm:$0xff]
      %v1853 = vld [vmem:[%s701 + $0x10] sm:$0xff]
      %v1854 = vld [vmem:[%s701 + $0x18] sm:$0xff]
      %v1855 = vld [vmem:[%s701 + $0x20] sm:$0xff]
      %v1856 = vld [vmem:[%s701 + $0x28] sm:$0xff]
      %v1857 = vld [vmem:[%s701 + $0x30] sm:$0xff]
      %v1858 = vld [vmem:[%s701 + $0x38] sm:$0xff]
      %v1859 = vld [vmem:[%s701 + $0x40] sm:$0xff]
      %v1860 = vld [vmem:[%s701 + $0x48] sm:$0xff]
      %v1861 = vld [vmem:[%s701 + $0x50] sm:$0xff]
      %v1862 = vld [vmem:[%s701 + $0x58] sm:$0xff]
      %v1863 = vld [vmem:[%s701 + $0x60] sm:$0xff]
      %v1864 = vld [vmem:[%s701 + $0x68] sm:$0xff]
      %v1865 = vld [vmem:[%s701 + $0x70] sm:$0xff]
      %v1866 = vld [vmem:[%s701 + $0x78] sm:$0xff]
      %v1867 = vld [vmem:[%s701 + $0x80] sm:$0xff]
      %v1868 = vld [vmem:[%s701 + $0x88] sm:$0xff]
      %v1869 = vld [vmem:[%s701 + $0x90] sm:$0xff]
      %v1870 = vld [vmem:[%s701 + $0x98] sm:$0xff]
      %v1871 = vld [vmem:[%s701 + $0xa0] sm:$0xff]
      %v1872 = vld [vmem:[%s701 + $0xa8] sm:$0xff]
      %v1873 = vld [vmem:[%s701 + $0xb0] sm:$0xff]
      %v1874 = vld [vmem:[%s701 + $0xb8] sm:$0xff]
      %v1875 = vld [vmem:[%s701 + $0xc0] sm:$0xff]
      %v1876 = vld [vmem:[%s701 + $0xc8] sm:$0xff]
      %v1877 = vld [vmem:[%s701 + $0xd0] sm:$0xff]
      %v1878 = vld [vmem:[%s701 + $0xd8] sm:$0xff]
      %v1879 = vld [vmem:[%s701 + $0xe0] sm:$0xff]
      %v1880 = vld [vmem:[%s701 + $0xe8] sm:$0xff]
      %v1881 = vld [vmem:[%s701 + $0xf0] sm:$0xff]
      %v1882 = vld [vmem:[%s701 + $0xf8] sm:$0xff]
      %v1883 = vld [vmem:[%s705] sm:$0xff]
      %v1884 = vld [vmem:[%s705 + $0x8] sm:$0xff]
      %v1887 = vperm.slane %v1883, 0
      %v1888 = vperm.slane %v1883, 1
      %v1889 = vperm.slane %v1883, 2
      %v1890 = vperm.slane %v1883, 3
      %v1891 = vperm.slane %v1883, 4
      %v1892 = vperm.slane %v1883, 5
      %v1893 = vperm.slane %v1883, 6
      %v1894 = vperm.slane %v1883, 7
      %v1895 = vperm.slane %v1884, 0
      %v1896 = vperm.slane %v1884, 1
      %v1897 = vperm.slane %v1884, 2
      %v1898 = vperm.slane %v1884, 3
      %v1899 = vperm.slane %v1884, 4
      %v1900 = vperm.slane %v1884, 5
      %v1901 = vperm.slane %v1884, 6
      %v1902 = vperm.slane %v1884, 7
      %v1951 = vunpack.c.l.b16 %v1851
      %v1952 = vunpack.c.h.b16 %v1851
      %v1953 = vunpack.c.l.b16 %v1852
      %v1954 = vunpack.c.h.b16 %v1852
      %v1955 = vunpack.c.l.b16 %v1853
      %v1956 = vunpack.c.h.b16 %v1853
      %v1957 = vunpack.c.l.b16 %v1854
      %v1958 = vunpack.c.h.b16 %v1854
      %v1959 = vunpack.c.l.b16 %v1855
      %v1960 = vunpack.c.h.b16 %v1855
      %v1961 = vunpack.c.l.b16 %v1856
      %v1962 = vunpack.c.h.b16 %v1856
      %v1963 = vunpack.c.l.b16 %v1857
      %v1964 = vunpack.c.h.b16 %v1857
      %v1965 = vunpack.c.l.b16 %v1858
      %v1966 = vunpack.c.h.b16 %v1858
      %v1967 = vunpack.c.l.b16 %v1859
      %v1968 = vunpack.c.h.b16 %v1859
      %v1969 = vunpack.c.l.b16 %v1860
      %v1970 = vunpack.c.h.b16 %v1860
      %v1971 = vunpack.c.l.b16 %v1861
      %v1972 = vunpack.c.h.b16 %v1861
      %v1973 = vunpack.c.l.b16 %v1862
      %v1974 = vunpack.c.h.b16 %v1862
      %v1975 = vunpack.c.l.b16 %v1863
      %v1976 = vunpack.c.h.b16 %v1863
      %v1977 = vunpack.c.l.b16 %v1864
      %v1978 = vunpack.c.h.b16 %v1864
      %v1979 = vunpack.c.l.b16 %v1865
      %v1980 = vunpack.c.h.b16 %v1865
      %v1981 = vunpack.c.l.b16 %v1866
      %v1982 = vunpack.c.h.b16 %v1866
      %v1983 = vunpack.c.l.b16 %v1867
      %v1984 = vunpack.c.h.b16 %v1867
      %v1985 = vunpack.c.l.b16 %v1868
      %v1986 = vunpack.c.h.b16 %v1868
      %v1987 = vunpack.c.l.b16 %v1869
      %v1988 = vunpack.c.h.b16 %v1869
      %v1989 = vunpack.c.l.b16 %v1870
      %v1990 = vunpack.c.h.b16 %v1870
      %v1991 = vunpack.c.l.b16 %v1871
      %v1992 = vunpack.c.h.b16 %v1871
      %v1993 = vunpack.c.l.b16 %v1872
      %v1994 = vunpack.c.h.b16 %v1872
      %v1995 = vunpack.c.l.b16 %v1873
      %v1996 = vunpack.c.h.b16 %v1873
      %v1997 = vunpack.c.l.b16 %v1874
      %v1998 = vunpack.c.h.b16 %v1874
      %v1999 = vunpack.c.l.b16 %v1875
      %v2000 = vunpack.c.h.b16 %v1875
      %v2001 = vunpack.c.l.b16 %v1876
      %v2002 = vunpack.c.h.b16 %v1876
      %v2003 = vunpack.c.l.b16 %v1877
      %v2004 = vunpack.c.h.b16 %v1877
      %v2005 = vunpack.c.l.b16 %v1878
      %v2006 = vunpack.c.h.b16 %v1878
      %v2007 = vunpack.c.l.b16 %v1879
      %v2008 = vunpack.c.h.b16 %v1879
      %v2009 = vunpack.c.l.b16 %v1880
      %v2010 = vunpack.c.h.b16 %v1880
      %v2011 = vunpack.c.l.b16 %v1881
      %v2012 = vunpack.c.h.b16 %v1881
      %v2013 = vunpack.c.l.b16 %v1882
      %v2014 = vunpack.c.h.b16 %v1882
      %v2015 = vpack.c.b16 %v1967, %v1951
      %v2016 = vpack.c.b16 %v1968, %v1952
      %v2017 = vpack.c.b16 %v1969, %v1953
      %v2018 = vpack.c.b16 %v1970, %v1954
      %v2019 = vpack.c.b16 %v1971, %v1955
      %v2020 = vpack.c.b16 %v1972, %v1956
      %v2021 = vpack.c.b16 %v1973, %v1957
      %v2022 = vpack.c.b16 %v1974, %v1958
      %v2023 = vpack.c.b16 %v1975, %v1959
      %v2024 = vpack.c.b16 %v1976, %v1960
      %v2025 = vpack.c.b16 %v1977, %v1961
      %v2026 = vpack.c.b16 %v1978, %v1962
      %v2027 = vpack.c.b16 %v1979, %v1963
      %v2028 = vpack.c.b16 %v1980, %v1964
      %v2029 = vpack.c.b16 %v1981, %v1965
      %v2030 = vpack.c.b16 %v1982, %v1966
      %v2031 = vpack.c.b16 %v1999, %v1983
      %v2032 = vpack.c.b16 %v2000, %v1984
      %v2033 = vpack.c.b16 %v2001, %v1985
      %v2034 = vpack.c.b16 %v2002, %v1986
      %v2035 = vpack.c.b16 %v2003, %v1987
      %v2036 = vpack.c.b16 %v2004, %v1988
      %v2037 = vpack.c.b16 %v2005, %v1989
      %v2038 = vpack.c.b16 %v2006, %v1990
      %v2039 = vpack.c.b16 %v2007, %v1991
      %v2040 = vpack.c.b16 %v2008, %v1992
      %v2041 = vpack.c.b16 %v2009, %v1993
      %v2042 = vpack.c.b16 %v2010, %v1994
      %v2043 = vpack.c.b16 %v2011, %v1995
      %v2044 = vpack.c.b16 %v2012, %v1996
      %v2045 = vpack.c.b16 %v2013, %v1997
      %v2046 = vpack.c.b16 %v2014, %v1998
      %v2080 = vsel %vm770, %v1850, 0
      %2082 = vmatpush.bf16.msra.mxu0 0
      %2083 = vmatpush.bf16.msra.mxu0 0
      %2084 = vmatpush.bf16.msra.mxu0 0
      %2085 = vmatpush.bf16.msra.mxu0 0
      %2086 = vmatpush.bf16.msra.mxu0 0
      %2087 = vmatpush.bf16.msra.mxu0 0
      %2088 = vmatpush.bf16.msra.mxu0 %v2031
      %2089 = vmatpush.bf16.msra.mxu0 %v2015
      %2090 = vmatmul.bf16.gmra.mxu0 %v2080
      %v2091 = vpop.f32.mrf.mxu0
      %v2092 = vadd.f32 %v1887, %v2091
      %v2093 = vpop.f32.mrf.mxu0
      %v2094 = vadd.f32 %v1887, %v2093
      %2095 = vdwg.mxu0
      %2096 = vmatpush.bf16.msra.mxu0 0
      %2097 = vmatpush.bf16.msra.mxu0 0
      %2098 = vmatpush.bf16.msra.mxu0 0
      %2099 = vmatpush.bf16.msra.mxu0 0
      %2100 = vmatpush.bf16.msra.mxu0 0
      %2101 = vmatpush.bf16.msra.mxu0 0
      %2102 = vmatpush.bf16.msra.mxu0 %v2032
      %2103 = vmatpush.bf16.msra.mxu0 %v2016
      %2104 = vmatmul.bf16.gmra.mxu0 %v2080
      %v2105 = vpop.f32.mrf.mxu0
      %v2106 = vadd.f32 %v1888, %v2105
      %v2107 = vpop.f32.mrf.mxu0
      %v2108 = vadd.f32 %v1888, %v2107
      %2109 = vdwg.mxu0
      %2110 = vmatpush.bf16.msra.mxu0 0
      %2111 = vmatpush.bf16.msra.mxu0 0
      %2112 = vmatpush.bf16.msra.mxu0 0
      %2113 = vmatpush.bf16.msra.mxu0 0
      %2114 = vmatpush.bf16.msra.mxu0 0
      %2115 = vmatpush.bf16.msra.mxu0 0
      %2116 = vmatpush.bf16.msra.mxu0 %v2033
      %2117 = vmatpush.bf16.msra.mxu0 %v2017
      %2118 = vmatmul.bf16.gmra.mxu0 %v2080
      %v2119 = vpop.f32.mrf.mxu0
      %v2120 = vadd.f32 %v1889, %v2119
      %v2121 = vpop.f32.mrf.mxu0
      %v2122 = vadd.f32 %v1889, %v2121
      %2123 = vdwg.mxu0
      %2124 = vmatpush.bf16.msra.mxu0 0
      %2125 = vmatpush.bf16.msra.mxu0 0
      %2126 = vmatpush.bf16.msra.mxu0 0
      %2127 = vmatpush.bf16.msra.mxu0 0
      %2128 = vmatpush.bf16.msra.mxu0 0
      %2129 = vmatpush.bf16.msra.mxu0 0
      %2130 = vmatpush.bf16.msra.mxu0 %v2034
      %2131 = vmatpush.bf16.msra.mxu0 %v2018
      %2132 = vmatmul.bf16.gmra.mxu0 %v2080
      %v2133 = vpop.f32.mrf.mxu0
      %v2134 = vadd.f32 %v1890, %v2133
      %v2135 = vpop.f32.mrf.mxu0
      %v2136 = vadd.f32 %v1890, %v2135
      %2137 = vdwg.mxu0
      %2138 = vmatpush.bf16.msra.mxu0 0
      %2139 = vmatpush.bf16.msra.mxu0 0
      %2140 = vmatpush.bf16.msra.mxu0 0
      %2141 = vmatpush.bf16.msra.mxu0 0
      %2142 = vmatpush.bf16.msra.mxu0 0
      %2143 = vmatpush.bf16.msra.mxu0 0
      %2144 = vmatpush.bf16.msra.mxu0 %v2035
      %2145 = vmatpush.bf16.msra.mxu0 %v2019
      %2146 = vmatmul.bf16.gmra.mxu0 %v2080
      %v2147 = vpop.f32.mrf.mxu0
      %v2148 = vadd.f32 %v1891, %v2147
      %v2149 = vpop.f32.mrf.mxu0
      %v2150 = vadd.f32 %v1891, %v2149
      %2151 = vdwg.mxu0
      %2152 = vmatpush.bf16.msra.mxu0 0
      %2153 = vmatpush.bf16.msra.mxu0 0
      %2154 = vmatpush.bf16.msra.mxu0 0
      %2155 = vmatpush.bf16.msra.mxu0 0
      %2156 = vmatpush.bf16.msra.mxu0 0
      %2157 = vmatpush.bf16.msra.mxu0 0
      %2158 = vmatpush.bf16.msra.mxu0 %v2036
      %2159 = vmatpush.bf16.msra.mxu0 %v2020
      %2160 = vmatmul.bf16.gmra.mxu0 %v2080
      %v2161 = vpop.f32.mrf.mxu0
      %v2162 = vadd.f32 %v1892, %v2161
      %v2163 = vpop.f32.mrf.mxu0
      %v2164 = vadd.f32 %v1892, %v2163
      %2165 = vdwg.mxu0
      %2166 = vmatpush.bf16.msra.mxu0 0
      %2167 = vmatpush.bf16.msra.mxu0 0
      %2168 = vmatpush.bf16.msra.mxu0 0
      %2169 = vmatpush.bf16.msra.mxu0 0
      %2170 = vmatpush.bf16.msra.mxu0 0
      %2171 = vmatpush.bf16.msra.mxu0 0
      %2172 = vmatpush.bf16.msra.mxu0 %v2037
      %2173 = vmatpush.bf16.msra.mxu0 %v2021
      %2174 = vmatmul.bf16.gmra.mxu0 %v2080
      %v2175 = vpop.f32.mrf.mxu0
      %v2176 = vadd.f32 %v1893, %v2175
      %v2177 = vpop.f32.mrf.mxu0
      %v2178 = vadd.f32 %v1893, %v2177
      %2179 = vdwg.mxu0
      %2180 = vmatpush.bf16.msra.mxu0 0
      %2181 = vmatpush.bf16.msra.mxu0 0
      %2182 = vmatpush.bf16.msra.mxu0 0
      %2183 = vmatpush.bf16.msra.mxu0 0
      %2184 = vmatpush.bf16.msra.mxu0 0
      %2185 = vmatpush.bf16.msra.mxu0 0
      %2186 = vmatpush.bf16.msra.mxu0 %v2038
      %2187 = vmatpush.bf16.msra.mxu0 %v2022
      %2188 = vmatmul.bf16.gmra.mxu0 %v2080
      %v2189 = vpop.f32.mrf.mxu0
      %v2190 = vadd.f32 %v1894, %v2189
      %v2191 = vpop.f32.mrf.mxu0
      %v2192 = vadd.f32 %v1894, %v2191
      %2193 = vdwg.mxu0
      %2194 = vmatpush.bf16.msra.mxu0 0
      %2195 = vmatpush.bf16.msra.mxu0 0
      %2196 = vmatpush.bf16.msra.mxu0 0
      %2197 = vmatpush.bf16.msra.mxu0 0
      %2198 = vmatpush.bf16.msra.mxu0 0
      %2199 = vmatpush.bf16.msra.mxu0 0
      %2200 = vmatpush.bf16.msra.mxu0 %v2039
      %2201 = vmatpush.bf16.msra.mxu0 %v2023
      %2202 = vmatmul.bf16.gmra.mxu0 %v2080
      %v2203 = vpop.f32.mrf.mxu0
      %v2204 = vadd.f32 %v1895, %v2203
      %v2205 = vpop.f32.mrf.mxu0
      %v2206 = vadd.f32 %v1895, %v2205
      %2207 = vdwg.mxu0
      %2208 = vmatpush.bf16.msra.mxu0 0
      %2209 = vmatpush.bf16.msra.mxu0 0
      %2210 = vmatpush.bf16.msra.mxu0 0
      %2211 = vmatpush.bf16.msra.mxu0 0
      %2212 = vmatpush.bf16.msra.mxu0 0
      %2213 = vmatpush.bf16.msra.mxu0 0
      %2214 = vmatpush.bf16.msra.mxu0 %v2040
      %2215 = vmatpush.bf16.msra.mxu0 %v2024
      %2216 = vmatmul.bf16.gmra.mxu0 %v2080
      %v2217 = vpop.f32.mrf.mxu0
      %v2218 = vadd.f32 %v1896, %v2217
      %v2219 = vpop.f32.mrf.mxu0
      %v2220 = vadd.f32 %v1896, %v2219
      %2221 = vdwg.mxu0
      %2222 = vmatpush.bf16.msra.mxu0 0
      %2223 = vmatpush.bf16.msra.mxu0 0
      %2224 = vmatpush.bf16.msra.mxu0 0
      %2225 = vmatpush.bf16.msra.mxu0 0
      %2226 = vmatpush.bf16.msra.mxu0 0
      %2227 = vmatpush.bf16.msra.mxu0 0
      %2228 = vmatpush.bf16.msra.mxu0 %v2041
      %2229 = vmatpush.bf16.msra.mxu0 %v2025
      %2230 = vmatmul.bf16.gmra.mxu0 %v2080
      %v2231 = vpop.f32.mrf.mxu0
      %v2232 = vadd.f32 %v1897, %v2231
      %v2233 = vpop.f32.mrf.mxu0
      %v2234 = vadd.f32 %v1897, %v2233
      %2235 = vdwg.mxu0
      %2236 = vmatpush.bf16.msra.mxu0 0
      %2237 = vmatpush.bf16.msra.mxu0 0
      %2238 = vmatpush.bf16.msra.mxu0 0
      %2239 = vmatpush.bf16.msra.mxu0 0
      %2240 = vmatpush.bf16.msra.mxu0 0
      %2241 = vmatpush.bf16.msra.mxu0 0
      %2242 = vmatpush.bf16.msra.mxu0 %v2042
      %2243 = vmatpush.bf16.msra.mxu0 %v2026
      %2244 = vmatmul.bf16.gmra.mxu0 %v2080
      %v2245 = vpop.f32.mrf.mxu0
      %v2246 = vadd.f32 %v1898, %v2245
      %v2247 = vpop.f32.mrf.mxu0
      %v2248 = vadd.f32 %v1898, %v2247
      %2249 = vdwg.mxu0
      %2250 = vmatpush.bf16.msra.mxu0 0
      %2251 = vmatpush.bf16.msra.mxu0 0
      %2252 = vmatpush.bf16.msra.mxu0 0
      %2253 = vmatpush.bf16.msra.mxu0 0
      %2254 = vmatpush.bf16.msra.mxu0 0
      %2255 = vmatpush.bf16.msra.mxu0 0
      %2256 = vmatpush.bf16.msra.mxu0 %v2043
      %2257 = vmatpush.bf16.msra.mxu0 %v2027
      %2258 = vmatmul.bf16.gmra.mxu0 %v2080
      %v2259 = vpop.f32.mrf.mxu0
      %v2260 = vadd.f32 %v1899, %v2259
      %v2261 = vpop.f32.mrf.mxu0
      %v2262 = vadd.f32 %v1899, %v2261
      %2263 = vdwg.mxu0
      %2264 = vmatpush.bf16.msra.mxu0 0
      %2265 = vmatpush.bf16.msra.mxu0 0
      %2266 = vmatpush.bf16.msra.mxu0 0
      %2267 = vmatpush.bf16.msra.mxu0 0
      %2268 = vmatpush.bf16.msra.mxu0 0
      %2269 = vmatpush.bf16.msra.mxu0 0
      %2270 = vmatpush.bf16.msra.mxu0 %v2044
      %2271 = vmatpush.bf16.msra.mxu0 %v2028
      %2272 = vmatmul.bf16.gmra.mxu0 %v2080
      %v2273 = vpop.f32.mrf.mxu0
      %v2274 = vadd.f32 %v1900, %v2273
      %v2275 = vpop.f32.mrf.mxu0
      %v2276 = vadd.f32 %v1900, %v2275
      %2277 = vdwg.mxu0
      %2278 = vmatpush.bf16.msra.mxu0 0
      %2279 = vmatpush.bf16.msra.mxu0 0
      %2280 = vmatpush.bf16.msra.mxu0 0
      %2281 = vmatpush.bf16.msra.mxu0 0
      %2282 = vmatpush.bf16.msra.mxu0 0
      %2283 = vmatpush.bf16.msra.mxu0 0
      %2284 = vmatpush.bf16.msra.mxu0 %v2045
      %2285 = vmatpush.bf16.msra.mxu0 %v2029
      %2286 = vmatmul.bf16.gmra.mxu0 %v2080
      %v2287 = vpop.f32.mrf.mxu0
      %v2288 = vadd.f32 %v1901, %v2287
      %v2289 = vpop.f32.mrf.mxu0
      %v2290 = vadd.f32 %v1901, %v2289
      %2291 = vdwg.mxu0
      %2292 = vmatpush.bf16.msra.mxu0 0
      %2293 = vmatpush.bf16.msra.mxu0 0
      %2294 = vmatpush.bf16.msra.mxu0 0
      %2295 = vmatpush.bf16.msra.mxu0 0
      %2296 = vmatpush.bf16.msra.mxu0 0
      %2297 = vmatpush.bf16.msra.mxu0 0
      %2298 = vmatpush.bf16.msra.mxu0 %v2046
      %2299 = vmatpush.bf16.msra.mxu0 %v2030
      %2300 = vmatmul.bf16.gmra.mxu0 %v2080
      %v2301 = vpop.f32.mrf.mxu0
      %v2302 = vadd.f32 %v1902, %v2301
      %v2303 = vpop.f32.mrf.mxu0
      %v2304 = vadd.f32 %v1902, %v2303
      %2305 = vdwg.mxu0
      %v2306 = vmax.f32 %v2092, 0.0
      %v2307 = vmax.f32 %v2106, 0.0
      %v2308 = vmax.f32 %v2120, 0.0
      %v2309 = vmax.f32 %v2134, 0.0
      %v2310 = vmax.f32 %v2148, 0.0
      %v2311 = vmax.f32 %v2162, 0.0
      %v2312 = vmax.f32 %v2176, 0.0
      %v2313 = vmax.f32 %v2190, 0.0
      %v2314 = vmax.f32 %v2204, 0.0
      %v2315 = vmax.f32 %v2218, 0.0
      %v2316 = vmax.f32 %v2232, 0.0
      %v2317 = vmax.f32 %v2246, 0.0
      %v2318 = vmax.f32 %v2260, 0.0
      %v2319 = vmax.f32 %v2274, 0.0
      %v2320 = vmax.f32 %v2288, 0.0
      %v2321 = vmax.f32 %v2302, 0.0
      %v2322 = vmax.f32 %v2094, 0.0
      %v2323 = vmax.f32 %v2108, 0.0
      %v2324 = vmax.f32 %v2122, 0.0
      %v2325 = vmax.f32 %v2136, 0.0
      %v2326 = vmax.f32 %v2150, 0.0
      %v2327 = vmax.f32 %v2164, 0.0
      %v2328 = vmax.f32 %v2178, 0.0
      %v2329 = vmax.f32 %v2192, 0.0
      %v2330 = vmax.f32 %v2206, 0.0
      %v2331 = vmax.f32 %v2220, 0.0
      %v2332 = vmax.f32 %v2234, 0.0
      %v2333 = vmax.f32 %v2248, 0.0
      %v2334 = vmax.f32 %v2262, 0.0
      %v2335 = vmax.f32 %v2276, 0.0
      %v2336 = vmax.f32 %v2290, 0.0
      %v2337 = vmax.f32 %v2304, 0.0
      %v2338 = vpack.c.bf16 %v2322, %v2306
      %v2339 = vpack.c.bf16 %v2323, %v2307
      %v2340 = vpack.c.bf16 %v2324, %v2308
      %v2341 = vpack.c.bf16 %v2325, %v2309
      %v2342 = vpack.c.bf16 %v2326, %v2310
      %v2343 = vpack.c.bf16 %v2327, %v2311
      %v2344 = vpack.c.bf16 %v2328, %v2312
      %v2345 = vpack.c.bf16 %v2329, %v2313
      %v2346 = vpack.c.bf16 %v2330, %v2314
      %v2347 = vpack.c.bf16 %v2331, %v2315
      %v2348 = vpack.c.bf16 %v2332, %v2316
      %v2349 = vpack.c.bf16 %v2333, %v2317
      %v2350 = vpack.c.bf16 %v2334, %v2318
      %v2351 = vpack.c.bf16 %v2335, %v2319
      %v2352 = vpack.c.bf16 %v2336, %v2320
      %v2353 = vpack.c.bf16 %v2337, %v2321
      %v2354 = vld [vmem:[%s710] sm:$0xf]
      %v2355 = vld [vmem:[%s710 + $0x4] sm:$0xf]
      %v2356 = vld [vmem:[%s710 + $0x8] sm:$0xf]
      %v2357 = vld [vmem:[%s710 + $0xc] sm:$0xf]
      %v2358 = vld [vmem:[%s710 + $0x10] sm:$0xf]
      %v2359 = vld [vmem:[%s710 + $0x14] sm:$0xf]
      %v2360 = vld [vmem:[%s710 + $0x18] sm:$0xf]
      %v2361 = vld [vmem:[%s710 + $0x1c] sm:$0xf]
      %v2362 = vld [vmem:[%s710 + $0x20] sm:$0xf]
      %v2363 = vld [vmem:[%s710 + $0x24] sm:$0xf]
      %v2364 = vld [vmem:[%s710 + $0x28] sm:$0xf]
      %v2365 = vld [vmem:[%s710 + $0x2c] sm:$0xf]
      %v2366 = vld [vmem:[%s710 + $0x30] sm:$0xf]
      %v2367 = vld [vmem:[%s710 + $0x34] sm:$0xf]
      %v2368 = vld [vmem:[%s710 + $0x38] sm:$0xf]
      %v2369 = vld [vmem:[%s710 + $0x3c] sm:$0xf]
      %v2370 = vld [vmem:[%s710 + $0x40] sm:$0xf]
      %v2371 = vld [vmem:[%s710 + $0x44] sm:$0xf]
      %v2372 = vld [vmem:[%s710 + $0x48] sm:$0xf]
      %v2373 = vld [vmem:[%s710 + $0x4c] sm:$0xf]
      %v2374 = vld [vmem:[%s710 + $0x50] sm:$0xf]
      %v2375 = vld [vmem:[%s710 + $0x54] sm:$0xf]
      %v2376 = vld [vmem:[%s710 + $0x58] sm:$0xf]
      %v2377 = vld [vmem:[%s710 + $0x5c] sm:$0xf]
      %v2378 = vld [vmem:[%s710 + $0x60] sm:$0xf]
      %v2379 = vld [vmem:[%s710 + $0x64] sm:$0xf]
      %v2380 = vld [vmem:[%s710 + $0x68] sm:$0xf]
      %v2381 = vld [vmem:[%s710 + $0x6c] sm:$0xf]
      %v2382 = vld [vmem:[%s710 + $0x70] sm:$0xf]
      %v2383 = vld [vmem:[%s710 + $0x74] sm:$0xf]
      %v2384 = vld [vmem:[%s710 + $0x78] sm:$0xf]
      %v2385 = vld [vmem:[%s710 + $0x7c] sm:$0xf]
      %v2386 = vld [vmem:[%s710 + $0x80] sm:$0xf]
      %v2387 = vld [vmem:[%s710 + $0x84] sm:$0xf]
      %v2388 = vld [vmem:[%s710 + $0x88] sm:$0xf]
      %v2389 = vld [vmem:[%s710 + $0x8c] sm:$0xf]
      %v2390 = vld [vmem:[%s710 + $0x90] sm:$0xf]
      %v2391 = vld [vmem:[%s710 + $0x94] sm:$0xf]
      %v2392 = vld [vmem:[%s710 + $0x98] sm:$0xf]
      %v2393 = vld [vmem:[%s710 + $0x9c] sm:$0xf]
      %v2394 = vld [vmem:[%s710 + $0xa0] sm:$0xf]
      %v2395 = vld [vmem:[%s710 + $0xa4] sm:$0xf]
      %v2396 = vld [vmem:[%s710 + $0xa8] sm:$0xf]
      %v2397 = vld [vmem:[%s710 + $0xac] sm:$0xf]
      %v2398 = vld [vmem:[%s710 + $0xb0] sm:$0xf]
      %v2399 = vld [vmem:[%s710 + $0xb4] sm:$0xf]
      %v2400 = vld [vmem:[%s710 + $0xb8] sm:$0xf]
      %v2401 = vld [vmem:[%s710 + $0xbc] sm:$0xf]
      %v2402 = vld [vmem:[%s710 + $0xc0] sm:$0xf]
      %v2403 = vld [vmem:[%s710 + $0xc4] sm:$0xf]
      %v2404 = vld [vmem:[%s710 + $0xc8] sm:$0xf]
      %v2405 = vld [vmem:[%s710 + $0xcc] sm:$0xf]
      %v2406 = vld [vmem:[%s710 + $0xd0] sm:$0xf]
      %v2407 = vld [vmem:[%s710 + $0xd4] sm:$0xf]
      %v2408 = vld [vmem:[%s710 + $0xd8] sm:$0xf]
      %v2409 = vld [vmem:[%s710 + $0xdc] sm:$0xf]
      %v2410 = vld [vmem:[%s710 + $0xe0] sm:$0xf]
      %v2411 = vld [vmem:[%s710 + $0xe4] sm:$0xf]
      %v2412 = vld [vmem:[%s710 + $0xe8] sm:$0xf]
      %v2413 = vld [vmem:[%s710 + $0xec] sm:$0xf]
      %v2414 = vld [vmem:[%s710 + $0xf0] sm:$0xf]
      %v2415 = vld [vmem:[%s710 + $0xf4] sm:$0xf]
      %v2416 = vld [vmem:[%s710 + $0xf8] sm:$0xf]
      %v2417 = vld [vmem:[%s710 + $0xfc] sm:$0xf]
      %v2418 = vld [vmem:[%s710 + $0x100] sm:$0xf]
      %v2419 = vld [vmem:[%s710 + $0x104] sm:$0xf]
      %v2420 = vld [vmem:[%s710 + $0x108] sm:$0xf]
      %v2421 = vld [vmem:[%s710 + $0x10c] sm:$0xf]
      %v2422 = vld [vmem:[%s710 + $0x110] sm:$0xf]
      %v2423 = vld [vmem:[%s710 + $0x114] sm:$0xf]
      %v2424 = vld [vmem:[%s710 + $0x118] sm:$0xf]
      %v2425 = vld [vmem:[%s710 + $0x11c] sm:$0xf]
      %v2426 = vld [vmem:[%s710 + $0x120] sm:$0xf]
      %v2427 = vld [vmem:[%s710 + $0x124] sm:$0xf]
      %v2428 = vld [vmem:[%s710 + $0x128] sm:$0xf]
      %v2429 = vld [vmem:[%s710 + $0x12c] sm:$0xf]
      %v2430 = vld [vmem:[%s710 + $0x130] sm:$0xf]
      %v2431 = vld [vmem:[%s710 + $0x134] sm:$0xf]
      %v2432 = vld [vmem:[%s710 + $0x138] sm:$0xf]
      %v2433 = vld [vmem:[%s710 + $0x13c] sm:$0xf]
      %v2434 = vld [vmem:[%s710 + $0x140] sm:$0xf]
      %v2435 = vld [vmem:[%s710 + $0x144] sm:$0xf]
      %v2436 = vld [vmem:[%s710 + $0x148] sm:$0xf]
      %v2437 = vld [vmem:[%s710 + $0x14c] sm:$0xf]
      %v2438 = vld [vmem:[%s710 + $0x150] sm:$0xf]
      %v2439 = vld [vmem:[%s710 + $0x154] sm:$0xf]
      %v2440 = vld [vmem:[%s710 + $0x158] sm:$0xf]
      %v2441 = vld [vmem:[%s710 + $0x15c] sm:$0xf]
      %v2442 = vld [vmem:[%s710 + $0x160] sm:$0xf]
      %v2443 = vld [vmem:[%s710 + $0x164] sm:$0xf]
      %v2444 = vld [vmem:[%s710 + $0x168] sm:$0xf]
      %v2445 = vld [vmem:[%s710 + $0x16c] sm:$0xf]
      %v2446 = vld [vmem:[%s710 + $0x170] sm:$0xf]
      %v2447 = vld [vmem:[%s710 + $0x174] sm:$0xf]
      %v2448 = vld [vmem:[%s710 + $0x178] sm:$0xf]
      %v2449 = vld [vmem:[%s710 + $0x17c] sm:$0xf]
      %v2450 = vld [vmem:[%s710 + $0x180] sm:$0xf]
      %v2451 = vld [vmem:[%s710 + $0x184] sm:$0xf]
      %v2452 = vld [vmem:[%s710 + $0x188] sm:$0xf]
      %v2453 = vld [vmem:[%s710 + $0x18c] sm:$0xf]
      %v2454 = vld [vmem:[%s710 + $0x190] sm:$0xf]
      %v2455 = vld [vmem:[%s710 + $0x194] sm:$0xf]
      %v2456 = vld [vmem:[%s710 + $0x198] sm:$0xf]
      %v2457 = vld [vmem:[%s710 + $0x19c] sm:$0xf]
      %v2458 = vld [vmem:[%s710 + $0x1a0] sm:$0xf]
      %v2459 = vld [vmem:[%s710 + $0x1a4] sm:$0xf]
      %v2460 = vld [vmem:[%s710 + $0x1a8] sm:$0xf]
      %v2461 = vld [vmem:[%s710 + $0x1ac] sm:$0xf]
      %v2462 = vld [vmem:[%s710 + $0x1b0] sm:$0xf]
      %v2463 = vld [vmem:[%s710 + $0x1b4] sm:$0xf]
      %v2464 = vld [vmem:[%s710 + $0x1b8] sm:$0xf]
      %v2465 = vld [vmem:[%s710 + $0x1bc] sm:$0xf]
      %v2466 = vld [vmem:[%s710 + $0x1c0] sm:$0xf]
      %v2467 = vld [vmem:[%s710 + $0x1c4] sm:$0xf]
      %v2468 = vld [vmem:[%s710 + $0x1c8] sm:$0xf]
      %v2469 = vld [vmem:[%s710 + $0x1cc] sm:$0xf]
      %v2470 = vld [vmem:[%s710 + $0x1d0] sm:$0xf]
      %v2471 = vld [vmem:[%s710 + $0x1d4] sm:$0xf]
      %v2472 = vld [vmem:[%s710 + $0x1d8] sm:$0xf]
      %v2473 = vld [vmem:[%s710 + $0x1dc] sm:$0xf]
      %v2474 = vld [vmem:[%s710 + $0x1e0] sm:$0xf]
      %v2475 = vld [vmem:[%s710 + $0x1e4] sm:$0xf]
      %v2476 = vld [vmem:[%s710 + $0x1e8] sm:$0xf]
      %v2477 = vld [vmem:[%s710 + $0x1ec] sm:$0xf]
      %v2478 = vld [vmem:[%s710 + $0x1f0] sm:$0xf]
      %v2479 = vld [vmem:[%s710 + $0x1f4] sm:$0xf]
      %v2480 = vld [vmem:[%s710 + $0x1f8] sm:$0xf]
      %v2481 = vld [vmem:[%s710 + $0x1fc] sm:$0xf]
      %v2482 = vld [vmem:[%s710 + $0x200] sm:$0xf]
      %v2483 = vld [vmem:[%s710 + $0x204] sm:$0xf]
      %v2484 = vld [vmem:[%s710 + $0x208] sm:$0xf]
      %v2485 = vld [vmem:[%s710 + $0x20c] sm:$0xf]
      %v2486 = vld [vmem:[%s710 + $0x210] sm:$0xf]
      %v2487 = vld [vmem:[%s710 + $0x214] sm:$0xf]
      %v2488 = vld [vmem:[%s710 + $0x218] sm:$0xf]
      %v2489 = vld [vmem:[%s710 + $0x21c] sm:$0xf]
      %v2490 = vld [vmem:[%s710 + $0x220] sm:$0xf]
      %v2491 = vld [vmem:[%s710 + $0x224] sm:$0xf]
      %v2492 = vld [vmem:[%s710 + $0x228] sm:$0xf]
      %v2493 = vld [vmem:[%s710 + $0x22c] sm:$0xf]
      %v2494 = vld [vmem:[%s710 + $0x230] sm:$0xf]
      %v2495 = vld [vmem:[%s710 + $0x234] sm:$0xf]
      %v2496 = vld [vmem:[%s710 + $0x238] sm:$0xf]
      %v2497 = vld [vmem:[%s710 + $0x23c] sm:$0xf]
      %v2498 = vld [vmem:[%s710 + $0x240] sm:$0xf]
      %v2499 = vld [vmem:[%s710 + $0x244] sm:$0xf]
      %v2500 = vld [vmem:[%s710 + $0x248] sm:$0xf]
      %v2501 = vld [vmem:[%s710 + $0x24c] sm:$0xf]
      %v2502 = vld [vmem:[%s710 + $0x250] sm:$0xf]
      %v2503 = vld [vmem:[%s710 + $0x254] sm:$0xf]
      %v2504 = vld [vmem:[%s710 + $0x258] sm:$0xf]
      %v2505 = vld [vmem:[%s710 + $0x25c] sm:$0xf]
      %v2506 = vld [vmem:[%s710 + $0x260] sm:$0xf]
      %v2507 = vld [vmem:[%s710 + $0x264] sm:$0xf]
      %v2508 = vld [vmem:[%s710 + $0x268] sm:$0xf]
      %v2509 = vld [vmem:[%s710 + $0x26c] sm:$0xf]
      %v2510 = vld [vmem:[%s710 + $0x270] sm:$0xf]
      %v2511 = vld [vmem:[%s710 + $0x274] sm:$0xf]
      %v2512 = vld [vmem:[%s710 + $0x278] sm:$0xf]
      %v2513 = vld [vmem:[%s710 + $0x27c] sm:$0xf]
      %v2514 = vld [vmem:[%s710 + $0x280] sm:$0xf]
      %v2515 = vld [vmem:[%s710 + $0x284] sm:$0xf]
      %v2516 = vld [vmem:[%s710 + $0x288] sm:$0xf]
      %v2517 = vld [vmem:[%s710 + $0x28c] sm:$0xf]
      %v2518 = vld [vmem:[%s710 + $0x290] sm:$0xf]
      %v2519 = vld [vmem:[%s710 + $0x294] sm:$0xf]
      %v2520 = vld [vmem:[%s710 + $0x298] sm:$0xf]
      %v2521 = vld [vmem:[%s710 + $0x29c] sm:$0xf]
      %v2522 = vld [vmem:[%s710 + $0x2a0] sm:$0xf]
      %v2523 = vld [vmem:[%s710 + $0x2a4] sm:$0xf]
      %v2524 = vld [vmem:[%s710 + $0x2a8] sm:$0xf]
      %v2525 = vld [vmem:[%s710 + $0x2ac] sm:$0xf]
      %v2526 = vld [vmem:[%s710 + $0x2b0] sm:$0xf]
      %v2527 = vld [vmem:[%s710 + $0x2b4] sm:$0xf]
      %v2528 = vld [vmem:[%s710 + $0x2b8] sm:$0xf]
      %v2529 = vld [vmem:[%s710 + $0x2bc] sm:$0xf]
      %v2530 = vld [vmem:[%s710 + $0x2c0] sm:$0xf]
      %v2531 = vld [vmem:[%s710 + $0x2c4] sm:$0xf]
      %v2532 = vld [vmem:[%s710 + $0x2c8] sm:$0xf]
      %v2533 = vld [vmem:[%s710 + $0x2cc] sm:$0xf]
      %v2534 = vld [vmem:[%s710 + $0x2d0] sm:$0xf]
      %v2535 = vld [vmem:[%s710 + $0x2d4] sm:$0xf]
      %v2536 = vld [vmem:[%s710 + $0x2d8] sm:$0xf]
      %v2537 = vld [vmem:[%s710 + $0x2dc] sm:$0xf]
      %v2538 = vld [vmem:[%s710 + $0x2e0] sm:$0xf]
      %v2539 = vld [vmem:[%s710 + $0x2e4] sm:$0xf]
      %v2540 = vld [vmem:[%s710 + $0x2e8] sm:$0xf]
      %v2541 = vld [vmem:[%s710 + $0x2ec] sm:$0xf]
      %v2542 = vld [vmem:[%s710 + $0x2f0] sm:$0xf]
      %v2543 = vld [vmem:[%s710 + $0x2f4] sm:$0xf]
      %v2544 = vld [vmem:[%s710 + $0x2f8] sm:$0xf]
      %v2545 = vld [vmem:[%s710 + $0x2fc] sm:$0xf]
      %v2546 = vld [vmem:[%s710 + $0x300] sm:$0xf]
      %v2547 = vld [vmem:[%s710 + $0x304] sm:$0xf]
      %v2548 = vld [vmem:[%s710 + $0x308] sm:$0xf]
      %v2549 = vld [vmem:[%s710 + $0x30c] sm:$0xf]
      %v2550 = vld [vmem:[%s710 + $0x310] sm:$0xf]
      %v2551 = vld [vmem:[%s710 + $0x314] sm:$0xf]
      %v2552 = vld [vmem:[%s710 + $0x318] sm:$0xf]
      %v2553 = vld [vmem:[%s710 + $0x31c] sm:$0xf]
      %v2554 = vld [vmem:[%s710 + $0x320] sm:$0xf]
      %v2555 = vld [vmem:[%s710 + $0x324] sm:$0xf]
      %v2556 = vld [vmem:[%s710 + $0x328] sm:$0xf]
      %v2557 = vld [vmem:[%s710 + $0x32c] sm:$0xf]
      %v2558 = vld [vmem:[%s710 + $0x330] sm:$0xf]
      %v2559 = vld [vmem:[%s710 + $0x334] sm:$0xf]
      %v2560 = vld [vmem:[%s710 + $0x338] sm:$0xf]
      %v2561 = vld [vmem:[%s710 + $0x33c] sm:$0xf]
      %v2562 = vld [vmem:[%s710 + $0x340] sm:$0xf]
      %v2563 = vld [vmem:[%s710 + $0x344] sm:$0xf]
      %v2564 = vld [vmem:[%s710 + $0x348] sm:$0xf]
      %v2565 = vld [vmem:[%s710 + $0x34c] sm:$0xf]
      %v2566 = vld [vmem:[%s710 + $0x350] sm:$0xf]
      %v2567 = vld [vmem:[%s710 + $0x354] sm:$0xf]
      %v2568 = vld [vmem:[%s710 + $0x358] sm:$0xf]
      %v2569 = vld [vmem:[%s710 + $0x35c] sm:$0xf]
      %v2570 = vld [vmem:[%s710 + $0x360] sm:$0xf]
      %v2571 = vld [vmem:[%s710 + $0x364] sm:$0xf]
      %v2572 = vld [vmem:[%s710 + $0x368] sm:$0xf]
      %v2573 = vld [vmem:[%s710 + $0x36c] sm:$0xf]
      %v2574 = vld [vmem:[%s710 + $0x370] sm:$0xf]
      %v2575 = vld [vmem:[%s710 + $0x374] sm:$0xf]
      %v2576 = vld [vmem:[%s710 + $0x378] sm:$0xf]
      %v2577 = vld [vmem:[%s710 + $0x37c] sm:$0xf]
      %v2578 = vld [vmem:[%s710 + $0x380] sm:$0xf]
      %v2579 = vld [vmem:[%s710 + $0x384] sm:$0xf]
      %v2580 = vld [vmem:[%s710 + $0x388] sm:$0xf]
      %v2581 = vld [vmem:[%s710 + $0x38c] sm:$0xf]
      %v2582 = vld [vmem:[%s710 + $0x390] sm:$0xf]
      %v2583 = vld [vmem:[%s710 + $0x394] sm:$0xf]
      %v2584 = vld [vmem:[%s710 + $0x398] sm:$0xf]
      %v2585 = vld [vmem:[%s710 + $0x39c] sm:$0xf]
      %v2586 = vld [vmem:[%s710 + $0x3a0] sm:$0xf]
      %v2587 = vld [vmem:[%s710 + $0x3a4] sm:$0xf]
      %v2588 = vld [vmem:[%s710 + $0x3a8] sm:$0xf]
      %v2589 = vld [vmem:[%s710 + $0x3ac] sm:$0xf]
      %v2590 = vld [vmem:[%s710 + $0x3b0] sm:$0xf]
      %v2591 = vld [vmem:[%s710 + $0x3b4] sm:$0xf]
      %v2592 = vld [vmem:[%s710 + $0x3b8] sm:$0xf]
      %v2593 = vld [vmem:[%s710 + $0x3bc] sm:$0xf]
      %v2594 = vld [vmem:[%s710 + $0x3c0] sm:$0xf]
      %v2595 = vld [vmem:[%s710 + $0x3c4] sm:$0xf]
      %v2596 = vld [vmem:[%s710 + $0x3c8] sm:$0xf]
      %v2597 = vld [vmem:[%s710 + $0x3cc] sm:$0xf]
      %v2598 = vld [vmem:[%s710 + $0x3d0] sm:$0xf]
      %v2599 = vld [vmem:[%s710 + $0x3d4] sm:$0xf]
      %v2600 = vld [vmem:[%s710 + $0x3d8] sm:$0xf]
      %v2601 = vld [vmem:[%s710 + $0x3dc] sm:$0xf]
      %v2602 = vld [vmem:[%s710 + $0x3e0] sm:$0xf]
      %v2603 = vld [vmem:[%s710 + $0x3e4] sm:$0xf]
      %v2604 = vld [vmem:[%s710 + $0x3e8] sm:$0xf]
      %v2605 = vld [vmem:[%s710 + $0x3ec] sm:$0xf]
      %v2606 = vld [vmem:[%s710 + $0x3f0] sm:$0xf]
      %v2607 = vld [vmem:[%s710 + $0x3f4] sm:$0xf]
      %v2608 = vld [vmem:[%s710 + $0x3f8] sm:$0xf]
      %v2609 = vld [vmem:[%s710 + $0x3fc] sm:$0xf]
      %v2610 = vld [vmem:[%s713] sm:$0x1]
      %v2612 = vperm.slane %v2610, 0
      %v2870 = vunpack.c.l.b16 %v2354
      %v2871 = vunpack.c.l.b16 %v2355
      %v2872 = vunpack.c.l.b16 %v2356
      %v2873 = vunpack.c.l.b16 %v2357
      %v2874 = vunpack.c.l.b16 %v2358
      %v2875 = vunpack.c.l.b16 %v2359
      %v2876 = vunpack.c.l.b16 %v2360
      %v2877 = vunpack.c.l.b16 %v2361
      %v2878 = vunpack.c.l.b16 %v2362
      %v2879 = vunpack.c.l.b16 %v2363
      %v2880 = vunpack.c.l.b16 %v2364
      %v2881 = vunpack.c.l.b16 %v2365
      %v2882 = vunpack.c.l.b16 %v2366
      %v2883 = vunpack.c.l.b16 %v2367
      %v2884 = vunpack.c.l.b16 %v2368
      %v2885 = vunpack.c.l.b16 %v2369
      %v2886 = vunpack.c.l.b16 %v2370
      %v2887 = vunpack.c.l.b16 %v2371
      %v2888 = vunpack.c.l.b16 %v2372
      %v2889 = vunpack.c.l.b16 %v2373
      %v2890 = vunpack.c.l.b16 %v2374
      %v2891 = vunpack.c.l.b16 %v2375
      %v2892 = vunpack.c.l.b16 %v2376
      %v2893 = vunpack.c.l.b16 %v2377
      %v2894 = vunpack.c.l.b16 %v2378
      %v2895 = vunpack.c.l.b16 %v2379
      %v2896 = vunpack.c.l.b16 %v2380
      %v2897 = vunpack.c.l.b16 %v2381
      %v2898 = vunpack.c.l.b16 %v2382
      %v2899 = vunpack.c.l.b16 %v2383
      %v2900 = vunpack.c.l.b16 %v2384
      %v2901 = vunpack.c.l.b16 %v2385
      %v2902 = vunpack.c.l.b16 %v2386
      %v2903 = vunpack.c.l.b16 %v2387
      %v2904 = vunpack.c.l.b16 %v2388
      %v2905 = vunpack.c.l.b16 %v2389
      %v2906 = vunpack.c.l.b16 %v2390
      %v2907 = vunpack.c.l.b16 %v2391
      %v2908 = vunpack.c.l.b16 %v2392
      %v2909 = vunpack.c.l.b16 %v2393
      %v2910 = vunpack.c.l.b16 %v2394
      %v2911 = vunpack.c.l.b16 %v2395
      %v2912 = vunpack.c.l.b16 %v2396
      %v2913 = vunpack.c.l.b16 %v2397
      %v2914 = vunpack.c.l.b16 %v2398
      %v2915 = vunpack.c.l.b16 %v2399
      %v2916 = vunpack.c.l.b16 %v2400
      %v2917 = vunpack.c.l.b16 %v2401
      %v2918 = vunpack.c.l.b16 %v2402
      %v2919 = vunpack.c.l.b16 %v2403
      %v2920 = vunpack.c.l.b16 %v2404
      %v2921 = vunpack.c.l.b16 %v2405
      %v2922 = vunpack.c.l.b16 %v2406
      %v2923 = vunpack.c.l.b16 %v2407
      %v2924 = vunpack.c.l.b16 %v2408
      %v2925 = vunpack.c.l.b16 %v2409
      %v2926 = vunpack.c.l.b16 %v2410
      %v2927 = vunpack.c.l.b16 %v2411
      %v2928 = vunpack.c.l.b16 %v2412
      %v2929 = vunpack.c.l.b16 %v2413
      %v2930 = vunpack.c.l.b16 %v2414
      %v2931 = vunpack.c.l.b16 %v2415
      %v2932 = vunpack.c.l.b16 %v2416
      %v2933 = vunpack.c.l.b16 %v2417
      %v2934 = vunpack.c.l.b16 %v2418
      %v2935 = vunpack.c.l.b16 %v2419
      %v2936 = vunpack.c.l.b16 %v2420
      %v2937 = vunpack.c.l.b16 %v2421
      %v2938 = vunpack.c.l.b16 %v2422
      %v2939 = vunpack.c.l.b16 %v2423
      %v2940 = vunpack.c.l.b16 %v2424
      %v2941 = vunpack.c.l.b16 %v2425
      %v2942 = vunpack.c.l.b16 %v2426
      %v2943 = vunpack.c.l.b16 %v2427
      %v2944 = vunpack.c.l.b16 %v2428
      %v2945 = vunpack.c.l.b16 %v2429
      %v2946 = vunpack.c.l.b16 %v2430
      %v2947 = vunpack.c.l.b16 %v2431
      %v2948 = vunpack.c.l.b16 %v2432
      %v2949 = vunpack.c.l.b16 %v2433
      %v2950 = vunpack.c.l.b16 %v2434
      %v2951 = vunpack.c.l.b16 %v2435
      %v2952 = vunpack.c.l.b16 %v2436
      %v2953 = vunpack.c.l.b16 %v2437
      %v2954 = vunpack.c.l.b16 %v2438
      %v2955 = vunpack.c.l.b16 %v2439
      %v2956 = vunpack.c.l.b16 %v2440
      %v2957 = vunpack.c.l.b16 %v2441
      %v2958 = vunpack.c.l.b16 %v2442
      %v2959 = vunpack.c.l.b16 %v2443
      %v2960 = vunpack.c.l.b16 %v2444
      %v2961 = vunpack.c.l.b16 %v2445
      %v2962 = vunpack.c.l.b16 %v2446
      %v2963 = vunpack.c.l.b16 %v2447
      %v2964 = vunpack.c.l.b16 %v2448
      %v2965 = vunpack.c.l.b16 %v2449
      %v2966 = vunpack.c.l.b16 %v2450
      %v2967 = vunpack.c.l.b16 %v2451
      %v2968 = vunpack.c.l.b16 %v2452
      %v2969 = vunpack.c.l.b16 %v2453
      %v2970 = vunpack.c.l.b16 %v2454
      %v2971 = vunpack.c.l.b16 %v2455
      %v2972 = vunpack.c.l.b16 %v2456
      %v2973 = vunpack.c.l.b16 %v2457
      %v2974 = vunpack.c.l.b16 %v2458
      %v2975 = vunpack.c.l.b16 %v2459
      %v2976 = vunpack.c.l.b16 %v2460
      %v2977 = vunpack.c.l.b16 %v2461
      %v2978 = vunpack.c.l.b16 %v2462
      %v2979 = vunpack.c.l.b16 %v2463
      %v2980 = vunpack.c.l.b16 %v2464
      %v2981 = vunpack.c.l.b16 %v2465
      %v2982 = vunpack.c.l.b16 %v2466
      %v2983 = vunpack.c.l.b16 %v2467
      %v2984 = vunpack.c.l.b16 %v2468
      %v2985 = vunpack.c.l.b16 %v2469
      %v2986 = vunpack.c.l.b16 %v2470
      %v2987 = vunpack.c.l.b16 %v2471
      %v2988 = vunpack.c.l.b16 %v2472
      %v2989 = vunpack.c.l.b16 %v2473
      %v2990 = vunpack.c.l.b16 %v2474
      %v2991 = vunpack.c.l.b16 %v2475
      %v2992 = vunpack.c.l.b16 %v2476
      %v2993 = vunpack.c.l.b16 %v2477
      %v2994 = vunpack.c.l.b16 %v2478
      %v2995 = vunpack.c.l.b16 %v2479
      %v2996 = vunpack.c.l.b16 %v2480
      %v2997 = vunpack.c.l.b16 %v2481
      %v2998 = vunpack.c.l.b16 %v2482
      %v2999 = vunpack.c.l.b16 %v2483
      %v3000 = vunpack.c.l.b16 %v2484
      %v3001 = vunpack.c.l.b16 %v2485
      %v3002 = vunpack.c.l.b16 %v2486
      %v3003 = vunpack.c.l.b16 %v2487
      %v3004 = vunpack.c.l.b16 %v2488
      %v3005 = vunpack.c.l.b16 %v2489
      %v3006 = vunpack.c.l.b16 %v2490
      %v3007 = vunpack.c.l.b16 %v2491
      %v3008 = vunpack.c.l.b16 %v2492
      %v3009 = vunpack.c.l.b16 %v2493
      %v3010 = vunpack.c.l.b16 %v2494
      %v3011 = vunpack.c.l.b16 %v2495
      %v3012 = vunpack.c.l.b16 %v2496
      %v3013 = vunpack.c.l.b16 %v2497
      %v3014 = vunpack.c.l.b16 %v2498
      %v3015 = vunpack.c.l.b16 %v2499
      %v3016 = vunpack.c.l.b16 %v2500
      %v3017 = vunpack.c.l.b16 %v2501
      %v3018 = vunpack.c.l.b16 %v2502
      %v3019 = vunpack.c.l.b16 %v2503
      %v3020 = vunpack.c.l.b16 %v2504
      %v3021 = vunpack.c.l.b16 %v2505
      %v3022 = vunpack.c.l.b16 %v2506
      %v3023 = vunpack.c.l.b16 %v2507
      %v3024 = vunpack.c.l.b16 %v2508
      %v3025 = vunpack.c.l.b16 %v2509
      %v3026 = vunpack.c.l.b16 %v2510
      %v3027 = vunpack.c.l.b16 %v2511
      %v3028 = vunpack.c.l.b16 %v2512
      %v3029 = vunpack.c.l.b16 %v2513
      %v3030 = vunpack.c.l.b16 %v2514
      %v3031 = vunpack.c.l.b16 %v2515
      %v3032 = vunpack.c.l.b16 %v2516
      %v3033 = vunpack.c.l.b16 %v2517
      %v3034 = vunpack.c.l.b16 %v2518
      %v3035 = vunpack.c.l.b16 %v2519
      %v3036 = vunpack.c.l.b16 %v2520
      %v3037 = vunpack.c.l.b16 %v2521
      %v3038 = vunpack.c.l.b16 %v2522
      %v3039 = vunpack.c.l.b16 %v2523
      %v3040 = vunpack.c.l.b16 %v2524
      %v3041 = vunpack.c.l.b16 %v2525
      %v3042 = vunpack.c.l.b16 %v2526
      %v3043 = vunpack.c.l.b16 %v2527
      %v3044 = vunpack.c.l.b16 %v2528
      %v3045 = vunpack.c.l.b16 %v2529
      %v3046 = vunpack.c.l.b16 %v2530
      %v3047 = vunpack.c.l.b16 %v2531
      %v3048 = vunpack.c.l.b16 %v2532
      %v3049 = vunpack.c.l.b16 %v2533
      %v3050 = vunpack.c.l.b16 %v2534
      %v3051 = vunpack.c.l.b16 %v2535
      %v3052 = vunpack.c.l.b16 %v2536
      %v3053 = vunpack.c.l.b16 %v2537
      %v3054 = vunpack.c.l.b16 %v2538
      %v3055 = vunpack.c.l.b16 %v2539
      %v3056 = vunpack.c.l.b16 %v2540
      %v3057 = vunpack.c.l.b16 %v2541
      %v3058 = vunpack.c.l.b16 %v2542
      %v3059 = vunpack.c.l.b16 %v2543
      %v3060 = vunpack.c.l.b16 %v2544
      %v3061 = vunpack.c.l.b16 %v2545
      %v3062 = vunpack.c.l.b16 %v2546
      %v3063 = vunpack.c.l.b16 %v2547
      %v3064 = vunpack.c.l.b16 %v2548
      %v3065 = vunpack.c.l.b16 %v2549
      %v3066 = vunpack.c.l.b16 %v2550
      %v3067 = vunpack.c.l.b16 %v2551
      %v3068 = vunpack.c.l.b16 %v2552
      %v3069 = vunpack.c.l.b16 %v2553
      %v3070 = vunpack.c.l.b16 %v2554
      %v3071 = vunpack.c.l.b16 %v2555
      %v3072 = vunpack.c.l.b16 %v2556
      %v3073 = vunpack.c.l.b16 %v2557
      %v3074 = vunpack.c.l.b16 %v2558
      %v3075 = vunpack.c.l.b16 %v2559
      %v3076 = vunpack.c.l.b16 %v2560
      %v3077 = vunpack.c.l.b16 %v2561
      %v3078 = vunpack.c.l.b16 %v2562
      %v3079 = vunpack.c.l.b16 %v2563
      %v3080 = vunpack.c.l.b16 %v2564
      %v3081 = vunpack.c.l.b16 %v2565
      %v3082 = vunpack.c.l.b16 %v2566
      %v3083 = vunpack.c.l.b16 %v2567
      %v3084 = vunpack.c.l.b16 %v2568
      %v3085 = vunpack.c.l.b16 %v2569
      %v3086 = vunpack.c.l.b16 %v2570
      %v3087 = vunpack.c.l.b16 %v2571
      %v3088 = vunpack.c.l.b16 %v2572
      %v3089 = vunpack.c.l.b16 %v2573
      %v3090 = vunpack.c.l.b16 %v2574
      %v3091 = vunpack.c.l.b16 %v2575
      %v3092 = vunpack.c.l.b16 %v2576
      %v3093 = vunpack.c.l.b16 %v2577
      %v3094 = vunpack.c.l.b16 %v2578
      %v3095 = vunpack.c.l.b16 %v2579
      %v3096 = vunpack.c.l.b16 %v2580
      %v3097 = vunpack.c.l.b16 %v2581
      %v3098 = vunpack.c.l.b16 %v2582
      %v3099 = vunpack.c.l.b16 %v2583
      %v3100 = vunpack.c.l.b16 %v2584
      %v3101 = vunpack.c.l.b16 %v2585
      %v3102 = vunpack.c.l.b16 %v2586
      %v3103 = vunpack.c.l.b16 %v2587
      %v3104 = vunpack.c.l.b16 %v2588
      %v3105 = vunpack.c.l.b16 %v2589
      %v3106 = vunpack.c.l.b16 %v2590
      %v3107 = vunpack.c.l.b16 %v2591
      %v3108 = vunpack.c.l.b16 %v2592
      %v3109 = vunpack.c.l.b16 %v2593
      %v3110 = vunpack.c.l.b16 %v2594
      %v3111 = vunpack.c.l.b16 %v2595
      %v3112 = vunpack.c.l.b16 %v2596
      %v3113 = vunpack.c.l.b16 %v2597
      %v3114 = vunpack.c.l.b16 %v2598
      %v3115 = vunpack.c.l.b16 %v2599
      %v3116 = vunpack.c.l.b16 %v2600
      %v3117 = vunpack.c.l.b16 %v2601
      %v3118 = vunpack.c.l.b16 %v2602
      %v3119 = vunpack.c.l.b16 %v2603
      %v3120 = vunpack.c.l.b16 %v2604
      %v3121 = vunpack.c.l.b16 %v2605
      %v3122 = vunpack.c.l.b16 %v2606
      %v3123 = vunpack.c.l.b16 %v2607
      %v3124 = vunpack.c.l.b16 %v2608
      %v3125 = vunpack.c.l.b16 %v2609
      %v3126 = vpack.c.b16 %v2871, %v2870
      %v3127 = vpack.c.b16 %v2873, %v2872
      %v3128 = vpack.c.b16 %v2875, %v2874
      %v3129 = vpack.c.b16 %v2877, %v2876
      %v3130 = vpack.c.b16 %v2879, %v2878
      %v3131 = vpack.c.b16 %v2881, %v2880
      %v3132 = vpack.c.b16 %v2883, %v2882
      %v3133 = vpack.c.b16 %v2885, %v2884
      %v3134 = vpack.c.b16 %v2887, %v2886
      %v3135 = vpack.c.b16 %v2889, %v2888
      %v3136 = vpack.c.b16 %v2891, %v2890
      %v3137 = vpack.c.b16 %v2893, %v2892
      %v3138 = vpack.c.b16 %v2895, %v2894
      %v3139 = vpack.c.b16 %v2897, %v2896
      %v3140 = vpack.c.b16 %v2899, %v2898
      %v3141 = vpack.c.b16 %v2901, %v2900
      %v3142 = vpack.c.b16 %v2903, %v2902
      %v3143 = vpack.c.b16 %v2905, %v2904
      %v3144 = vpack.c.b16 %v2907, %v2906
      %v3145 = vpack.c.b16 %v2909, %v2908
      %v3146 = vpack.c.b16 %v2911, %v2910
      %v3147 = vpack.c.b16 %v2913, %v2912
      %v3148 = vpack.c.b16 %v2915, %v2914
      %v3149 = vpack.c.b16 %v2917, %v2916
      %v3150 = vpack.c.b16 %v2919, %v2918
      %v3151 = vpack.c.b16 %v2921, %v2920
      %v3152 = vpack.c.b16 %v2923, %v2922
      %v3153 = vpack.c.b16 %v2925, %v2924
      %v3154 = vpack.c.b16 %v2927, %v2926
      %v3155 = vpack.c.b16 %v2929, %v2928
      %v3156 = vpack.c.b16 %v2931, %v2930
      %v3157 = vpack.c.b16 %v2933, %v2932
      %v3158 = vpack.c.b16 %v2935, %v2934
      %v3159 = vpack.c.b16 %v2937, %v2936
      %v3160 = vpack.c.b16 %v2939, %v2938
      %v3161 = vpack.c.b16 %v2941, %v2940
      %v3162 = vpack.c.b16 %v2943, %v2942
      %v3163 = vpack.c.b16 %v2945, %v2944
      %v3164 = vpack.c.b16 %v2947, %v2946
      %v3165 = vpack.c.b16 %v2949, %v2948
      %v3166 = vpack.c.b16 %v2951, %v2950
      %v3167 = vpack.c.b16 %v2953, %v2952
      %v3168 = vpack.c.b16 %v2955, %v2954
      %v3169 = vpack.c.b16 %v2957, %v2956
      %v3170 = vpack.c.b16 %v2959, %v2958
      %v3171 = vpack.c.b16 %v2961, %v2960
      %v3172 = vpack.c.b16 %v2963, %v2962
      %v3173 = vpack.c.b16 %v2965, %v2964
      %v3174 = vpack.c.b16 %v2967, %v2966
      %v3175 = vpack.c.b16 %v2969, %v2968
      %v3176 = vpack.c.b16 %v2971, %v2970
      %v3177 = vpack.c.b16 %v2973, %v2972
      %v3178 = vpack.c.b16 %v2975, %v2974
      %v3179 = vpack.c.b16 %v2977, %v2976
      %v3180 = vpack.c.b16 %v2979, %v2978
      %v3181 = vpack.c.b16 %v2981, %v2980
      %v3182 = vpack.c.b16 %v2983, %v2982
      %v3183 = vpack.c.b16 %v2985, %v2984
      %v3184 = vpack.c.b16 %v2987, %v2986
      %v3185 = vpack.c.b16 %v2989, %v2988
      %v3186 = vpack.c.b16 %v2991, %v2990
      %v3187 = vpack.c.b16 %v2993, %v2992
      %v3188 = vpack.c.b16 %v2995, %v2994
      %v3189 = vpack.c.b16 %v2997, %v2996
      %v3190 = vpack.c.b16 %v2999, %v2998
      %v3191 = vpack.c.b16 %v3001, %v3000
      %v3192 = vpack.c.b16 %v3003, %v3002
      %v3193 = vpack.c.b16 %v3005, %v3004
      %v3194 = vpack.c.b16 %v3007, %v3006
      %v3195 = vpack.c.b16 %v3009, %v3008
      %v3196 = vpack.c.b16 %v3011, %v3010
      %v3197 = vpack.c.b16 %v3013, %v3012
      %v3198 = vpack.c.b16 %v3015, %v3014
      %v3199 = vpack.c.b16 %v3017, %v3016
      %v3200 = vpack.c.b16 %v3019, %v3018
      %v3201 = vpack.c.b16 %v3021, %v3020
      %v3202 = vpack.c.b16 %v3023, %v3022
      %v3203 = vpack.c.b16 %v3025, %v3024
      %v3204 = vpack.c.b16 %v3027, %v3026
      %v3205 = vpack.c.b16 %v3029, %v3028
      %v3206 = vpack.c.b16 %v3031, %v3030
      %v3207 = vpack.c.b16 %v3033, %v3032
      %v3208 = vpack.c.b16 %v3035, %v3034
      %v3209 = vpack.c.b16 %v3037, %v3036
      %v3210 = vpack.c.b16 %v3039, %v3038
      %v3211 = vpack.c.b16 %v3041, %v3040
      %v3212 = vpack.c.b16 %v3043, %v3042
      %v3213 = vpack.c.b16 %v3045, %v3044
      %v3214 = vpack.c.b16 %v3047, %v3046
      %v3215 = vpack.c.b16 %v3049, %v3048
      %v3216 = vpack.c.b16 %v3051, %v3050
      %v3217 = vpack.c.b16 %v3053, %v3052
      %v3218 = vpack.c.b16 %v3055, %v3054
      %v3219 = vpack.c.b16 %v3057, %v3056
      %v3220 = vpack.c.b16 %v3059, %v3058
      %v3221 = vpack.c.b16 %v3061, %v3060
      %v3222 = vpack.c.b16 %v3063, %v3062
      %v3223 = vpack.c.b16 %v3065, %v3064
      %v3224 = vpack.c.b16 %v3067, %v3066
      %v3225 = vpack.c.b16 %v3069, %v3068
      %v3226 = vpack.c.b16 %v3071, %v3070
      %v3227 = vpack.c.b16 %v3073, %v3072
      %v3228 = vpack.c.b16 %v3075, %v3074
      %v3229 = vpack.c.b16 %v3077, %v3076
      %v3230 = vpack.c.b16 %v3079, %v3078
      %v3231 = vpack.c.b16 %v3081, %v3080
      %v3232 = vpack.c.b16 %v3083, %v3082
      %v3233 = vpack.c.b16 %v3085, %v3084
      %v3234 = vpack.c.b16 %v3087, %v3086
      %v3235 = vpack.c.b16 %v3089, %v3088
      %v3236 = vpack.c.b16 %v3091, %v3090
      %v3237 = vpack.c.b16 %v3093, %v3092
      %v3238 = vpack.c.b16 %v3095, %v3094
      %v3239 = vpack.c.b16 %v3097, %v3096
      %v3240 = vpack.c.b16 %v3099, %v3098
      %v3241 = vpack.c.b16 %v3101, %v3100
      %v3242 = vpack.c.b16 %v3103, %v3102
      %v3243 = vpack.c.b16 %v3105, %v3104
      %v3244 = vpack.c.b16 %v3107, %v3106
      %v3245 = vpack.c.b16 %v3109, %v3108
      %v3246 = vpack.c.b16 %v3111, %v3110
      %v3247 = vpack.c.b16 %v3113, %v3112
      %v3248 = vpack.c.b16 %v3115, %v3114
      %v3249 = vpack.c.b16 %v3117, %v3116
      %v3250 = vpack.c.b16 %v3119, %v3118
      %v3251 = vpack.c.b16 %v3121, %v3120
      %v3252 = vpack.c.b16 %v3123, %v3122
      %v3253 = vpack.c.b16 %v3125, %v3124
      %3382 = vmatpush.bf16.msra.mxu0 %v3133
      %3383 = vmatpush.bf16.msra.mxu0 %v3132
      %3384 = vmatpush.bf16.msra.mxu0 %v3131
      %3385 = vmatpush.bf16.msra.mxu0 %v3130
      %3386 = vmatpush.bf16.msra.mxu0 %v3129
      %3387 = vmatpush.bf16.msra.mxu0 %v3128
      %3388 = vmatpush.bf16.msra.mxu0 %v3127
      %3389 = vmatpush.bf16.msra.mxu0 %v3126
      %3390 = vmatmul.bf16.gmra.mxu0 %v2338
      %v3391 = vpop.f32.mrf.mxu0
      %v3392 = vadd.f32 %v2612, %v3391
      %v3393 = vpop.f32.mrf.mxu0
      %v3394 = vadd.f32 %v2612, %v3393
      %3395 = vdwg.mxu0
      %3396 = vmatpush.bf16.msra.mxu0 %v3141
      %3397 = vmatpush.bf16.msra.mxu0 %v3140
      %3398 = vmatpush.bf16.msra.mxu0 %v3139
      %3399 = vmatpush.bf16.msra.mxu0 %v3138
      %3400 = vmatpush.bf16.msra.mxu0 %v3137
      %3401 = vmatpush.bf16.msra.mxu0 %v3136
      %3402 = vmatpush.bf16.msra.mxu0 %v3135
      %3403 = vmatpush.bf16.msra.mxu0 %v3134
      %3404 = vmatmul.bf16.gmra.mxu0 %v2339
      %v3405 = vpop.f32.mrf.mxu0
      %v3406 = vadd.f32 %v3392, %v3405
      %v3407 = vpop.f32.mrf.mxu0
      %v3408 = vadd.f32 %v3394, %v3407
      %3409 = vdwg.mxu0
      %3410 = vmatpush.bf16.msra.mxu0 %v3149
      %3411 = vmatpush.bf16.msra.mxu0 %v3148
      %3412 = vmatpush.bf16.msra.mxu0 %v3147
      %3413 = vmatpush.bf16.msra.mxu0 %v3146
      %3414 = vmatpush.bf16.msra.mxu0 %v3145
      %3415 = vmatpush.bf16.msra.mxu0 %v3144
      %3416 = vmatpush.bf16.msra.mxu0 %v3143
      %3417 = vmatpush.bf16.msra.mxu0 %v3142
      %3418 = vmatmul.bf16.gmra.mxu0 %v2340
      %v3419 = vpop.f32.mrf.mxu0
      %v3420 = vadd.f32 %v3406, %v3419
      %v3421 = vpop.f32.mrf.mxu0
      %v3422 = vadd.f32 %v3408, %v3421
      %3423 = vdwg.mxu0
      %3424 = vmatpush.bf16.msra.mxu0 %v3157
      %3425 = vmatpush.bf16.msra.mxu0 %v3156
      %3426 = vmatpush.bf16.msra.mxu0 %v3155
      %3427 = vmatpush.bf16.msra.mxu0 %v3154
      %3428 = vmatpush.bf16.msra.mxu0 %v3153
      %3429 = vmatpush.bf16.msra.mxu0 %v3152
      %3430 = vmatpush.bf16.msra.mxu0 %v3151
      %3431 = vmatpush.bf16.msra.mxu0 %v3150
      %3432 = vmatmul.bf16.gmra.mxu0 %v2341
      %v3433 = vpop.f32.mrf.mxu0
      %v3434 = vadd.f32 %v3420, %v3433
      %v3435 = vpop.f32.mrf.mxu0
      %v3436 = vadd.f32 %v3422, %v3435
      %3437 = vdwg.mxu0
      %3438 = vmatpush.bf16.msra.mxu0 %v3165
      %3439 = vmatpush.bf16.msra.mxu0 %v3164
      %3440 = vmatpush.bf16.msra.mxu0 %v3163
      %3441 = vmatpush.bf16.msra.mxu0 %v3162
      %3442 = vmatpush.bf16.msra.mxu0 %v3161
      %3443 = vmatpush.bf16.msra.mxu0 %v3160
      %3444 = vmatpush.bf16.msra.mxu0 %v3159
      %3445 = vmatpush.bf16.msra.mxu0 %v3158
      %3446 = vmatmul.bf16.gmra.mxu0 %v2342
      %v3447 = vpop.f32.mrf.mxu0
      %v3448 = vadd.f32 %v3434, %v3447
      %v3449 = vpop.f32.mrf.mxu0
      %v3450 = vadd.f32 %v3436, %v3449
      %3451 = vdwg.mxu0
      %3452 = vmatpush.bf16.msra.mxu0 %v3173
      %3453 = vmatpush.bf16.msra.mxu0 %v3172
      %3454 = vmatpush.bf16.msra.mxu0 %v3171
      %3455 = vmatpush.bf16.msra.mxu0 %v3170
      %3456 = vmatpush.bf16.msra.mxu0 %v3169
      %3457 = vmatpush.bf16.msra.mxu0 %v3168
      %3458 = vmatpush.bf16.msra.mxu0 %v3167
      %3459 = vmatpush.bf16.msra.mxu0 %v3166
      %3460 = vmatmul.bf16.gmra.mxu0 %v2343
      %v3461 = vpop.f32.mrf.mxu0
      %v3462 = vadd.f32 %v3448, %v3461
      %v3463 = vpop.f32.mrf.mxu0
      %v3464 = vadd.f32 %v3450, %v3463
      %3465 = vdwg.mxu0
      %3466 = vmatpush.bf16.msra.mxu0 %v3181
      %3467 = vmatpush.bf16.msra.mxu0 %v3180
      %3468 = vmatpush.bf16.msra.mxu0 %v3179
      %3469 = vmatpush.bf16.msra.mxu0 %v3178
      %3470 = vmatpush.bf16.msra.mxu0 %v3177
      %3471 = vmatpush.bf16.msra.mxu0 %v3176
      %3472 = vmatpush.bf16.msra.mxu0 %v3175
      %3473 = vmatpush.bf16.msra.mxu0 %v3174
      %3474 = vmatmul.bf16.gmra.mxu0 %v2344
      %v3475 = vpop.f32.mrf.mxu0
      %v3476 = vadd.f32 %v3462, %v3475
      %v3477 = vpop.f32.mrf.mxu0
      %v3478 = vadd.f32 %v3464, %v3477
      %3479 = vdwg.mxu0
      %3480 = vmatpush.bf16.msra.mxu0 %v3189
      %3481 = vmatpush.bf16.msra.mxu0 %v3188
      %3482 = vmatpush.bf16.msra.mxu0 %v3187
      %3483 = vmatpush.bf16.msra.mxu0 %v3186
      %3484 = vmatpush.bf16.msra.mxu0 %v3185
      %3485 = vmatpush.bf16.msra.mxu0 %v3184
      %3486 = vmatpush.bf16.msra.mxu0 %v3183
      %3487 = vmatpush.bf16.msra.mxu0 %v3182
      %3488 = vmatmul.bf16.gmra.mxu0 %v2345
      %v3489 = vpop.f32.mrf.mxu0
      %v3490 = vadd.f32 %v3476, %v3489
      %v3491 = vpop.f32.mrf.mxu0
      %v3492 = vadd.f32 %v3478, %v3491
      %3493 = vdwg.mxu0
      %3494 = vmatpush.bf16.msra.mxu0 %v3197
      %3495 = vmatpush.bf16.msra.mxu0 %v3196
      %3496 = vmatpush.bf16.msra.mxu0 %v3195
      %3497 = vmatpush.bf16.msra.mxu0 %v3194
      %3498 = vmatpush.bf16.msra.mxu0 %v3193
      %3499 = vmatpush.bf16.msra.mxu0 %v3192
      %3500 = vmatpush.bf16.msra.mxu0 %v3191
      %3501 = vmatpush.bf16.msra.mxu0 %v3190
      %3502 = vmatmul.bf16.gmra.mxu0 %v2346
      %v3503 = vpop.f32.mrf.mxu0
      %v3504 = vadd.f32 %v3490, %v3503
      %v3505 = vpop.f32.mrf.mxu0
      %v3506 = vadd.f32 %v3492, %v3505
      %3507 = vdwg.mxu0
      %3508 = vmatpush.bf16.msra.mxu0 %v3205
      %3509 = vmatpush.bf16.msra.mxu0 %v3204
      %3510 = vmatpush.bf16.msra.mxu0 %v3203
      %3511 = vmatpush.bf16.msra.mxu0 %v3202
      %3512 = vmatpush.bf16.msra.mxu0 %v3201
      %3513 = vmatpush.bf16.msra.mxu0 %v3200
      %3514 = vmatpush.bf16.msra.mxu0 %v3199
      %3515 = vmatpush.bf16.msra.mxu0 %v3198
      %3516 = vmatmul.bf16.gmra.mxu0 %v2347
      %v3517 = vpop.f32.mrf.mxu0
      %v3518 = vadd.f32 %v3504, %v3517
      %v3519 = vpop.f32.mrf.mxu0
      %v3520 = vadd.f32 %v3506, %v3519
      %3521 = vdwg.mxu0
      %3522 = vmatpush.bf16.msra.mxu0 %v3213
      %3523 = vmatpush.bf16.msra.mxu0 %v3212
      %3524 = vmatpush.bf16.msra.mxu0 %v3211
      %3525 = vmatpush.bf16.msra.mxu0 %v3210
      %3526 = vmatpush.bf16.msra.mxu0 %v3209
      %3527 = vmatpush.bf16.msra.mxu0 %v3208
      %3528 = vmatpush.bf16.msra.mxu0 %v3207
      %3529 = vmatpush.bf16.msra.mxu0 %v3206
      %3530 = vmatmul.bf16.gmra.mxu0 %v2348
      %v3531 = vpop.f32.mrf.mxu0
      %v3532 = vadd.f32 %v3518, %v3531
      %v3533 = vpop.f32.mrf.mxu0
      %v3534 = vadd.f32 %v3520, %v3533
      %3535 = vdwg.mxu0
      %3536 = vmatpush.bf16.msra.mxu0 %v3221
      %3537 = vmatpush.bf16.msra.mxu0 %v3220
      %3538 = vmatpush.bf16.msra.mxu0 %v3219
      %3539 = vmatpush.bf16.msra.mxu0 %v3218
      %3540 = vmatpush.bf16.msra.mxu0 %v3217
      %3541 = vmatpush.bf16.msra.mxu0 %v3216
      %3542 = vmatpush.bf16.msra.mxu0 %v3215
      %3543 = vmatpush.bf16.msra.mxu0 %v3214
      %3544 = vmatmul.bf16.gmra.mxu0 %v2349
      %v3545 = vpop.f32.mrf.mxu0
      %v3546 = vadd.f32 %v3532, %v3545
      %v3547 = vpop.f32.mrf.mxu0
      %v3548 = vadd.f32 %v3534, %v3547
      %3549 = vdwg.mxu0
      %3550 = vmatpush.bf16.msra.mxu0 %v3229
      %3551 = vmatpush.bf16.msra.mxu0 %v3228
      %3552 = vmatpush.bf16.msra.mxu0 %v3227
      %3553 = vmatpush.bf16.msra.mxu0 %v3226
      %3554 = vmatpush.bf16.msra.mxu0 %v3225
      %3555 = vmatpush.bf16.msra.mxu0 %v3224
      %3556 = vmatpush.bf16.msra.mxu0 %v3223
      %3557 = vmatpush.bf16.msra.mxu0 %v3222
      %3558 = vmatmul.bf16.gmra.mxu0 %v2350
      %v3559 = vpop.f32.mrf.mxu0
      %v3560 = vadd.f32 %v3546, %v3559
      %v3561 = vpop.f32.mrf.mxu0
      %v3562 = vadd.f32 %v3548, %v3561
      %3563 = vdwg.mxu0
      %3564 = vmatpush.bf16.msra.mxu0 %v3237
      %3565 = vmatpush.bf16.msra.mxu0 %v3236
      %3566 = vmatpush.bf16.msra.mxu0 %v3235
      %3567 = vmatpush.bf16.msra.mxu0 %v3234
      %3568 = vmatpush.bf16.msra.mxu0 %v3233
      %3569 = vmatpush.bf16.msra.mxu0 %v3232
      %3570 = vmatpush.bf16.msra.mxu0 %v3231
      %3571 = vmatpush.bf16.msra.mxu0 %v3230
      %3572 = vmatmul.bf16.gmra.mxu0 %v2351
      %v3573 = vpop.f32.mrf.mxu0
      %v3574 = vadd.f32 %v3560, %v3573
      %v3575 = vpop.f32.mrf.mxu0
      %v3576 = vadd.f32 %v3562, %v3575
      %3577 = vdwg.mxu0
      %3578 = vmatpush.bf16.msra.mxu0 %v3245
      %3579 = vmatpush.bf16.msra.mxu0 %v3244
      %3580 = vmatpush.bf16.msra.mxu0 %v3243
      %3581 = vmatpush.bf16.msra.mxu0 %v3242
      %3582 = vmatpush.bf16.msra.mxu0 %v3241
      %3583 = vmatpush.bf16.msra.mxu0 %v3240
      %3584 = vmatpush.bf16.msra.mxu0 %v3239
      %3585 = vmatpush.bf16.msra.mxu0 %v3238
      %3586 = vmatmul.bf16.gmra.mxu0 %v2352
      %v3587 = vpop.f32.mrf.mxu0
      %v3588 = vadd.f32 %v3574, %v3587
      %v3589 = vpop.f32.mrf.mxu0
      %v3590 = vadd.f32 %v3576, %v3589
      %3591 = vdwg.mxu0
      %3592 = vmatpush.bf16.msra.mxu0 %v3253
      %3593 = vmatpush.bf16.msra.mxu0 %v3252
      %3594 = vmatpush.bf16.msra.mxu0 %v3251
      %3595 = vmatpush.bf16.msra.mxu0 %v3250
      %3596 = vmatpush.bf16.msra.mxu0 %v3249
      %3597 = vmatpush.bf16.msra.mxu0 %v3248
      %3598 = vmatpush.bf16.msra.mxu0 %v3247
      %3599 = vmatpush.bf16.msra.mxu0 %v3246
      %3600 = vmatmul.bf16.gmra.mxu0 %v2353
      %v3601 = vpop.f32.mrf.mxu0
      %v3602 = vadd.f32 %v3588, %v3601
      %v3603 = vpop.f32.mrf.mxu0
      %v3604 = vadd.f32 %v3590, %v3603
      %3605 = vdwg.mxu0
      %v3606 = vadd.f32 %v1848, %v3602
      %v3607 = vadd.f32 %v1849, %v3604
      %v3608 = vld [vmem:[%s693] sm:$0x1]
      %v3609 = vld [vmem:[%s696] sm:$0x1]
      %v3610 = vsel %vm770, %v3606, 0.0
      %3611 = vadd.xlane.f32.xlu0 %v3610
      %v3612 = vpop.xlane.xlu0 %3611
      %v3613 = vsel %vm770, %v3607, 0.0
      %3614 = vadd.xlane.f32.xlu0 %v3613
      %v3615 = vpop.xlane.xlu0 %3614
      %v3616 = vmul.f32 %v3612, %v1801
      %v3617 = vmul.f32 %v3615, %v1801
      %v3618 = vsub.f32 %v3606, %v3616
      %v3619 = vsub.f32 %v3607, %v3617
      %v3620 = vmul.f32 %v3618, %v3618
      %v3621 = vmul.f32 %v3619, %v3619
      %v3622 = vsel %vm770, %v3620, 0.0
      %3623 = vadd.xlane.f32.xlu0 %v3622
      %v3624 = vpop.xlane.xlu0 %3623
      %v3625 = vsel %vm770, %v3621, 0.0
      %3626 = vadd.xlane.f32.xlu0 %v3625
      %v3627 = vpop.xlane.xlu0 %3626
      %v3628 = vmul.f32 %v3624, %v1801
      %v3629 = vmul.f32 %v3627, %v1801
      %v3630 = vadd.f32 %v3628, 1e-05
      %v3631 = vadd.f32 %v3629, 1e-05
      %v3632 = vrsqrt.pop %v3630
      %v3633 = vmul.f32 %v3632, %v3630
      %v3634 = vmul.f32 %v3633, %v3632
      %v3635 = vmul.f32 0.5, %v3634
      %v3636 = vsub.f32 1.5, %v3635
      %v3637 = vmul.f32 %v3632, %v3636
      %vm3638 = vweird.f32 %v3630
      %vm3639 = vweird.f32 %v3632
      %vm3640 = vmor %vm3638, %vm3639
      %v3641 = vsel %vm3640, %v3632, %v3637
      %v3642 = vrsqrt.pop %v3631
      %v3643 = vmul.f32 %v3642, %v3631
      %v3644 = vmul.f32 %v3643, %v3642
      %v3645 = vmul.f32 0.5, %v3644
      %v3646 = vsub.f32 1.5, %v3645
      %v3647 = vmul.f32 %v3642, %v3646
      %vm3648 = vweird.f32 %v3631
      %vm3649 = vweird.f32 %v3642
      %vm3650 = vmor %vm3648, %vm3649
      %v3651 = vsel %vm3650, %v3642, %v3647
      %v3652 = vmul.f32 %v3618, %v3641
      %v3653 = vmul.f32 %v3619, %v3651
      %v3655 = vperm.slane %v3608, 0
      %v3657 = vmul.f32 %v3652, %v3655
      %v3658 = vmul.f32 %v3653, %v3655
      %v3660 = vperm.slane %v3609, 0
      %v3662 = vadd.f32 %v3657, %v3660
      %v3663 = vadd.f32 %v3658, %v3660
      %3664 = vst.msk [vmem:[#allocation2] sm:$0xff] %vm770, %v3662
      %3665 = vst.msk [vmem:[#allocation2 + $0x8] sm:$0xff] %vm770, %v3663
      %p3666 = scmp.eq.s32.totalorder %s30, 1
      // Predicated region
      $region93: #{forward.1} parent=87 // pred_check
        %p3667 = pneg %p3666
      $region94: #{forward.1} parent=87 // pred_check_branch
        %3669 = sbr.rel (%p3667) target = $region96
      $region95: #{forward.1} parent=87 // pred_region
        %v3671 = vrot.slane %v3662, 7
        %v3674 = vrot.slane %v3663, 6
        %vm3676 = vcmask 1040384
        %v3677 = vsel %vm3676, %v3671, %v3674
        %v3678 = vld [vmem:[%s15] sm:$0xff]
        %v3679 = vld [vmem:[%s15 + $0x8] sm:$0xff]
        %v3680 = vld [vmem:[%s15 + $0x10] sm:$0xff]
        %v3681 = vld [vmem:[%s15 + $0x18] sm:$0xff]
        %v3682 = vld [vmem:[#allocation3] sm:$0x1]
        %v3684 = vperm.slane %v3682, 0
        %v3687 = vsel %vm770, %v3677, 0
        %3689 = vmatpush.msra.mxu0 0.0
        %3690 = vmatpush.msra.mxu0 0.0
        %3691 = vmatpush.msra.mxu0 0.0
        %3692 = vmatpush.msra.mxu0 0.0
        %3693 = vmatpush.msra.mxu0 0.0
        %3694 = vmatpush.msra.mxu0 0.0
        %3695 = vmatpush.msra.mxu0 0.0
        %3696 = vmatpush.msra.mxu0 0.0
        %3697 = vmatpush.msra.mxu0 0.0
        %3698 = vmatpush.msra.mxu0 0.0
        %3699 = vmatpush.msra.mxu0 0.0
        %3700 = vmatpush.msra.mxu0 0.0
        %3701 = vmatpush.msra.mxu0 %v3681
        %3702 = vmatpush.msra.mxu0 %v3680
        %3703 = vmatpush.msra.mxu0 %v3679
        %3704 = vmatpush.msra.mxu0 %v3678
        %3705 = vmatmul.f32.gmra.mxu0 %v3687
        %v3706 = vpop.f32.mrf.mxu0
        %v3707 = vadd.f32 %v3684, %v3706
        %3708 = vdwg.mxu0
        %vm3709 = vcmask 1024
        %3710 = vst.msk [vmem:[%s17] sm:$0x3] %vm3709, %v3707
      $region96: #{forward.1} parent=87 // pred_fallthru
        _
      // Predicated region
      $region97: #{forward.1} parent=87 // pred_check
        %p3711 = pneg %p460
      $region98: #{forward.1} parent=87 // pred_check_branch
        %3713 = sbr.rel (%p3711) target = $region100
      $region99: #{forward.1} parent=87 // pred_region
        _
      $region100: #{forward.1} parent=87 // pred_fallthru
        _
      // Predicated region
      $region101: #{forward.1} parent=87 // pred_check
        %p3714 = pneg %p460
      $region102: #{forward.1} parent=87 // pred_check_branch
        %3716 = sbr.rel (%p3714) target = $region104
      $region103: #{forward.1} parent=87 // pred_region
        _
      $region104: #{forward.1} parent=87 // pred_fallthru
        _
    $region88: #{forward.1} parent=5 // pred_fallthru
      _
    %p3717 = scmp.le.s32.totalorder 2, %s25
    // Predicated region
    $region105: #{forward.1} parent=5 // pred_check
      %p3718 = pneg %p3717
    $region106: #{forward.1} parent=5 // pred_check_branch
      %3720 = sbr.rel (%p3718) target = $region108
    $region107: #{forward.1} parent=5 // pred_region
      %s3721 = ssub.s32 %s25, 2
    $region108: #{forward.1} parent=5 // pred_fallthru
      _
  $region6: #{forward.1} parent=0 // loop_footer
    %s29 = sadd.s32 1, %s25
  $region7: #{forward.1} parent=0 // loop_footer_branch
    %24 = sbr.rel target = $region3
  $region8: #{forward.1} parent=0 // loop_exit
    _

</llo_original>
